<compile_context>
chip_gen: v5e
topology: v5e:2x2
jax: 0.10.0
libtpu: 0.0.40
codegen_flags: <defaults>
</compile_context>

<pallas_src>
import numpy as np
import jax
import jax.numpy as jnp
from jax import lax
from jax.experimental import pallas as pl
from jax.experimental.pallas import tpu as pltpu


# ---------------------------------------------------------------------------
# Pallas kernel: the whole 7-layer stack, fused.
#   refs = (x, W_0..W_6, b_0..b_6, out)
#   x   : (N, F0)        f32, flattened input activation
#   W_l : (F_l, F_{l+1}) bf16, unrolled conv matrix with BN scale folded in
#   b_l : (1, F_{l+1})   f32, BN bias tiled over spatial positions
# Every intermediate stays in VMEM/vregs; the only HBM traffic is the operands.
# ---------------------------------------------------------------------------
def _fused_stack_kernel(*refs):
    x_ref, o_ref = refs[0], refs[-1]
    n_layers = (len(refs) - 2) // 2
    w_refs = refs[1:1 + n_layers]
    b_refs = refs[1 + n_layers:1 + 2 * n_layers]

    x = x_ref[...]                                   # (N, F0) f32
    for l in range(n_layers):                        # static unroll over layers
        acc = jnp.dot(x.astype(jnp.bfloat16), w_refs[l][...],
                      preferred_element_type=jnp.float32)      # MXU, bf16 in, f32 acc
        x = jnp.maximum(acc + b_refs[l][...], 0.0)             # folded BN bias + ReLU, f32
    o_ref[...] = x.astype(o_ref.dtype)


def fused_forward_stack(x_flat, dense_ws, biases):
    n = x_flat.shape[0]
    f_out = dense_ws[-1].shape[1]
    in_specs = [pl.BlockSpec(x_flat.shape, lambda i: (0, 0))]
    in_specs += [pl.BlockSpec(w.shape, lambda i: (0, 0)) for w in dense_ws]
    in_specs += [pl.BlockSpec(b.shape, lambda i: (0, 0)) for b in biases]
    return pl.pallas_call(
        _fused_stack_kernel,
        out_shape=jax.ShapeDtypeStruct((n, f_out), jnp.float32),
        grid=(1,),  # everything (weights ~2 MiB bf16, activations <=8 KiB) fits in VMEM
        in_specs=in_specs,
        out_specs=pl.BlockSpec((n, f_out), lambda i: (0, 0)),
        compiler_params=pltpu.CompilerParams(dimension_semantics=("arbitrary",)),
    )(x_flat, *dense_ws, *biases)


# ---------------------------------------------------------------------------
# Host-side, one-time weight transformation:
# Conv2d(bias=False) + folded BN scale  ->  dense matrix over flattened activations.
#   input flattening : CHW (for layer 0, matching NCHW .reshape) or HWC (layers 1..6)
#   output flattening: (ho, wo, c) with c fastest
# ---------------------------------------------------------------------------
def conv_bn_to_dense(w_hwio, scale, bias, hin, win, stride, pad, chw_input):
    w = np.asarray(w_hwio, dtype=np.float32)
    scale = np.asarray(scale, dtype=np.float32)
    bias = np.asarray(bias, dtype=np.float32)
    kh, kw, cin, cout = w.shape
    sh, sw = stride
    ph, pw = pad
    ho = (hin + 2 * ph - kh) // sh + 1
    wo = (win + 2 * pw - kw) // sw + 1

    w = w * scale[None, None, None, :]               # fold BN scale into the weights
    dense = np.zeros((hin * win * cin, ho * wo * cout), np.float32)
    ci_idx = np.arange(cin)
    for oh in range(ho):
        for ow in range(wo):
            col0 = (oh * wo + ow) * cout
            for i in range(kh):
                hi = sh * oh + i - ph
                if hi < 0 or hi >= hin:
                    continue                          # zero padding -> contributes nothing
                for j in range(kw):
                    wi = sw * ow + j - pw
                    if wi < 0 or wi >= win:
                        continue
                    if chw_input:
                        rows = ci_idx * (hin * win) + hi * win + wi
                    else:
                        rows = (hi * win + wi) * cin + ci_idx
                    dense[rows, col0:col0 + cout] += w[i, j]
    bias_flat = np.tile(bias, ho * wo)               # per (oh, ow, c), c fastest
    return dense, bias_flat, ho, wo


def build_fused_params(params, hin, win):
    dense_ws, biases = [], []
    h, w = hin, win
    chw = True                                       # layer 0 consumes the NCHW-flattened input
    for p in params:
        d, b, ho, wo = conv_bn_to_dense(p["w"], p["scale"], p["bias"],
                                        h, w, p["stride"], p["pad"], chw)
        dense_ws.append(jnp.asarray(d, dtype=jnp.bfloat16))   # bf16 MXU operands
        biases.append(jnp.asarray(b, dtype=jnp.float32).reshape(1, -1))
        h, w = ho, wo
        chw = False                                  # intermediates are (h, w, c)-flattened
    return dense_ws, biases


# ---------------------------------------------------------------------------
# Parameters (deterministic synthetic init), mirroring SpatialModel4.__init__
# ---------------------------------------------------------------------------
def init_params(key, num_filters):
    nf = num_filters
    layer_cfgs = [
        (nf,      nf * 2,  5, (2, 2), (2, 2)),  # Block2D
        (nf * 2,  nf * 2,  3, (1, 1), (1, 1)),  # BasicBlock2D
        (nf * 2,  nf * 4,  5, (2, 2), (2, 2)),  # Block2D
        (nf * 4,  nf * 4,  3, (1, 1), (1, 1)),  # BasicBlock2D
        (nf * 4,  nf * 8,  5, (2, 2), (2, 2)),  # Block2D
        (nf * 8,  nf * 8,  3, (1, 1), (1, 1)),  # BasicBlock2D
        (nf * 8,  nf * 16, 5, (2, 2), (2, 2)),  # Block2D
    ]
    eps = 1e-5
    params = []
    for (cin, cout, k, stride, pad) in layer_cfgs:
        key, k_w, k_g, k_b, k_m, k_v = jax.random.split(key, 6)
        w = 0.1 * jax.random.normal(k_w, (k, k, cin, cout), jnp.float32)        # HWIO
        w = w.astype(jnp.bfloat16).astype(jnp.float32)   # pre-round: kernel runs bf16 weights
        gamma = 1.0 + 0.1 * jax.random.normal(k_g, (cout,), jnp.float32)
        beta = 0.1 * jax.random.normal(k_b, (cout,), jnp.float32)
        rmean = 0.1 * jax.random.normal(k_m, (cout,), jnp.float32)
        rvar = jnp.abs(1.0 + 0.1 * jax.random.normal(k_v, (cout,), jnp.float32))
        scale = gamma / jnp.sqrt(rvar + eps)
        bias = beta - rmean * scale
        params.append(dict(w=w, scale=scale, bias=bias, stride=stride, pad=pad))
    return params


# ---------------------------------------------------------------------------
# Forward pass (NCHW in, NCHW out — final spatial size is 1x1 so no transpose needed)
# ---------------------------------------------------------------------------
def spatial_model4_forward(x_nchw, dense_ws, biases):
    n = x_nchw.shape[0]
    x_flat = x_nchw.reshape(n, -1)                   # NCHW flatten (layer-0 matrix expects this)
    y = fused_forward_stack(x_flat, dense_ws, biases)
    return y.reshape(n, -1, 1, 1)                    # (N, Cout, 1, 1) == NCHW


# Pure-JAX reference (lax conv, f32) for correctness checking.
def reference_forward(x_nchw, params):
    x = x_nchw
    for p in params:
        w_oihw = jnp.transpose(p["w"], (3, 2, 0, 1))
        y = lax.conv_general_dilated(
            x, w_oihw,
            window_strides=p["stride"],
            padding=[(p["pad"][0], p["pad"][0]), (p["pad"][1], p["pad"][1])],
            dimension_numbers=("NCHW", "OIHW", "NCHW"),
        )
        y = y * p["scale"][None, :, None, None] + p["bias"][None, :, None, None]
        x = jnp.maximum(y, 0.0)
    return x


if __name__ == "__main__":
    # Small config: numFilters = 4, heatmapSize = 16, batch = 2.
    num_filters = 4
    batch, spatial = 2, 16

    key = jax.random.PRNGKey(0)
    key, k_x, k_p = jax.random.split(key, 3)
    x = jax.random.normal(k_x, (batch, num_filters, spatial, spatial), jnp.float32)
    params = init_params(k_p, num_filters)
    dense_ws, biases = build_fused_params(params, spatial, spatial)

    fwd = jax.jit(spatial_model4_forward)
    out = jax.block_until_ready(fwd(x, dense_ws, biases))

    ref = jax.block_until_ready(reference_forward(x, params))
    assert out.shape == (batch, num_filters * 16, 1, 1), out.shape
    # bf16 matmul operands over 7 layers -> looser tolerance than the f32 reference.
    np.testing.assert_allclose(np.asarray(out), np.asarray(ref), rtol=5e-2, atol=1e-1)

    print("KERNEL_OK")
</pallas_src>

<mosaic_0001>
module attributes {stable_mosaic.version = 11 : i64} {
  func.func @_fused_stack_kernel(%arg0: i32, %arg1: memref<2x1024xf32, #tpu.memory_space<vmem>>, %arg2: memref<1024x512xbf16, #tpu.memory_space<vmem>>, %arg3: memref<512x512xbf16, #tpu.memory_space<vmem>>, %arg4: memref<512x256xbf16, #tpu.memory_space<vmem>>, %arg5: memref<256x256xbf16, #tpu.memory_space<vmem>>, %arg6: memref<256x128xbf16, #tpu.memory_space<vmem>>, %arg7: memref<128x128xbf16, #tpu.memory_space<vmem>>, %arg8: memref<128x64xbf16, #tpu.memory_space<vmem>>, %arg9: memref<1x512xf32, #tpu.memory_space<vmem>>, %arg10: memref<1x512xf32, #tpu.memory_space<vmem>>, %arg11: memref<1x256xf32, #tpu.memory_space<vmem>>, %arg12: memref<1x256xf32, #tpu.memory_space<vmem>>, %arg13: memref<1x128xf32, #tpu.memory_space<vmem>>, %arg14: memref<1x128xf32, #tpu.memory_space<vmem>>, %arg15: memref<1x64xf32, #tpu.memory_space<vmem>>, %arg16: memref<2x64xf32, #tpu.memory_space<vmem>>) attributes {dimension_semantics = [#tpu.dimension_semantics<arbitrary>], iteration_bounds = array<i64: 1>, scalar_prefetch = 0 : i64, scratch_operands = 0 : i64, tpu.core_type = #tpu.core_type<tc>, window_params = [{pipeline_mode = #tpu.pipeline_mode<synchronous>, transform_indices = @transform_0, window_bounds = array<i64: 2, 1024>}, {pipeline_mode = #tpu.pipeline_mode<synchronous>, transform_indices = @transform_1, window_bounds = array<i64: 1024, 512>}, {pipeline_mode = #tpu.pipeline_mode<synchronous>, transform_indices = @transform_2, window_bounds = array<i64: 512, 512>}, {pipeline_mode = #tpu.pipeline_mode<synchronous>, transform_indices = @transform_3, window_bounds = array<i64: 512, 256>}, {pipeline_mode = #tpu.pipeline_mode<synchronous>, transform_indices = @transform_4, window_bounds = array<i64: 256, 256>}, {pipeline_mode = #tpu.pipeline_mode<synchronous>, transform_indices = @transform_5, window_bounds = array<i64: 256, 128>}, {pipeline_mode = #tpu.pipeline_mode<synchronous>, transform_indices = @transform_6, window_bounds = array<i64: 128, 128>}, {pipeline_mode = #tpu.pipeline_mode<synchronous>, transform_indices = @transform_7, window_bounds = array<i64: 128, 64>}, {pipeline_mode = #tpu.pipeline_mode<synchronous>, transform_indices = @transform_8, window_bounds = array<i64: 1, 512>}, {pipeline_mode = #tpu.pipeline_mode<synchronous>, transform_indices = @transform_9, window_bounds = array<i64: 1, 512>}, {pipeline_mode = #tpu.pipeline_mode<synchronous>, transform_indices = @transform_10, window_bounds = array<i64: 1, 256>}, {pipeline_mode = #tpu.pipeline_mode<synchronous>, transform_indices = @transform_11, window_bounds = array<i64: 1, 256>}, {pipeline_mode = #tpu.pipeline_mode<synchronous>, transform_indices = @transform_12, window_bounds = array<i64: 1, 128>}, {pipeline_mode = #tpu.pipeline_mode<synchronous>, transform_indices = @transform_13, window_bounds = array<i64: 1, 128>}, {pipeline_mode = #tpu.pipeline_mode<synchronous>, transform_indices = @transform_14, window_bounds = array<i64: 1, 64>}, {pipeline_mode = #tpu.pipeline_mode<synchronous>, transform_indices = @transform_15, window_bounds = array<i64: 2, 64>}]} {
    %c0 = arith.constant 0 : index
    %c0_0 = arith.constant 0 : index
    %0 = vector.load %arg1[%c0, %c0_0] : memref<2x1024xf32, #tpu.memory_space<vmem>>, vector<2x1024xf32>
    %1 = arith.truncf %0 : vector<2x1024xf32> to vector<2x1024xbf16>
    %c0_1 = arith.constant 0 : index
    %c0_2 = arith.constant 0 : index
    %2 = vector.load %arg2[%c0_1, %c0_2] : memref<1024x512xbf16, #tpu.memory_space<vmem>>, vector<1024x512xbf16>
    %cst = arith.constant dense<0.000000e+00> : vector<2x512xf32>
    %3 = tpu.matmul %1, %2, %cst {dimension_numbers = #tpu.dot_dimension_numbers<[1], [0], [0], [1], [0, 0, 1, 1], [], []>} : vector<2x1024xbf16>, vector<1024x512xbf16>, vector<2x512xf32> -> vector<2x512xf32>
    %c0_3 = arith.constant 0 : index
    %c0_4 = arith.constant 0 : index
    %4 = vector.load %arg9[%c0_3, %c0_4] : memref<1x512xf32, #tpu.memory_space<vmem>>, vector<1x512xf32>
    %5 = vector.broadcast %4 : vector<1x512xf32> to vector<2x512xf32>
    %6 = arith.addf %3, %5 : vector<2x512xf32>
    %cst_5 = arith.constant 0.000000e+00 : f32
    %7 = vector.broadcast %cst_5 : f32 to vector<2x512xf32>
    %8 = arith.maximumf %6, %7 : vector<2x512xf32>
    %9 = arith.truncf %8 : vector<2x512xf32> to vector<2x512xbf16>
    %c0_6 = arith.constant 0 : index
    %c0_7 = arith.constant 0 : index
    %10 = vector.load %arg3[%c0_6, %c0_7] : memref<512x512xbf16, #tpu.memory_space<vmem>>, vector<512x512xbf16>
    %cst_8 = arith.constant dense<0.000000e+00> : vector<2x512xf32>
    %11 = tpu.matmul %9, %10, %cst_8 {dimension_numbers = #tpu.dot_dimension_numbers<[1], [0], [0], [1], [0, 0, 1, 1], [], []>} : vector<2x512xbf16>, vector<512x512xbf16>, vector<2x512xf32> -> vector<2x512xf32>
    %c0_9 = arith.constant 0 : index
    %c0_10 = arith.constant 0 : index
    %12 = vector.load %arg10[%c0_9, %c0_10] : memref<1x512xf32, #tpu.memory_space<vmem>>, vector<1x512xf32>
    %13 = vector.broadcast %12 : vector<1x512xf32> to vector<2x512xf32>
    %14 = arith.addf %11, %13 : vector<2x512xf32>
    %cst_11 = arith.constant 0.000000e+00 : f32
    %15 = vector.broadcast %cst_11 : f32 to vector<2x512xf32>
    %16 = arith.maximumf %14, %15 : vector<2x512xf32>
    %17 = arith.truncf %16 : vector<2x512xf32> to vector<2x512xbf16>
    %c0_12 = arith.constant 0 : index
    %c0_13 = arith.constant 0 : index
    %18 = vector.load %arg4[%c0_12, %c0_13] : memref<512x256xbf16, #tpu.memory_space<vmem>>, vector<512x256xbf16>
    %cst_14 = arith.constant dense<0.000000e+00> : vector<2x256xf32>
    %19 = tpu.matmul %17, %18, %cst_14 {dimension_numbers = #tpu.dot_dimension_numbers<[1], [0], [0], [1], [0, 0, 1, 1], [], []>} : vector<2x512xbf16>, vector<512x256xbf16>, vector<2x256xf32> -> vector<2x256xf32>
    %c0_15 = arith.constant 0 : index
    %c0_16 = arith.constant 0 : index
    %20 = vector.load %arg11[%c0_15, %c0_16] : memref<1x256xf32, #tpu.memory_space<vmem>>, vector<1x256xf32>
    %21 = vector.broadcast %20 : vector<1x256xf32> to vector<2x256xf32>
    %22 = arith.addf %19, %21 : vector<2x256xf32>
    %cst_17 = arith.constant 0.000000e+00 : f32
    %23 = vector.broadcast %cst_17 : f32 to vector<2x256xf32>
    %24 = arith.maximumf %22, %23 : vector<2x256xf32>
    %25 = arith.truncf %24 : vector<2x256xf32> to vector<2x256xbf16>
    %c0_18 = arith.constant 0 : index
    %c0_19 = arith.constant 0 : index
    %26 = vector.load %arg5[%c0_18, %c0_19] : memref<256x256xbf16, #tpu.memory_space<vmem>>, vector<256x256xbf16>
    %cst_20 = arith.constant dense<0.000000e+00> : vector<2x256xf32>
    %27 = tpu.matmul %25, %26, %cst_20 {dimension_numbers = #tpu.dot_dimension_numbers<[1], [0], [0], [1], [0, 0, 1, 1], [], []>} : vector<2x256xbf16>, vector<256x256xbf16>, vector<2x256xf32> -> vector<2x256xf32>
    %c0_21 = arith.constant 0 : index
    %c0_22 = arith.constant 0 : index
    %28 = vector.load %arg12[%c0_21, %c0_22] : memref<1x256xf32, #tpu.memory_space<vmem>>, vector<1x256xf32>
    %29 = vector.broadcast %28 : vector<1x256xf32> to vector<2x256xf32>
    %30 = arith.addf %27, %29 : vector<2x256xf32>
    %cst_23 = arith.constant 0.000000e+00 : f32
    %31 = vector.broadcast %cst_23 : f32 to vector<2x256xf32>
    %32 = arith.maximumf %30, %31 : vector<2x256xf32>
    %33 = arith.truncf %32 : vector<2x256xf32> to vector<2x256xbf16>
    %c0_24 = arith.constant 0 : index
    %c0_25 = arith.constant 0 : index
    %34 = vector.load %arg6[%c0_24, %c0_25] : memref<256x128xbf16, #tpu.memory_space<vmem>>, vector<256x128xbf16>
    %cst_26 = arith.constant dense<0.000000e+00> : vector<2x128xf32>
    %35 = tpu.matmul %33, %34, %cst_26 {dimension_numbers = #tpu.dot_dimension_numbers<[1], [0], [0], [1], [0, 0, 1, 1], [], []>} : vector<2x256xbf16>, vector<256x128xbf16>, vector<2x128xf32> -> vector<2x128xf32>
    %c0_27 = arith.constant 0 : index
    %c0_28 = arith.constant 0 : index
    %36 = vector.load %arg13[%c0_27, %c0_28] : memref<1x128xf32, #tpu.memory_space<vmem>>, vector<1x128xf32>
    %37 = vector.broadcast %36 : vector<1x128xf32> to vector<2x128xf32>
    %38 = arith.addf %35, %37 : vector<2x128xf32>
    %cst_29 = arith.constant 0.000000e+00 : f32
    %39 = vector.broadcast %cst_29 : f32 to vector<2x128xf32>
    %40 = arith.maximumf %38, %39 : vector<2x128xf32>
    %41 = arith.truncf %40 : vector<2x128xf32> to vector<2x128xbf16>
    %c0_30 = arith.constant 0 : index
    %c0_31 = arith.constant 0 : index
    %42 = vector.load %arg7[%c0_30, %c0_31] : memref<128x128xbf16, #tpu.memory_space<vmem>>, vector<128x128xbf16>
    %cst_32 = arith.constant dense<0.000000e+00> : vector<2x128xf32>
    %43 = tpu.matmul %41, %42, %cst_32 {dimension_numbers = #tpu.dot_dimension_numbers<[1], [0], [0], [1], [0, 0, 1, 1], [], []>} : vector<2x128xbf16>, vector<128x128xbf16>, vector<2x128xf32> -> vector<2x128xf32>
    %c0_33 = arith.constant 0 : index
    %c0_34 = arith.constant 0 : index
    %44 = vector.load %arg14[%c0_33, %c0_34] : memref<1x128xf32, #tpu.memory_space<vmem>>, vector<1x128xf32>
    %45 = vector.broadcast %44 : vector<1x128xf32> to vector<2x128xf32>
    %46 = arith.addf %43, %45 : vector<2x128xf32>
    %cst_35 = arith.constant 0.000000e+00 : f32
    %47 = vector.broadcast %cst_35 : f32 to vector<2x128xf32>
    %48 = arith.maximumf %46, %47 : vector<2x128xf32>
    %49 = arith.truncf %48 : vector<2x128xf32> to vector<2x128xbf16>
    %c0_36 = arith.constant 0 : index
    %c0_37 = arith.constant 0 : index
    %50 = vector.load %arg8[%c0_36, %c0_37] : memref<128x64xbf16, #tpu.memory_space<vmem>>, vector<128x64xbf16>
    %cst_38 = arith.constant dense<0.000000e+00> : vector<2x64xf32>
    %51 = tpu.matmul %49, %50, %cst_38 {dimension_numbers = #tpu.dot_dimension_numbers<[1], [0], [0], [1], [0, 0, 1, 1], [], []>} : vector<2x128xbf16>, vector<128x64xbf16>, vector<2x64xf32> -> vector<2x64xf32>
    %c0_39 = arith.constant 0 : index
    %c0_40 = arith.constant 0 : index
    %52 = vector.load %arg15[%c0_39, %c0_40] : memref<1x64xf32, #tpu.memory_space<vmem>>, vector<1x64xf32>
    %53 = vector.broadcast %52 : vector<1x64xf32> to vector<2x64xf32>
    %54 = arith.addf %51, %53 : vector<2x64xf32>
    %cst_41 = arith.constant 0.000000e+00 : f32
    %55 = vector.broadcast %cst_41 : f32 to vector<2x64xf32>
    %56 = arith.maximumf %54, %55 : vector<2x64xf32>
    %c0_42 = arith.constant 0 : index
    %c0_43 = arith.constant 0 : index
    %57 = vector.load %arg16[%c0_42, %c0_43] : memref<2x64xf32, #tpu.memory_space<vmem>>, vector<2x64xf32>
    tpu.vector_store %arg16[%c0_42, %c0_43], %56 {strides = array<i32>} : memref<2x64xf32, #tpu.memory_space<vmem>>, vector<2x64xf32>,
    return
  }
  func.func @transform_0(%arg0: i32) -> (i32, i32) {
    %c0_i32 = arith.constant 0 : i32
    %c0_i32_0 = arith.constant 0 : i32
    %c0_i32_1 = arith.constant 0 : i32
    return %c0_i32, %c0_i32_0 : i32, i32
  }
  func.func @transform_1(%arg0: i32) -> (i32, i32) {
    %c0_i32 = arith.constant 0 : i32
    %c0_i32_0 = arith.constant 0 : i32
    %c0_i32_1 = arith.constant 0 : i32
    return %c0_i32, %c0_i32_0 : i32, i32
  }
  func.func @transform_2(%arg0: i32) -> (i32, i32) {
    %c0_i32 = arith.constant 0 : i32
    %c0_i32_0 = arith.constant 0 : i32
    %c0_i32_1 = arith.constant 0 : i32
    return %c0_i32, %c0_i32_0 : i32, i32
  }
  func.func @transform_3(%arg0: i32) -> (i32, i32) {
    %c0_i32 = arith.constant 0 : i32
    %c0_i32_0 = arith.constant 0 : i32
    %c0_i32_1 = arith.constant 0 : i32
    return %c0_i32, %c0_i32_0 : i32, i32
  }
  func.func @transform_4(%arg0: i32) -> (i32, i32) {
    %c0_i32 = arith.constant 0 : i32
    %c0_i32_0 = arith.constant 0 : i32
    %c0_i32_1 = arith.constant 0 : i32
    return %c0_i32, %c0_i32_0 : i32, i32
  }
  func.func @transform_5(%arg0: i32) -> (i32, i32) {
    %c0_i32 = arith.constant 0 : i32
    %c0_i32_0 = arith.constant 0 : i32
    %c0_i32_1 = arith.constant 0 : i32
    return %c0_i32, %c0_i32_0 : i32, i32
  }
  func.func @transform_6(%arg0: i32) -> (i32, i32) {
    %c0_i32 = arith.constant 0 : i32
    %c0_i32_0 = arith.constant 0 : i32
    %c0_i32_1 = arith.constant 0 : i32
    return %c0_i32, %c0_i32_0 : i32, i32
  }
  func.func @transform_7(%arg0: i32) -> (i32, i32) {
    %c0_i32 = arith.constant 0 : i32
    %c0_i32_0 = arith.constant 0 : i32
    %c0_i32_1 = arith.constant 0 : i32
    return %c0_i32, %c0_i32_0 : i32, i32
  }
  func.func @transform_8(%arg0: i32) -> (i32, i32) {
    %c0_i32 = arith.constant 0 : i32
    %c0_i32_0 = arith.constant 0 : i32
    %c0_i32_1 = arith.constant 0 : i32
    return %c0_i32, %c0_i32_0 : i32, i32
  }
  func.func @transform_9(%arg0: i32) -> (i32, i32) {
    %c0_i32 = arith.constant 0 : i32
    %c0_i32_0 = arith.constant 0 : i32
    %c0_i32_1 = arith.constant 0 : i32
    return %c0_i32, %c0_i32_0 : i32, i32
  }
  func.func @transform_10(%arg0: i32) -> (i32, i32) {
    %c0_i32 = arith.constant 0 : i32
    %c0_i32_0 = arith.constant 0 : i32
    %c0_i32_1 = arith.constant 0 : i32
    return %c0_i32, %c0_i32_0 : i32, i32
  }
  func.func @transform_11(%arg0: i32) -> (i32, i32) {
    %c0_i32 = arith.constant 0 : i32
    %c0_i32_0 = arith.constant 0 : i32
    %c0_i32_1 = arith.constant 0 : i32
    return %c0_i32, %c0_i32_0 : i32, i32
  }
  func.func @transform_12(%arg0: i32) -> (i32, i32) {
    %c0_i32 = arith.constant 0 : i32
    %c0_i32_0 = arith.constant 0 : i32
    %c0_i32_1 = arith.constant 0 : i32
    return %c0_i32, %c0_i32_0 : i32, i32
  }
  func.func @transform_13(%arg0: i32) -> (i32, i32) {
    %c0_i32 = arith.constant 0 : i32
    %c0_i32_0 = arith.constant 0 : i32
    %c0_i32_1 = arith.constant 0 : i32
    return %c0_i32, %c0_i32_0 : i32, i32
  }
  func.func @transform_14(%arg0: i32) -> (i32, i32) {
    %c0_i32 = arith.constant 0 : i32
    %c0_i32_0 = arith.constant 0 : i32
    %c0_i32_1 = arith.constant 0 : i32
    return %c0_i32, %c0_i32_0 : i32, i32
  }
  func.func @transform_15(%arg0: i32) -> (i32, i32) {
    %c0_i32 = arith.constant 0 : i32
    %c0_i32_0 = arith.constant 0 : i32
    %c0_i32_1 = arith.constant 0 : i32
    return %c0_i32, %c0_i32_0 : i32, i32
  }
}

</mosaic_0001>

<llo_original>
// kernel: spatial_model4_forward.1
$region0: #{spatial_model4_forward.1}
  #allocation0 [shape = 'u32[]', space=smem, size = 0x4, offset = 0x4, fixed_abs, tag = 'smem constant byte address 0x4 - core index']
  #allocation1 [shape = 'u32[72,128]{1,0:T(1,128)}', space=vmem, size = 0x9000, scoped, tag = 'internal scratch']
  %s0 = inlined_call_operand.vmem [shape: f32[2,1024], index: 0, kind: input, shape index: {}]
  %s1 = inlined_call_operand.hbm [shape: bf16[1024,512], index: 1, kind: input, shape index: {}]
  %s2 = inlined_call_operand.hbm [shape: bf16[512,512], index: 2, kind: input, shape index: {}]
  %s3 = inlined_call_operand.hbm [shape: bf16[512,256], index: 3, kind: input, shape index: {}]
  %s4 = inlined_call_operand.hbm [shape: bf16[256,256], index: 4, kind: input, shape index: {}]
  %s5 = inlined_call_operand.vmem [shape: bf16[256,128], index: 5, kind: input, shape index: {}]
  %s6 = inlined_call_operand.vmem [shape: bf16[128,128], index: 6, kind: input, shape index: {}]
  %s7 = inlined_call_operand.vmem [shape: bf16[128,64], index: 7, kind: input, shape index: {}]
  %s8 = inlined_call_operand.vmem [shape: f32[1,512], index: 8, kind: input, shape index: {}]
  %s9 = inlined_call_operand.vmem [shape: f32[1,512], index: 9, kind: input, shape index: {}]
  %s10 = inlined_call_operand.vmem [shape: f32[1,256], index: 10, kind: input, shape index: {}]
  %s11 = inlined_call_operand.vmem [shape: f32[1,256], index: 11, kind: input, shape index: {}]
  %s12 = inlined_call_operand.vmem [shape: f32[1,128], index: 12, kind: input, shape index: {}]
  %s13 = inlined_call_operand.vmem [shape: f32[1,128], index: 13, kind: input, shape index: {}]
  %s14 = inlined_call_operand.vmem [shape: f32[1,64], index: 14, kind: input, shape index: {}]
  %s15 = inlined_call_operand.hbm [shape: f32[2,64], index: 15, kind: output, shape index: {}]
  %s16 = sld [smem:[#allocation0]]
  $region86: #{spatial_model4_forward.1} parent=0
    _
  %s18 = ssub.s32 1, %s16
  %s19 = scalar_select 0, %s18, %s16
  $region1: #{spatial_model4_forward.1} parent=0
    #allocation2 [shape = 'u8[1048576]{0}', space=vmem, size = 0x100000, scoped, tag = 'input window, operand 1, single buffered']
    #allocation3 [shape = 's32[1]{0}', space=sflag, size = 0x4, scoped, tag = 'scoped memory for spatial_model4_forward.1']
    #allocation4 [shape = 's32[1]{0}', space=sflag, size = 0x4, scoped, tag = 'scoped memory for spatial_model4_forward.1']
    #allocation5 [shape = 'u8[524288]{0}', space=vmem, size = 0x80000, scoped, tag = 'input window, operand 2, single buffered']
    #allocation6 [shape = 's32[1]{0}', space=sflag, size = 0x4, scoped, tag = 'scoped memory for spatial_model4_forward.1']
    #allocation7 [shape = 'u8[262144]{0}', space=vmem, size = 0x40000, scoped, tag = 'input window, operand 3, single buffered']
    #allocation8 [shape = 'u8[131072]{0}', space=vmem, size = 0x20000, scoped, tag = 'input window, operand 4, single buffered']
    #allocation9 [shape = 's32[1]{0}', space=sflag, size = 0x4, scoped, tag = 'scoped memory for spatial_model4_forward.1']
    #allocation10 [shape = 'u8[1024]{0}', space=vmem, size = 0x400, scoped, tag = 'output window, operand 0, single buffered']
    %20 = vsyncpa [#allocation3], 0
    %21 = vsyncpa [#allocation6], 0
    %22 = vsyncpa [#allocation9], 0
    %23 = vsyncpa [#allocation4], 0
    // Predicated region
    $region2: #{spatial_model4_forward.1} parent=1 // pred_check
      _
    $region3: #{spatial_model4_forward.1} parent=1 // pred_check_branch
      %25 = sbr.rel (0) target = $region5
    $region4: #{spatial_model4_forward.1} parent=1 // pred_region
      _
    $region5: #{spatial_model4_forward.1} parent=1 // pred_fallthru
      _
    // Predicated region
    $region6: #{spatial_model4_forward.1} parent=1 // pred_check
      _
    $region7: #{spatial_model4_forward.1} parent=1 // pred_check_branch
      %27 = sbr.rel (0) target = $region9
    $region8: #{spatial_model4_forward.1} parent=1 // pred_region
      %29 = vsyncadd [#allocation3], 0
      %s30 = sshll.u32 %s1, 4
      %s31 = int_to_ptr.hbm [resolvable:$true] %s30
      %s32 = sshll.u32 [#allocation2], 4
      %s33 = int_to_ptr.vmem [resolvable:$true] %s32
      %38 = dma.hbm_to_vmem [thread:$0]  %s31, 32768, %s33, [#allocation3], 256, 256, 16
    $region9: #{spatial_model4_forward.1} parent=1 // pred_fallthru
      _
    // Predicated region
    $region10: #{spatial_model4_forward.1} parent=1 // pred_check
      _
    $region11: #{spatial_model4_forward.1} parent=1 // pred_check_branch
      %40 = sbr.rel (0) target = $region13
    $region12: #{spatial_model4_forward.1} parent=1 // pred_region
      %42 = vsyncadd [#allocation6], 0
      %s43 = sshll.u32 %s2, 4
      %s44 = int_to_ptr.hbm [resolvable:$true] %s43
      %s45 = sshll.u32 [#allocation5], 4
      %s46 = int_to_ptr.vmem [resolvable:$true] %s45
      %51 = dma.hbm_to_vmem [thread:$0]  %s44, 16384, %s46, [#allocation6], 256, 256, 16
    $region13: #{spatial_model4_forward.1} parent=1 // pred_fallthru
      _
    // Predicated region
    $region14: #{spatial_model4_forward.1} parent=1 // pred_check
      _
    $region15: #{spatial_model4_forward.1} parent=1 // pred_check_branch
      %53 = sbr.rel (0) target = $region17
    $region16: #{spatial_model4_forward.1} parent=1 // pred_region
      %55 = vsyncadd [#allocation6], 0
      %s56 = sshll.u32 %s3, 4
      %s57 = int_to_ptr.hbm [resolvable:$true] %s56
      %s58 = sshll.u32 [#allocation7], 4
      %s59 = int_to_ptr.vmem [resolvable:$true] %s58
      %64 = dma.hbm_to_vmem [thread:$0]  %s57, 8192, %s59, [#allocation6], 128, 128, 8
    $region17: #{spatial_model4_forward.1} parent=1 // pred_fallthru
      _
    // Predicated region
    $region18: #{spatial_model4_forward.1} parent=1 // pred_check
      _
    $region19: #{spatial_model4_forward.1} parent=1 // pred_check_branch
      %66 = sbr.rel (0) target = $region21
    $region20: #{spatial_model4_forward.1} parent=1 // pred_region
      %68 = vsyncadd [#allocation9], 0
      %s69 = sshll.u32 %s4, 4
      %s70 = int_to_ptr.hbm [resolvable:$true] %s69
      %s71 = sshll.u32 [#allocation8], 4
      %s72 = int_to_ptr.vmem [resolvable:$true] %s71
      %77 = dma.hbm_to_vmem [thread:$0]  %s70, 4096, %s72, [#allocation9], 128, 128, 8
    $region21: #{spatial_model4_forward.1} parent=1 // pred_fallthru
      _
    // Predicated region
    $region22: #{spatial_model4_forward.1} parent=1 // pred_check
      _
    $region23: #{spatial_model4_forward.1} parent=1 // pred_check_branch
      %79 = sbr.rel (0) target = $region25
    $region24: #{spatial_model4_forward.1} parent=1 // pred_region
      _
    $region25: #{spatial_model4_forward.1} parent=1 // pred_fallthru
      _
    // Predicated region
    $region26: #{spatial_model4_forward.1} parent=1 // pred_check
      _
    $region27: #{spatial_model4_forward.1} parent=1 // pred_check_branch
      %81 = sbr.rel (0) target = $region29
    $region28: #{spatial_model4_forward.1} parent=1 // pred_region
      _
    $region29: #{spatial_model4_forward.1} parent=1 // pred_fallthru
      _
    // Predicated region
    $region30: #{spatial_model4_forward.1} parent=1 // pred_check
      _
    $region31: #{spatial_model4_forward.1} parent=1 // pred_check_branch
      %83 = sbr.rel (0) target = $region33
    $region32: #{spatial_model4_forward.1} parent=1 // pred_region
      _
    $region33: #{spatial_model4_forward.1} parent=1 // pred_fallthru
      _
    // Predicated region
    $region34: #{spatial_model4_forward.1} parent=1 // pred_check
      _
    $region35: #{spatial_model4_forward.1} parent=1 // pred_check_branch
      %85 = sbr.rel (0) target = $region37
    $region36: #{spatial_model4_forward.1} parent=1 // pred_region
      _
    $region37: #{spatial_model4_forward.1} parent=1 // pred_fallthru
      _
    // Predicated region
    $region38: #{spatial_model4_forward.1} parent=1 // pred_check
      _
    $region39: #{spatial_model4_forward.1} parent=1 // pred_check_branch
      %87 = sbr.rel (0) target = $region41
    $region40: #{spatial_model4_forward.1} parent=1 // pred_region
      _
    $region41: #{spatial_model4_forward.1} parent=1 // pred_fallthru
      _
    // Predicated region
    $region42: #{spatial_model4_forward.1} parent=1 // pred_check
      _
    $region43: #{spatial_model4_forward.1} parent=1 // pred_check_branch
      %89 = sbr.rel (0) target = $region45
    $region44: #{spatial_model4_forward.1} parent=1 // pred_region
      _
    $region45: #{spatial_model4_forward.1} parent=1 // pred_fallthru
      _
    // Predicated region
    $region46: #{spatial_model4_forward.1} parent=1 // pred_check
      _
    $region47: #{spatial_model4_forward.1} parent=1 // pred_check_branch
      %91 = sbr.rel (0) target = $region49
    $region48: #{spatial_model4_forward.1} parent=1 // pred_region
      _
    $region49: #{spatial_model4_forward.1} parent=1 // pred_fallthru
      _
    // Predicated region
    $region50: #{spatial_model4_forward.1} parent=1 // pred_check
      _
    $region51: #{spatial_model4_forward.1} parent=1 // pred_check_branch
      %93 = sbr.rel (0) target = $region53
    $region52: #{spatial_model4_forward.1} parent=1 // pred_region
      _
    $region53: #{spatial_model4_forward.1} parent=1 // pred_fallthru
      _
    // Predicated region
    $region54: #{spatial_model4_forward.1} parent=1 // pred_check
      _
    $region55: #{spatial_model4_forward.1} parent=1 // pred_check_branch
      %95 = sbr.rel (0) target = $region57
    $region56: #{spatial_model4_forward.1} parent=1 // pred_region
      _
    $region57: #{spatial_model4_forward.1} parent=1 // pred_fallthru
      _
    // Predicated region
    $region58: #{spatial_model4_forward.1} parent=1 // pred_check
      _
    $region59: #{spatial_model4_forward.1} parent=1 // pred_check_branch
      %97 = sbr.rel (0) target = $region61
    $region60: #{spatial_model4_forward.1} parent=1 // pred_region
      _
    $region61: #{spatial_model4_forward.1} parent=1 // pred_fallthru
      _
    // Predicated region
    $region62: #{spatial_model4_forward.1} parent=1 // pred_check
      _
    $region63: #{spatial_model4_forward.1} parent=1 // pred_check_branch
      %99 = sbr.rel (0) target = $region65
    $region64: #{spatial_model4_forward.1} parent=1 // pred_region
      %101 = dma.done [#allocation3], 32768
    $region65: #{spatial_model4_forward.1} parent=1 // pred_fallthru
      _
    // Predicated region
    $region66: #{spatial_model4_forward.1} parent=1 // pred_check
      _
    $region67: #{spatial_model4_forward.1} parent=1 // pred_check_branch
      %103 = sbr.rel (0) target = $region69
    $region68: #{spatial_model4_forward.1} parent=1 // pred_region
      %105 = dma.done [#allocation6], 16384
    $region69: #{spatial_model4_forward.1} parent=1 // pred_fallthru
      _
    // Predicated region
    $region70: #{spatial_model4_forward.1} parent=1 // pred_check
      _
    $region71: #{spatial_model4_forward.1} parent=1 // pred_check_branch
      %107 = sbr.rel (0) target = $region73
    $region72: #{spatial_model4_forward.1} parent=1 // pred_region
      %109 = dma.done [#allocation6], 8192
    $region73: #{spatial_model4_forward.1} parent=1 // pred_fallthru
      _
    // Predicated region
    $region74: #{spatial_model4_forward.1} parent=1 // pred_check
      _
    $region75: #{spatial_model4_forward.1} parent=1 // pred_check_branch
      %111 = sbr.rel (0) target = $region77
    $region76: #{spatial_model4_forward.1} parent=1 // pred_region
      %113 = dma.done [#allocation9], 4096
    $region77: #{spatial_model4_forward.1} parent=1 // pred_fallthru
      _
    %v114 = vld [vmem:[%s0] sm:$0xff]
    %v115 = vld [vmem:[%s0 + $0x8] sm:$0xff]
    %118 = vst [vmem:[#allocation1] ss:$4 sm:$0xff] %v114
    %s119 = scalar_lea.vmem [#allocation1], 32
    %120 = vst [vmem:[%s119] ss:$4 sm:$0xff] %v115
    %v121 = vld.sshfl [vmem:[#allocation1] sm:$0xff pattern:$0x73625140]
    %v122 = vld.sshfl [vmem:[#allocation1 + $0x8] sm:$0xff pattern:$0x73625140]
    %v123 = vld.sshfl [vmem:[#allocation1 + $0x10] sm:$0xff pattern:$0x73625140]
    %v124 = vld.sshfl [vmem:[#allocation1 + $0x18] sm:$0xff pattern:$0x73625140]
    %v125 = vld.sshfl [vmem:[#allocation1 + $0x20] sm:$0xff pattern:$0x73625140]
    %v126 = vld.sshfl [vmem:[#allocation1 + $0x28] sm:$0xff pattern:$0x73625140]
    %v127 = vld.sshfl [vmem:[#allocation1 + $0x30] sm:$0xff pattern:$0x73625140]
    %v128 = vld.sshfl [vmem:[#allocation1 + $0x38] sm:$0xff pattern:$0x73625140]
    %v137 = vpack.c.bf16 %v121, %v121
    %v138 = vpack.c.bf16 %v122, %v122
    %v139 = vpack.c.bf16 %v123, %v123
    %v140 = vpack.c.bf16 %v124, %v124
    %v141 = vpack.c.bf16 %v125, %v125
    %v142 = vpack.c.bf16 %v126, %v126
    %v143 = vpack.c.bf16 %v127, %v127
    %v144 = vpack.c.bf16 %v128, %v128
    %v145 = vld [vmem:[#allocation2] sm:$0xff]
    %v146 = vld [vmem:[#allocation2 + $0x8] sm:$0xff]
    %v147 = vld [vmem:[#allocation2 + $0x10] sm:$0xff]
    %v148 = vld [vmem:[#allocation2 + $0x18] sm:$0xff]
    %v149 = vld [vmem:[#allocation2 + $0x20] sm:$0xff]
    %v150 = vld [vmem:[#allocation2 + $0x28] sm:$0xff]
    %v151 = vld [vmem:[#allocation2 + $0x30] sm:$0xff]
    %v152 = vld [vmem:[#allocation2 + $0x38] sm:$0xff]
    %v153 = vld [vmem:[#allocation2 + $0x40] sm:$0xff]
    %v154 = vld [vmem:[#allocation2 + $0x48] sm:$0xff]
    %v155 = vld [vmem:[#allocation2 + $0x50] sm:$0xff]
    %v156 = vld [vmem:[#allocation2 + $0x58] sm:$0xff]
    %v157 = vld [vmem:[#allocation2 + $0x60] sm:$0xff]
    %v158 = vld [vmem:[#allocation2 + $0x68] sm:$0xff]
    %v159 = vld [vmem:[#allocation2 + $0x70] sm:$0xff]
    %v160 = vld [vmem:[#allocation2 + $0x78] sm:$0xff]
    %v161 = vld [vmem:[#allocation2 + $0x80] sm:$0xff]
    %v162 = vld [vmem:[#allocation2 + $0x88] sm:$0xff]
    %v163 = vld [vmem:[#allocation2 + $0x90] sm:$0xff]
    %v164 = vld [vmem:[#allocation2 + $0x98] sm:$0xff]
    %v165 = vld [vmem:[#allocation2 + $0xa0] sm:$0xff]
    %v166 = vld [vmem:[#allocation2 + $0xa8] sm:$0xff]
    %v167 = vld [vmem:[#allocation2 + $0xb0] sm:$0xff]
    %v168 = vld [vmem:[#allocation2 + $0xb8] sm:$0xff]
    %v169 = vld [vmem:[#allocation2 + $0xc0] sm:$0xff]
    %v170 = vld [vmem:[#allocation2 + $0xc8] sm:$0xff]
    %v171 = vld [vmem:[#allocation2 + $0xd0] sm:$0xff]
    %v172 = vld [vmem:[#allocation2 + $0xd8] sm:$0xff]
    %v173 = vld [vmem:[#allocation2 + $0xe0] sm:$0xff]
    %v174 = vld [vmem:[#allocation2 + $0xe8] sm:$0xff]
    %v175 = vld [vmem:[#allocation2 + $0xf0] sm:$0xff]
    %v176 = vld [vmem:[#allocation2 + $0xf8] sm:$0xff]
    %v177 = vld [vmem:[#allocation2 + $0x100] sm:$0xff]
    %v178 = vld [vmem:[#allocation2 + $0x108] sm:$0xff]
    %v179 = vld [vmem:[#allocation2 + $0x110] sm:$0xff]
    %v180 = vld [vmem:[#allocation2 + $0x118] sm:$0xff]
    %v181 = vld [vmem:[#allocation2 + $0x120] sm:$0xff]
    %v182 = vld [vmem:[#allocation2 + $0x128] sm:$0xff]
    %v183 = vld [vmem:[#allocation2 + $0x130] sm:$0xff]
    %v184 = vld [vmem:[#allocation2 + $0x138] sm:$0xff]
    %v185 = vld [vmem:[#allocation2 + $0x140] sm:$0xff]
    %v186 = vld [vmem:[#allocation2 + $0x148] sm:$0xff]
    %v187 = vld [vmem:[#allocation2 + $0x150] sm:$0xff]
    %v188 = vld [vmem:[#allocation2 + $0x158] sm:$0xff]
    %v189 = vld [vmem:[#allocation2 + $0x160] sm:$0xff]
    %v190 = vld [vmem:[#allocation2 + $0x168] sm:$0xff]
    %v191 = vld [vmem:[#allocation2 + $0x170] sm:$0xff]
    %v192 = vld [vmem:[#allocation2 + $0x178] sm:$0xff]
    %v193 = vld [vmem:[#allocation2 + $0x180] sm:$0xff]
    %v194 = vld [vmem:[#allocation2 + $0x188] sm:$0xff]
    %v195 = vld [vmem:[#allocation2 + $0x190] sm:$0xff]
    %v196 = vld [vmem:[#allocation2 + $0x198] sm:$0xff]
    %v197 = vld [vmem:[#allocation2 + $0x1a0] sm:$0xff]
    %v198 = vld [vmem:[#allocation2 + $0x1a8] sm:$0xff]
    %v199 = vld [vmem:[#allocation2 + $0x1b0] sm:$0xff]
    %v200 = vld [vmem:[#allocation2 + $0x1b8] sm:$0xff]
    %v201 = vld [vmem:[#allocation2 + $0x1c0] sm:$0xff]
    %v202 = vld [vmem:[#allocation2 + $0x1c8] sm:$0xff]
    %v203 = vld [vmem:[#allocation2 + $0x1d0] sm:$0xff]
    %v204 = vld [vmem:[#allocation2 + $0x1d8] sm:$0xff]
    %v205 = vld [vmem:[#allocation2 + $0x1e0] sm:$0xff]
    %v206 = vld [vmem:[#allocation2 + $0x1e8] sm:$0xff]
    %v207 = vld [vmem:[#allocation2 + $0x1f0] sm:$0xff]
    %v208 = vld [vmem:[#allocation2 + $0x1f8] sm:$0xff]
    %v209 = vld [vmem:[#allocation2 + $0x200] sm:$0xff]
    %v210 = vld [vmem:[#allocation2 + $0x208] sm:$0xff]
    %v211 = vld [vmem:[#allocation2 + $0x210] sm:$0xff]
    %v212 = vld [vmem:[#allocation2 + $0x218] sm:$0xff]
    %v213 = vld [vmem:[#allocation2 + $0x220] sm:$0xff]
    %v214 = vld [vmem:[#allocation2 + $0x228] sm:$0xff]
    %v215 = vld [vmem:[#allocation2 + $0x230] sm:$0xff]
    %v216 = vld [vmem:[#allocation2 + $0x238] sm:$0xff]
    %v217 = vld [vmem:[#allocation2 + $0x240] sm:$0xff]
    %v218 = vld [vmem:[#allocation2 + $0x248] sm:$0xff]
    %v219 = vld [vmem:[#allocation2 + $0x250] sm:$0xff]
    %v220 = vld [vmem:[#allocation2 + $0x258] sm:$0xff]
    %v221 = vld [vmem:[#allocation2 + $0x260] sm:$0xff]
    %v222 = vld [vmem:[#allocation2 + $0x268] sm:$0xff]
    %v223 = vld [vmem:[#allocation2 + $0x270] sm:$0xff]
    %v224 = vld [vmem:[#allocation2 + $0x278] sm:$0xff]
    %v225 = vld [vmem:[#allocation2 + $0x280] sm:$0xff]
    %v226 = vld [vmem:[#allocation2 + $0x288] sm:$0xff]
    %v227 = vld [vmem:[#allocation2 + $0x290] sm:$0xff]
    %v228 = vld [vmem:[#allocation2 + $0x298] sm:$0xff]
    %v229 = vld [vmem:[#allocation2 + $0x2a0] sm:$0xff]
    %v230 = vld [vmem:[#allocation2 + $0x2a8] sm:$0xff]
    %v231 = vld [vmem:[#allocation2 + $0x2b0] sm:$0xff]
    %v232 = vld [vmem:[#allocation2 + $0x2b8] sm:$0xff]
    %v233 = vld [vmem:[#allocation2 + $0x2c0] sm:$0xff]
    %v234 = vld [vmem:[#allocation2 + $0x2c8] sm:$0xff]
    %v235 = vld [vmem:[#allocation2 + $0x2d0] sm:$0xff]
    %v236 = vld [vmem:[#allocation2 + $0x2d8] sm:$0xff]
    %v237 = vld [vmem:[#allocation2 + $0x2e0] sm:$0xff]
    %v238 = vld [vmem:[#allocation2 + $0x2e8] sm:$0xff]
    %v239 = vld [vmem:[#allocation2 + $0x2f0] sm:$0xff]
    %v240 = vld [vmem:[#allocation2 + $0x2f8] sm:$0xff]
    %v241 = vld [vmem:[#allocation2 + $0x300] sm:$0xff]
    %v242 = vld [vmem:[#allocation2 + $0x308] sm:$0xff]
    %v243 = vld [vmem:[#allocation2 + $0x310] sm:$0xff]
    %v244 = vld [vmem:[#allocation2 + $0x318] sm:$0xff]
    %v245 = vld [vmem:[#allocation2 + $0x320] sm:$0xff]
    %v246 = vld [vmem:[#allocation2 + $0x328] sm:$0xff]
    %v247 = vld [vmem:[#allocation2 + $0x330] sm:$0xff]
    %v248 = vld [vmem:[#allocation2 + $0x338] sm:$0xff]
    %v249 = vld [vmem:[#allocation2 + $0x340] sm:$0xff]
    %v250 = vld [vmem:[#allocation2 + $0x348] sm:$0xff]
    %v251 = vld [vmem:[#allocation2 + $0x350] sm:$0xff]
    %v252 = vld [vmem:[#allocation2 + $0x358] sm:$0xff]
    %v253 = vld [vmem:[#allocation2 + $0x360] sm:$0xff]
    %v254 = vld [vmem:[#allocation2 + $0x368] sm:$0xff]
    %v255 = vld [vmem:[#allocation2 + $0x370] sm:$0xff]
    %v256 = vld [vmem:[#allocation2 + $0x378] sm:$0xff]
    %v257 = vld [vmem:[#allocation2 + $0x380] sm:$0xff]
    %v258 = vld [vmem:[#allocation2 + $0x388] sm:$0xff]
    %v259 = vld [vmem:[#allocation2 + $0x390] sm:$0xff]
    %v260 = vld [vmem:[#allocation2 + $0x398] sm:$0xff]
    %v261 = vld [vmem:[#allocation2 + $0x3a0] sm:$0xff]
    %v262 = vld [vmem:[#allocation2 + $0x3a8] sm:$0xff]
    %v263 = vld [vmem:[#allocation2 + $0x3b0] sm:$0xff]
    %v264 = vld [vmem:[#allocation2 + $0x3b8] sm:$0xff]
    %v265 = vld [vmem:[#allocation2 + $0x3c0] sm:$0xff]
    %v266 = vld [vmem:[#allocation2 + $0x3c8] sm:$0xff]
    %v267 = vld [vmem:[#allocation2 + $0x3d0] sm:$0xff]
    %v268 = vld [vmem:[#allocation2 + $0x3d8] sm:$0xff]
    %v269 = vld [vmem:[#allocation2 + $0x3e0] sm:$0xff]
    %v270 = vld [vmem:[#allocation2 + $0x3e8] sm:$0xff]
    %v271 = vld [vmem:[#allocation2 + $0x3f0] sm:$0xff]
    %v272 = vld [vmem:[#allocation2 + $0x3f8] sm:$0xff]
    %v273 = vld [vmem:[#allocation2 + $0x400] sm:$0xff]
    %v274 = vld [vmem:[#allocation2 + $0x408] sm:$0xff]
    %v275 = vld [vmem:[#allocation2 + $0x410] sm:$0xff]
    %v276 = vld [vmem:[#allocation2 + $0x418] sm:$0xff]
    %v277 = vld [vmem:[#allocation2 + $0x420] sm:$0xff]
    %v278 = vld [vmem:[#allocation2 + $0x428] sm:$0xff]
    %v279 = vld [vmem:[#allocation2 + $0x430] sm:$0xff]
    %v280 = vld [vmem:[#allocation2 + $0x438] sm:$0xff]
    %v281 = vld [vmem:[#allocation2 + $0x440] sm:$0xff]
    %v282 = vld [vmem:[#allocation2 + $0x448] sm:$0xff]
    %v283 = vld [vmem:[#allocation2 + $0x450] sm:$0xff]
    %v284 = vld [vmem:[#allocation2 + $0x458] sm:$0xff]
    %v285 = vld [vmem:[#allocation2 + $0x460] sm:$0xff]
    %v286 = vld [vmem:[#allocation2 + $0x468] sm:$0xff]
    %v287 = vld [vmem:[#allocation2 + $0x470] sm:$0xff]
    %v288 = vld [vmem:[#allocation2 + $0x478] sm:$0xff]
    %v289 = vld [vmem:[#allocation2 + $0x480] sm:$0xff]
    %v290 = vld [vmem:[#allocation2 + $0x488] sm:$0xff]
    %v291 = vld [vmem:[#allocation2 + $0x490] sm:$0xff]
    %v292 = vld [vmem:[#allocation2 + $0x498] sm:$0xff]
    %v293 = vld [vmem:[#allocation2 + $0x4a0] sm:$0xff]
    %v294 = vld [vmem:[#allocation2 + $0x4a8] sm:$0xff]
    %v295 = vld [vmem:[#allocation2 + $0x4b0] sm:$0xff]
    %v296 = vld [vmem:[#allocation2 + $0x4b8] sm:$0xff]
    %v297 = vld [vmem:[#allocation2 + $0x4c0] sm:$0xff]
    %v298 = vld [vmem:[#allocation2 + $0x4c8] sm:$0xff]
    %v299 = vld [vmem:[#allocation2 + $0x4d0] sm:$0xff]
    %v300 = vld [vmem:[#allocation2 + $0x4d8] sm:$0xff]
    %v301 = vld [vmem:[#allocation2 + $0x4e0] sm:$0xff]
    %v302 = vld [vmem:[#allocation2 + $0x4e8] sm:$0xff]
    %v303 = vld [vmem:[#allocation2 + $0x4f0] sm:$0xff]
    %v304 = vld [vmem:[#allocation2 + $0x4f8] sm:$0xff]
    %v305 = vld [vmem:[#allocation2 + $0x500] sm:$0xff]
    %v306 = vld [vmem:[#allocation2 + $0x508] sm:$0xff]
    %v307 = vld [vmem:[#allocation2 + $0x510] sm:$0xff]
    %v308 = vld [vmem:[#allocation2 + $0x518] sm:$0xff]
    %v309 = vld [vmem:[#allocation2 + $0x520] sm:$0xff]
    %v310 = vld [vmem:[#allocation2 + $0x528] sm:$0xff]
    %v311 = vld [vmem:[#allocation2 + $0x530] sm:$0xff]
    %v312 = vld [vmem:[#allocation2 + $0x538] sm:$0xff]
    %v313 = vld [vmem:[#allocation2 + $0x540] sm:$0xff]
    %v314 = vld [vmem:[#allocation2 + $0x548] sm:$0xff]
    %v315 = vld [vmem:[#allocation2 + $0x550] sm:$0xff]
    %v316 = vld [vmem:[#allocation2 + $0x558] sm:$0xff]
    %v317 = vld [vmem:[#allocation2 + $0x560] sm:$0xff]
    %v318 = vld [vmem:[#allocation2 + $0x568] sm:$0xff]
    %v319 = vld [vmem:[#allocation2 + $0x570] sm:$0xff]
    %v320 = vld [vmem:[#allocation2 + $0x578] sm:$0xff]
    %v321 = vld [vmem:[#allocation2 + $0x580] sm:$0xff]
    %v322 = vld [vmem:[#allocation2 + $0x588] sm:$0xff]
    %v323 = vld [vmem:[#allocation2 + $0x590] sm:$0xff]
    %v324 = vld [vmem:[#allocation2 + $0x598] sm:$0xff]
    %v325 = vld [vmem:[#allocation2 + $0x5a0] sm:$0xff]
    %v326 = vld [vmem:[#allocation2 + $0x5a8] sm:$0xff]
    %v327 = vld [vmem:[#allocation2 + $0x5b0] sm:$0xff]
    %v328 = vld [vmem:[#allocation2 + $0x5b8] sm:$0xff]
    %v329 = vld [vmem:[#allocation2 + $0x5c0] sm:$0xff]
    %v330 = vld [vmem:[#allocation2 + $0x5c8] sm:$0xff]
    %v331 = vld [vmem:[#allocation2 + $0x5d0] sm:$0xff]
    %v332 = vld [vmem:[#allocation2 + $0x5d8] sm:$0xff]
    %v333 = vld [vmem:[#allocation2 + $0x5e0] sm:$0xff]
    %v334 = vld [vmem:[#allocation2 + $0x5e8] sm:$0xff]
    %v335 = vld [vmem:[#allocation2 + $0x5f0] sm:$0xff]
    %v336 = vld [vmem:[#allocation2 + $0x5f8] sm:$0xff]
    %v337 = vld [vmem:[#allocation2 + $0x600] sm:$0xff]
    %v338 = vld [vmem:[#allocation2 + $0x608] sm:$0xff]
    %v339 = vld [vmem:[#allocation2 + $0x610] sm:$0xff]
    %v340 = vld [vmem:[#allocation2 + $0x618] sm:$0xff]
    %v341 = vld [vmem:[#allocation2 + $0x620] sm:$0xff]
    %v342 = vld [vmem:[#allocation2 + $0x628] sm:$0xff]
    %v343 = vld [vmem:[#allocation2 + $0x630] sm:$0xff]
    %v344 = vld [vmem:[#allocation2 + $0x638] sm:$0xff]
    %v345 = vld [vmem:[#allocation2 + $0x640] sm:$0xff]
    %v346 = vld [vmem:[#allocation2 + $0x648] sm:$0xff]
    %v347 = vld [vmem:[#allocation2 + $0x650] sm:$0xff]
    %v348 = vld [vmem:[#allocation2 + $0x658] sm:$0xff]
    %v349 = vld [vmem:[#allocation2 + $0x660] sm:$0xff]
    %v350 = vld [vmem:[#allocation2 + $0x668] sm:$0xff]
    %v351 = vld [vmem:[#allocation2 + $0x670] sm:$0xff]
    %v352 = vld [vmem:[#allocation2 + $0x678] sm:$0xff]
    %v353 = vld [vmem:[#allocation2 + $0x680] sm:$0xff]
    %v354 = vld [vmem:[#allocation2 + $0x688] sm:$0xff]
    %v355 = vld [vmem:[#allocation2 + $0x690] sm:$0xff]
    %v356 = vld [vmem:[#allocation2 + $0x698] sm:$0xff]
    %v357 = vld [vmem:[#allocation2 + $0x6a0] sm:$0xff]
    %v358 = vld [vmem:[#allocation2 + $0x6a8] sm:$0xff]
    %v359 = vld [vmem:[#allocation2 + $0x6b0] sm:$0xff]
    %v360 = vld [vmem:[#allocation2 + $0x6b8] sm:$0xff]
    %v361 = vld [vmem:[#allocation2 + $0x6c0] sm:$0xff]
    %v362 = vld [vmem:[#allocation2 + $0x6c8] sm:$0xff]
    %v363 = vld [vmem:[#allocation2 + $0x6d0] sm:$0xff]
    %v364 = vld [vmem:[#allocation2 + $0x6d8] sm:$0xff]
    %v365 = vld [vmem:[#allocation2 + $0x6e0] sm:$0xff]
    %v366 = vld [vmem:[#allocation2 + $0x6e8] sm:$0xff]
    %v367 = vld [vmem:[#allocation2 + $0x6f0] sm:$0xff]
    %v368 = vld [vmem:[#allocation2 + $0x6f8] sm:$0xff]
    %v369 = vld [vmem:[#allocation2 + $0x700] sm:$0xff]
    %v370 = vld [vmem:[#allocation2 + $0x708] sm:$0xff]
    %v371 = vld [vmem:[#allocation2 + $0x710] sm:$0xff]
    %v372 = vld [vmem:[#allocation2 + $0x718] sm:$0xff]
    %v373 = vld [vmem:[#allocation2 + $0x720] sm:$0xff]
    %v374 = vld [vmem:[#allocation2 + $0x728] sm:$0xff]
    %v375 = vld [vmem:[#allocation2 + $0x730] sm:$0xff]
    %v376 = vld [vmem:[#allocation2 + $0x738] sm:$0xff]
    %v377 = vld [vmem:[#allocation2 + $0x740] sm:$0xff]
    %v378 = vld [vmem:[#allocation2 + $0x748] sm:$0xff]
    %v379 = vld [vmem:[#allocation2 + $0x750] sm:$0xff]
    %v380 = vld [vmem:[#allocation2 + $0x758] sm:$0xff]
    %v381 = vld [vmem:[#allocation2 + $0x760] sm:$0xff]
    %v382 = vld [vmem:[#allocation2 + $0x768] sm:$0xff]
    %v383 = vld [vmem:[#allocation2 + $0x770] sm:$0xff]
    %v384 = vld [vmem:[#allocation2 + $0x778] sm:$0xff]
    %v385 = vld [vmem:[#allocation2 + $0x780] sm:$0xff]
    %v386 = vld [vmem:[#allocation2 + $0x788] sm:$0xff]
    %v387 = vld [vmem:[#allocation2 + $0x790] sm:$0xff]
    %v388 = vld [vmem:[#allocation2 + $0x798] sm:$0xff]
    %v389 = vld [vmem:[#allocation2 + $0x7a0] sm:$0xff]
    %v390 = vld [vmem:[#allocation2 + $0x7a8] sm:$0xff]
    %v391 = vld [vmem:[#allocation2 + $0x7b0] sm:$0xff]
    %v392 = vld [vmem:[#allocation2 + $0x7b8] sm:$0xff]
    %v393 = vld [vmem:[#allocation2 + $0x7c0] sm:$0xff]
    %v394 = vld [vmem:[#allocation2 + $0x7c8] sm:$0xff]
    %v395 = vld [vmem:[#allocation2 + $0x7d0] sm:$0xff]
    %v396 = vld [vmem:[#allocation2 + $0x7d8] sm:$0xff]
    %v397 = vld [vmem:[#allocation2 + $0x7e0] sm:$0xff]
    %v398 = vld [vmem:[#allocation2 + $0x7e8] sm:$0xff]
    %v399 = vld [vmem:[#allocation2 + $0x7f0] sm:$0xff]
    %v400 = vld [vmem:[#allocation2 + $0x7f8] sm:$0xff]
    %v401 = vld [vmem:[%s8] sm:$0xf]
    %v403 = vperm.slane %v401, 0
    %v404 = vperm.slane %v401, 1
    %v405 = vperm.slane %v401, 2
    %v406 = vperm.slane %v401, 3
    %v667 = vunpack.c.l.b16 %v145
    %v668 = vunpack.c.h.b16 %v145
    %v669 = vunpack.c.l.b16 %v146
    %v670 = vunpack.c.h.b16 %v146
    %v671 = vunpack.c.l.b16 %v147
    %v672 = vunpack.c.h.b16 %v147
    %v673 = vunpack.c.l.b16 %v148
    %v674 = vunpack.c.h.b16 %v148
    %v675 = vunpack.c.l.b16 %v149
    %v676 = vunpack.c.h.b16 %v149
    %v677 = vunpack.c.l.b16 %v150
    %v678 = vunpack.c.h.b16 %v150
    %v679 = vunpack.c.l.b16 %v151
    %v680 = vunpack.c.h.b16 %v151
    %v681 = vunpack.c.l.b16 %v152
    %v682 = vunpack.c.h.b16 %v152
    %v683 = vunpack.c.l.b16 %v153
    %v684 = vunpack.c.h.b16 %v153
    %v685 = vunpack.c.l.b16 %v154
    %v686 = vunpack.c.h.b16 %v154
    %v687 = vunpack.c.l.b16 %v155
    %v688 = vunpack.c.h.b16 %v155
    %v689 = vunpack.c.l.b16 %v156
    %v690 = vunpack.c.h.b16 %v156
    %v691 = vunpack.c.l.b16 %v157
    %v692 = vunpack.c.h.b16 %v157
    %v693 = vunpack.c.l.b16 %v158
    %v694 = vunpack.c.h.b16 %v158
    %v695 = vunpack.c.l.b16 %v159
    %v696 = vunpack.c.h.b16 %v159
    %v697 = vunpack.c.l.b16 %v160
    %v698 = vunpack.c.h.b16 %v160
    %v699 = vunpack.c.l.b16 %v161
    %v700 = vunpack.c.h.b16 %v161
    %v701 = vunpack.c.l.b16 %v162
    %v702 = vunpack.c.h.b16 %v162
    %v703 = vunpack.c.l.b16 %v163
    %v704 = vunpack.c.h.b16 %v163
    %v705 = vunpack.c.l.b16 %v164
    %v706 = vunpack.c.h.b16 %v164
    %v707 = vunpack.c.l.b16 %v165
    %v708 = vunpack.c.h.b16 %v165
    %v709 = vunpack.c.l.b16 %v166
    %v710 = vunpack.c.h.b16 %v166
    %v711 = vunpack.c.l.b16 %v167
    %v712 = vunpack.c.h.b16 %v167
    %v713 = vunpack.c.l.b16 %v168
    %v714 = vunpack.c.h.b16 %v168
    %v715 = vunpack.c.l.b16 %v169
    %v716 = vunpack.c.h.b16 %v169
    %v717 = vunpack.c.l.b16 %v170
    %v718 = vunpack.c.h.b16 %v170
    %v719 = vunpack.c.l.b16 %v171
    %v720 = vunpack.c.h.b16 %v171
    %v721 = vunpack.c.l.b16 %v172
    %v722 = vunpack.c.h.b16 %v172
    %v723 = vunpack.c.l.b16 %v173
    %v724 = vunpack.c.h.b16 %v173
    %v725 = vunpack.c.l.b16 %v174
    %v726 = vunpack.c.h.b16 %v174
    %v727 = vunpack.c.l.b16 %v175
    %v728 = vunpack.c.h.b16 %v175
    %v729 = vunpack.c.l.b16 %v176
    %v730 = vunpack.c.h.b16 %v176
    %v731 = vunpack.c.l.b16 %v177
    %v732 = vunpack.c.h.b16 %v177
    %v733 = vunpack.c.l.b16 %v178
    %v734 = vunpack.c.h.b16 %v178
    %v735 = vunpack.c.l.b16 %v179
    %v736 = vunpack.c.h.b16 %v179
    %v737 = vunpack.c.l.b16 %v180
    %v738 = vunpack.c.h.b16 %v180
    %v739 = vunpack.c.l.b16 %v181
    %v740 = vunpack.c.h.b16 %v181
    %v741 = vunpack.c.l.b16 %v182
    %v742 = vunpack.c.h.b16 %v182
    %v743 = vunpack.c.l.b16 %v183
    %v744 = vunpack.c.h.b16 %v183
    %v745 = vunpack.c.l.b16 %v184
    %v746 = vunpack.c.h.b16 %v184
    %v747 = vunpack.c.l.b16 %v185
    %v748 = vunpack.c.h.b16 %v185
    %v749 = vunpack.c.l.b16 %v186
    %v750 = vunpack.c.h.b16 %v186
    %v751 = vunpack.c.l.b16 %v187
    %v752 = vunpack.c.h.b16 %v187
    %v753 = vunpack.c.l.b16 %v188
    %v754 = vunpack.c.h.b16 %v188
    %v755 = vunpack.c.l.b16 %v189
    %v756 = vunpack.c.h.b16 %v189
    %v757 = vunpack.c.l.b16 %v190
    %v758 = vunpack.c.h.b16 %v190
    %v759 = vunpack.c.l.b16 %v191
    %v760 = vunpack.c.h.b16 %v191
    %v761 = vunpack.c.l.b16 %v192
    %v762 = vunpack.c.h.b16 %v192
    %v763 = vunpack.c.l.b16 %v193
    %v764 = vunpack.c.h.b16 %v193
    %v765 = vunpack.c.l.b16 %v194
    %v766 = vunpack.c.h.b16 %v194
    %v767 = vunpack.c.l.b16 %v195
    %v768 = vunpack.c.h.b16 %v195
    %v769 = vunpack.c.l.b16 %v196
    %v770 = vunpack.c.h.b16 %v196
    %v771 = vunpack.c.l.b16 %v197
    %v772 = vunpack.c.h.b16 %v197
    %v773 = vunpack.c.l.b16 %v198
    %v774 = vunpack.c.h.b16 %v198
    %v775 = vunpack.c.l.b16 %v199
    %v776 = vunpack.c.h.b16 %v199
    %v777 = vunpack.c.l.b16 %v200
    %v778 = vunpack.c.h.b16 %v200
    %v779 = vunpack.c.l.b16 %v201
    %v780 = vunpack.c.h.b16 %v201
    %v781 = vunpack.c.l.b16 %v202
    %v782 = vunpack.c.h.b16 %v202
    %v783 = vunpack.c.l.b16 %v203
    %v784 = vunpack.c.h.b16 %v203
    %v785 = vunpack.c.l.b16 %v204
    %v786 = vunpack.c.h.b16 %v204
    %v787 = vunpack.c.l.b16 %v205
    %v788 = vunpack.c.h.b16 %v205
    %v789 = vunpack.c.l.b16 %v206
    %v790 = vunpack.c.h.b16 %v206
    %v791 = vunpack.c.l.b16 %v207
    %v792 = vunpack.c.h.b16 %v207
    %v793 = vunpack.c.l.b16 %v208
    %v794 = vunpack.c.h.b16 %v208
    %v795 = vunpack.c.l.b16 %v209
    %v796 = vunpack.c.h.b16 %v209
    %v797 = vunpack.c.l.b16 %v210
    %v798 = vunpack.c.h.b16 %v210
    %v799 = vunpack.c.l.b16 %v211
    %v800 = vunpack.c.h.b16 %v211
    %v801 = vunpack.c.l.b16 %v212
    %v802 = vunpack.c.h.b16 %v212
    %v803 = vunpack.c.l.b16 %v213
    %v804 = vunpack.c.h.b16 %v213
    %v805 = vunpack.c.l.b16 %v214
    %v806 = vunpack.c.h.b16 %v214
    %v807 = vunpack.c.l.b16 %v215
    %v808 = vunpack.c.h.b16 %v215
    %v809 = vunpack.c.l.b16 %v216
    %v810 = vunpack.c.h.b16 %v216
    %v811 = vunpack.c.l.b16 %v217
    %v812 = vunpack.c.h.b16 %v217
    %v813 = vunpack.c.l.b16 %v218
    %v814 = vunpack.c.h.b16 %v218
    %v815 = vunpack.c.l.b16 %v219
    %v816 = vunpack.c.h.b16 %v219
    %v817 = vunpack.c.l.b16 %v220
    %v818 = vunpack.c.h.b16 %v220
    %v819 = vunpack.c.l.b16 %v221
    %v820 = vunpack.c.h.b16 %v221
    %v821 = vunpack.c.l.b16 %v222
    %v822 = vunpack.c.h.b16 %v222
    %v823 = vunpack.c.l.b16 %v223
    %v824 = vunpack.c.h.b16 %v223
    %v825 = vunpack.c.l.b16 %v224
    %v826 = vunpack.c.h.b16 %v224
    %v827 = vunpack.c.l.b16 %v225
    %v828 = vunpack.c.h.b16 %v225
    %v829 = vunpack.c.l.b16 %v226
    %v830 = vunpack.c.h.b16 %v226
    %v831 = vunpack.c.l.b16 %v227
    %v832 = vunpack.c.h.b16 %v227
    %v833 = vunpack.c.l.b16 %v228
    %v834 = vunpack.c.h.b16 %v228
    %v835 = vunpack.c.l.b16 %v229
    %v836 = vunpack.c.h.b16 %v229
    %v837 = vunpack.c.l.b16 %v230
    %v838 = vunpack.c.h.b16 %v230
    %v839 = vunpack.c.l.b16 %v231
    %v840 = vunpack.c.h.b16 %v231
    %v841 = vunpack.c.l.b16 %v232
    %v842 = vunpack.c.h.b16 %v232
    %v843 = vunpack.c.l.b16 %v233
    %v844 = vunpack.c.h.b16 %v233
    %v845 = vunpack.c.l.b16 %v234
    %v846 = vunpack.c.h.b16 %v234
    %v847 = vunpack.c.l.b16 %v235
    %v848 = vunpack.c.h.b16 %v235
    %v849 = vunpack.c.l.b16 %v236
    %v850 = vunpack.c.h.b16 %v236
    %v851 = vunpack.c.l.b16 %v237
    %v852 = vunpack.c.h.b16 %v237
    %v853 = vunpack.c.l.b16 %v238
    %v854 = vunpack.c.h.b16 %v238
    %v855 = vunpack.c.l.b16 %v239
    %v856 = vunpack.c.h.b16 %v239
    %v857 = vunpack.c.l.b16 %v240
    %v858 = vunpack.c.h.b16 %v240
    %v859 = vunpack.c.l.b16 %v241
    %v860 = vunpack.c.h.b16 %v241
    %v861 = vunpack.c.l.b16 %v242
    %v862 = vunpack.c.h.b16 %v242
    %v863 = vunpack.c.l.b16 %v243
    %v864 = vunpack.c.h.b16 %v243
    %v865 = vunpack.c.l.b16 %v244
    %v866 = vunpack.c.h.b16 %v244
    %v867 = vunpack.c.l.b16 %v245
    %v868 = vunpack.c.h.b16 %v245
    %v869 = vunpack.c.l.b16 %v246
    %v870 = vunpack.c.h.b16 %v246
    %v871 = vunpack.c.l.b16 %v247
    %v872 = vunpack.c.h.b16 %v247
    %v873 = vunpack.c.l.b16 %v248
    %v874 = vunpack.c.h.b16 %v248
    %v875 = vunpack.c.l.b16 %v249
    %v876 = vunpack.c.h.b16 %v249
    %v877 = vunpack.c.l.b16 %v250
    %v878 = vunpack.c.h.b16 %v250
    %v879 = vunpack.c.l.b16 %v251
    %v880 = vunpack.c.h.b16 %v251
    %v881 = vunpack.c.l.b16 %v252
    %v882 = vunpack.c.h.b16 %v252
    %v883 = vunpack.c.l.b16 %v253
    %v884 = vunpack.c.h.b16 %v253
    %v885 = vunpack.c.l.b16 %v254
    %v886 = vunpack.c.h.b16 %v254
    %v887 = vunpack.c.l.b16 %v255
    %v888 = vunpack.c.h.b16 %v255
    %v889 = vunpack.c.l.b16 %v256
    %v890 = vunpack.c.h.b16 %v256
    %v891 = vunpack.c.l.b16 %v257
    %v892 = vunpack.c.h.b16 %v257
    %v893 = vunpack.c.l.b16 %v258
    %v894 = vunpack.c.h.b16 %v258
    %v895 = vunpack.c.l.b16 %v259
    %v896 = vunpack.c.h.b16 %v259
    %v897 = vunpack.c.l.b16 %v260
    %v898 = vunpack.c.h.b16 %v260
    %v899 = vunpack.c.l.b16 %v261
    %v900 = vunpack.c.h.b16 %v261
    %v901 = vunpack.c.l.b16 %v262
    %v902 = vunpack.c.h.b16 %v262
    %v903 = vunpack.c.l.b16 %v263
    %v904 = vunpack.c.h.b16 %v263
    %v905 = vunpack.c.l.b16 %v264
    %v906 = vunpack.c.h.b16 %v264
    %v907 = vunpack.c.l.b16 %v265
    %v908 = vunpack.c.h.b16 %v265
    %v909 = vunpack.c.l.b16 %v266
    %v910 = vunpack.c.h.b16 %v266
    %v911 = vunpack.c.l.b16 %v267
    %v912 = vunpack.c.h.b16 %v267
    %v913 = vunpack.c.l.b16 %v268
    %v914 = vunpack.c.h.b16 %v268
    %v915 = vunpack.c.l.b16 %v269
    %v916 = vunpack.c.h.b16 %v269
    %v917 = vunpack.c.l.b16 %v270
    %v918 = vunpack.c.h.b16 %v270
    %v919 = vunpack.c.l.b16 %v271
    %v920 = vunpack.c.h.b16 %v271
    %v921 = vunpack.c.l.b16 %v272
    %v922 = vunpack.c.h.b16 %v272
    %v923 = vunpack.c.l.b16 %v273
    %v924 = vunpack.c.h.b16 %v273
    %v925 = vunpack.c.l.b16 %v274
    %v926 = vunpack.c.h.b16 %v274
    %v927 = vunpack.c.l.b16 %v275
    %v928 = vunpack.c.h.b16 %v275
    %v929 = vunpack.c.l.b16 %v276
    %v930 = vunpack.c.h.b16 %v276
    %v931 = vunpack.c.l.b16 %v277
    %v932 = vunpack.c.h.b16 %v277
    %v933 = vunpack.c.l.b16 %v278
    %v934 = vunpack.c.h.b16 %v278
    %v935 = vunpack.c.l.b16 %v279
    %v936 = vunpack.c.h.b16 %v279
    %v937 = vunpack.c.l.b16 %v280
    %v938 = vunpack.c.h.b16 %v280
    %v939 = vunpack.c.l.b16 %v281
    %v940 = vunpack.c.h.b16 %v281
    %v941 = vunpack.c.l.b16 %v282
    %v942 = vunpack.c.h.b16 %v282
    %v943 = vunpack.c.l.b16 %v283
    %v944 = vunpack.c.h.b16 %v283
    %v945 = vunpack.c.l.b16 %v284
    %v946 = vunpack.c.h.b16 %v284
    %v947 = vunpack.c.l.b16 %v285
    %v948 = vunpack.c.h.b16 %v285
    %v949 = vunpack.c.l.b16 %v286
    %v950 = vunpack.c.h.b16 %v286
    %v951 = vunpack.c.l.b16 %v287
    %v952 = vunpack.c.h.b16 %v287
    %v953 = vunpack.c.l.b16 %v288
    %v954 = vunpack.c.h.b16 %v288
    %v955 = vunpack.c.l.b16 %v289
    %v956 = vunpack.c.h.b16 %v289
    %v957 = vunpack.c.l.b16 %v290
    %v958 = vunpack.c.h.b16 %v290
    %v959 = vunpack.c.l.b16 %v291
    %v960 = vunpack.c.h.b16 %v291
    %v961 = vunpack.c.l.b16 %v292
    %v962 = vunpack.c.h.b16 %v292
    %v963 = vunpack.c.l.b16 %v293
    %v964 = vunpack.c.h.b16 %v293
    %v965 = vunpack.c.l.b16 %v294
    %v966 = vunpack.c.h.b16 %v294
    %v967 = vunpack.c.l.b16 %v295
    %v968 = vunpack.c.h.b16 %v295
    %v969 = vunpack.c.l.b16 %v296
    %v970 = vunpack.c.h.b16 %v296
    %v971 = vunpack.c.l.b16 %v297
    %v972 = vunpack.c.h.b16 %v297
    %v973 = vunpack.c.l.b16 %v298
    %v974 = vunpack.c.h.b16 %v298
    %v975 = vunpack.c.l.b16 %v299
    %v976 = vunpack.c.h.b16 %v299
    %v977 = vunpack.c.l.b16 %v300
    %v978 = vunpack.c.h.b16 %v300
    %v979 = vunpack.c.l.b16 %v301
    %v980 = vunpack.c.h.b16 %v301
    %v981 = vunpack.c.l.b16 %v302
    %v982 = vunpack.c.h.b16 %v302
    %v983 = vunpack.c.l.b16 %v303
    %v984 = vunpack.c.h.b16 %v303
    %v985 = vunpack.c.l.b16 %v304
    %v986 = vunpack.c.h.b16 %v304
    %v987 = vunpack.c.l.b16 %v305
    %v988 = vunpack.c.h.b16 %v305
    %v989 = vunpack.c.l.b16 %v306
    %v990 = vunpack.c.h.b16 %v306
    %v991 = vunpack.c.l.b16 %v307
    %v992 = vunpack.c.h.b16 %v307
    %v993 = vunpack.c.l.b16 %v308
    %v994 = vunpack.c.h.b16 %v308
    %v995 = vunpack.c.l.b16 %v309
    %v996 = vunpack.c.h.b16 %v309
    %v997 = vunpack.c.l.b16 %v310
    %v998 = vunpack.c.h.b16 %v310
    %v999 = vunpack.c.l.b16 %v311
    %v1000 = vunpack.c.h.b16 %v311
    %v1001 = vunpack.c.l.b16 %v312
    %v1002 = vunpack.c.h.b16 %v312
    %v1003 = vunpack.c.l.b16 %v313
    %v1004 = vunpack.c.h.b16 %v313
    %v1005 = vunpack.c.l.b16 %v314
    %v1006 = vunpack.c.h.b16 %v314
    %v1007 = vunpack.c.l.b16 %v315
    %v1008 = vunpack.c.h.b16 %v315
    %v1009 = vunpack.c.l.b16 %v316
    %v1010 = vunpack.c.h.b16 %v316
    %v1011 = vunpack.c.l.b16 %v317
    %v1012 = vunpack.c.h.b16 %v317
    %v1013 = vunpack.c.l.b16 %v318
    %v1014 = vunpack.c.h.b16 %v318
    %v1015 = vunpack.c.l.b16 %v319
    %v1016 = vunpack.c.h.b16 %v319
    %v1017 = vunpack.c.l.b16 %v320
    %v1018 = vunpack.c.h.b16 %v320
    %v1019 = vunpack.c.l.b16 %v321
    %v1020 = vunpack.c.h.b16 %v321
    %v1021 = vunpack.c.l.b16 %v322
    %v1022 = vunpack.c.h.b16 %v322
    %v1023 = vunpack.c.l.b16 %v323
    %v1024 = vunpack.c.h.b16 %v323
    %v1025 = vunpack.c.l.b16 %v324
    %v1026 = vunpack.c.h.b16 %v324
    %v1027 = vunpack.c.l.b16 %v325
    %v1028 = vunpack.c.h.b16 %v325
    %v1029 = vunpack.c.l.b16 %v326
    %v1030 = vunpack.c.h.b16 %v326
    %v1031 = vunpack.c.l.b16 %v327
    %v1032 = vunpack.c.h.b16 %v327
    %v1033 = vunpack.c.l.b16 %v328
    %v1034 = vunpack.c.h.b16 %v328
    %v1035 = vunpack.c.l.b16 %v329
    %v1036 = vunpack.c.h.b16 %v329
    %v1037 = vunpack.c.l.b16 %v330
    %v1038 = vunpack.c.h.b16 %v330
    %v1039 = vunpack.c.l.b16 %v331
    %v1040 = vunpack.c.h.b16 %v331
    %v1041 = vunpack.c.l.b16 %v332
    %v1042 = vunpack.c.h.b16 %v332
    %v1043 = vunpack.c.l.b16 %v333
    %v1044 = vunpack.c.h.b16 %v333
    %v1045 = vunpack.c.l.b16 %v334
    %v1046 = vunpack.c.h.b16 %v334
    %v1047 = vunpack.c.l.b16 %v335
    %v1048 = vunpack.c.h.b16 %v335
    %v1049 = vunpack.c.l.b16 %v336
    %v1050 = vunpack.c.h.b16 %v336
    %v1051 = vunpack.c.l.b16 %v337
    %v1052 = vunpack.c.h.b16 %v337
    %v1053 = vunpack.c.l.b16 %v338
    %v1054 = vunpack.c.h.b16 %v338
    %v1055 = vunpack.c.l.b16 %v339
    %v1056 = vunpack.c.h.b16 %v339
    %v1057 = vunpack.c.l.b16 %v340
    %v1058 = vunpack.c.h.b16 %v340
    %v1059 = vunpack.c.l.b16 %v341
    %v1060 = vunpack.c.h.b16 %v341
    %v1061 = vunpack.c.l.b16 %v342
    %v1062 = vunpack.c.h.b16 %v342
    %v1063 = vunpack.c.l.b16 %v343
    %v1064 = vunpack.c.h.b16 %v343
    %v1065 = vunpack.c.l.b16 %v344
    %v1066 = vunpack.c.h.b16 %v344
    %v1067 = vunpack.c.l.b16 %v345
    %v1068 = vunpack.c.h.b16 %v345
    %v1069 = vunpack.c.l.b16 %v346
    %v1070 = vunpack.c.h.b16 %v346
    %v1071 = vunpack.c.l.b16 %v347
    %v1072 = vunpack.c.h.b16 %v347
    %v1073 = vunpack.c.l.b16 %v348
    %v1074 = vunpack.c.h.b16 %v348
    %v1075 = vunpack.c.l.b16 %v349
    %v1076 = vunpack.c.h.b16 %v349
    %v1077 = vunpack.c.l.b16 %v350
    %v1078 = vunpack.c.h.b16 %v350
    %v1079 = vunpack.c.l.b16 %v351
    %v1080 = vunpack.c.h.b16 %v351
    %v1081 = vunpack.c.l.b16 %v352
    %v1082 = vunpack.c.h.b16 %v352
    %v1083 = vunpack.c.l.b16 %v353
    %v1084 = vunpack.c.h.b16 %v353
    %v1085 = vunpack.c.l.b16 %v354
    %v1086 = vunpack.c.h.b16 %v354
    %v1087 = vunpack.c.l.b16 %v355
    %v1088 = vunpack.c.h.b16 %v355
    %v1089 = vunpack.c.l.b16 %v356
    %v1090 = vunpack.c.h.b16 %v356
    %v1091 = vunpack.c.l.b16 %v357
    %v1092 = vunpack.c.h.b16 %v357
    %v1093 = vunpack.c.l.b16 %v358
    %v1094 = vunpack.c.h.b16 %v358
    %v1095 = vunpack.c.l.b16 %v359
    %v1096 = vunpack.c.h.b16 %v359
    %v1097 = vunpack.c.l.b16 %v360
    %v1098 = vunpack.c.h.b16 %v360
    %v1099 = vunpack.c.l.b16 %v361
    %v1100 = vunpack.c.h.b16 %v361
    %v1101 = vunpack.c.l.b16 %v362
    %v1102 = vunpack.c.h.b16 %v362
    %v1103 = vunpack.c.l.b16 %v363
    %v1104 = vunpack.c.h.b16 %v363
    %v1105 = vunpack.c.l.b16 %v364
    %v1106 = vunpack.c.h.b16 %v364
    %v1107 = vunpack.c.l.b16 %v365
    %v1108 = vunpack.c.h.b16 %v365
    %v1109 = vunpack.c.l.b16 %v366
    %v1110 = vunpack.c.h.b16 %v366
    %v1111 = vunpack.c.l.b16 %v367
    %v1112 = vunpack.c.h.b16 %v367
    %v1113 = vunpack.c.l.b16 %v368
    %v1114 = vunpack.c.h.b16 %v368
    %v1115 = vunpack.c.l.b16 %v369
    %v1116 = vunpack.c.h.b16 %v369
    %v1117 = vunpack.c.l.b16 %v370
    %v1118 = vunpack.c.h.b16 %v370
    %v1119 = vunpack.c.l.b16 %v371
    %v1120 = vunpack.c.h.b16 %v371
    %v1121 = vunpack.c.l.b16 %v372
    %v1122 = vunpack.c.h.b16 %v372
    %v1123 = vunpack.c.l.b16 %v373
    %v1124 = vunpack.c.h.b16 %v373
    %v1125 = vunpack.c.l.b16 %v374
    %v1126 = vunpack.c.h.b16 %v374
    %v1127 = vunpack.c.l.b16 %v375
    %v1128 = vunpack.c.h.b16 %v375
    %v1129 = vunpack.c.l.b16 %v376
    %v1130 = vunpack.c.h.b16 %v376
    %v1131 = vunpack.c.l.b16 %v377
    %v1132 = vunpack.c.h.b16 %v377
    %v1133 = vunpack.c.l.b16 %v378
    %v1134 = vunpack.c.h.b16 %v378
    %v1135 = vunpack.c.l.b16 %v379
    %v1136 = vunpack.c.h.b16 %v379
    %v1137 = vunpack.c.l.b16 %v380
    %v1138 = vunpack.c.h.b16 %v380
    %v1139 = vunpack.c.l.b16 %v381
    %v1140 = vunpack.c.h.b16 %v381
    %v1141 = vunpack.c.l.b16 %v382
    %v1142 = vunpack.c.h.b16 %v382
    %v1143 = vunpack.c.l.b16 %v383
    %v1144 = vunpack.c.h.b16 %v383
    %v1145 = vunpack.c.l.b16 %v384
    %v1146 = vunpack.c.h.b16 %v384
    %v1147 = vunpack.c.l.b16 %v385
    %v1148 = vunpack.c.h.b16 %v385
    %v1149 = vunpack.c.l.b16 %v386
    %v1150 = vunpack.c.h.b16 %v386
    %v1151 = vunpack.c.l.b16 %v387
    %v1152 = vunpack.c.h.b16 %v387
    %v1153 = vunpack.c.l.b16 %v388
    %v1154 = vunpack.c.h.b16 %v388
    %v1155 = vunpack.c.l.b16 %v389
    %v1156 = vunpack.c.h.b16 %v389
    %v1157 = vunpack.c.l.b16 %v390
    %v1158 = vunpack.c.h.b16 %v390
    %v1159 = vunpack.c.l.b16 %v391
    %v1160 = vunpack.c.h.b16 %v391
    %v1161 = vunpack.c.l.b16 %v392
    %v1162 = vunpack.c.h.b16 %v392
    %v1163 = vunpack.c.l.b16 %v393
    %v1164 = vunpack.c.h.b16 %v393
    %v1165 = vunpack.c.l.b16 %v394
    %v1166 = vunpack.c.h.b16 %v394
    %v1167 = vunpack.c.l.b16 %v395
    %v1168 = vunpack.c.h.b16 %v395
    %v1169 = vunpack.c.l.b16 %v396
    %v1170 = vunpack.c.h.b16 %v396
    %v1171 = vunpack.c.l.b16 %v397
    %v1172 = vunpack.c.h.b16 %v397
    %v1173 = vunpack.c.l.b16 %v398
    %v1174 = vunpack.c.h.b16 %v398
    %v1175 = vunpack.c.l.b16 %v399
    %v1176 = vunpack.c.h.b16 %v399
    %v1177 = vunpack.c.l.b16 %v400
    %v1178 = vunpack.c.h.b16 %v400
    %v1179 = vpack.c.b16 %v671, %v667
    %v1180 = vpack.c.b16 %v672, %v668
    %v1181 = vpack.c.b16 %v673, %v669
    %v1182 = vpack.c.b16 %v674, %v670
    %v1183 = vpack.c.b16 %v679, %v675
    %v1184 = vpack.c.b16 %v680, %v676
    %v1185 = vpack.c.b16 %v681, %v677
    %v1186 = vpack.c.b16 %v682, %v678
    %v1187 = vpack.c.b16 %v687, %v683
    %v1188 = vpack.c.b16 %v688, %v684
    %v1189 = vpack.c.b16 %v689, %v685
    %v1190 = vpack.c.b16 %v690, %v686
    %v1191 = vpack.c.b16 %v695, %v691
    %v1192 = vpack.c.b16 %v696, %v692
    %v1193 = vpack.c.b16 %v697, %v693
    %v1194 = vpack.c.b16 %v698, %v694
    %v1195 = vpack.c.b16 %v703, %v699
    %v1196 = vpack.c.b16 %v704, %v700
    %v1197 = vpack.c.b16 %v705, %v701
    %v1198 = vpack.c.b16 %v706, %v702
    %v1199 = vpack.c.b16 %v711, %v707
    %v1200 = vpack.c.b16 %v712, %v708
    %v1201 = vpack.c.b16 %v713, %v709
    %v1202 = vpack.c.b16 %v714, %v710
    %v1203 = vpack.c.b16 %v719, %v715
    %v1204 = vpack.c.b16 %v720, %v716
    %v1205 = vpack.c.b16 %v721, %v717
    %v1206 = vpack.c.b16 %v722, %v718
    %v1207 = vpack.c.b16 %v727, %v723
    %v1208 = vpack.c.b16 %v728, %v724
    %v1209 = vpack.c.b16 %v729, %v725
    %v1210 = vpack.c.b16 %v730, %v726
    %v1211 = vpack.c.b16 %v735, %v731
    %v1212 = vpack.c.b16 %v736, %v732
    %v1213 = vpack.c.b16 %v737, %v733
    %v1214 = vpack.c.b16 %v738, %v734
    %v1215 = vpack.c.b16 %v743, %v739
    %v1216 = vpack.c.b16 %v744, %v740
    %v1217 = vpack.c.b16 %v745, %v741
    %v1218 = vpack.c.b16 %v746, %v742
    %v1219 = vpack.c.b16 %v751, %v747
    %v1220 = vpack.c.b16 %v752, %v748
    %v1221 = vpack.c.b16 %v753, %v749
    %v1222 = vpack.c.b16 %v754, %v750
    %v1223 = vpack.c.b16 %v759, %v755
    %v1224 = vpack.c.b16 %v760, %v756
    %v1225 = vpack.c.b16 %v761, %v757
    %v1226 = vpack.c.b16 %v762, %v758
    %v1227 = vpack.c.b16 %v767, %v763
    %v1228 = vpack.c.b16 %v768, %v764
    %v1229 = vpack.c.b16 %v769, %v765
    %v1230 = vpack.c.b16 %v770, %v766
    %v1231 = vpack.c.b16 %v775, %v771
    %v1232 = vpack.c.b16 %v776, %v772
    %v1233 = vpack.c.b16 %v777, %v773
    %v1234 = vpack.c.b16 %v778, %v774
    %v1235 = vpack.c.b16 %v783, %v779
    %v1236 = vpack.c.b16 %v784, %v780
    %v1237 = vpack.c.b16 %v785, %v781
    %v1238 = vpack.c.b16 %v786, %v782
    %v1239 = vpack.c.b16 %v791, %v787
    %v1240 = vpack.c.b16 %v792, %v788
    %v1241 = vpack.c.b16 %v793, %v789
    %v1242 = vpack.c.b16 %v794, %v790
    %v1243 = vpack.c.b16 %v799, %v795
    %v1244 = vpack.c.b16 %v800, %v796
    %v1245 = vpack.c.b16 %v801, %v797
    %v1246 = vpack.c.b16 %v802, %v798
    %v1247 = vpack.c.b16 %v807, %v803
    %v1248 = vpack.c.b16 %v808, %v804
    %v1249 = vpack.c.b16 %v809, %v805
    %v1250 = vpack.c.b16 %v810, %v806
    %v1251 = vpack.c.b16 %v815, %v811
    %v1252 = vpack.c.b16 %v816, %v812
    %v1253 = vpack.c.b16 %v817, %v813
    %v1254 = vpack.c.b16 %v818, %v814
    %v1255 = vpack.c.b16 %v823, %v819
    %v1256 = vpack.c.b16 %v824, %v820
    %v1257 = vpack.c.b16 %v825, %v821
    %v1258 = vpack.c.b16 %v826, %v822
    %v1259 = vpack.c.b16 %v831, %v827
    %v1260 = vpack.c.b16 %v832, %v828
    %v1261 = vpack.c.b16 %v833, %v829
    %v1262 = vpack.c.b16 %v834, %v830
    %v1263 = vpack.c.b16 %v839, %v835
    %v1264 = vpack.c.b16 %v840, %v836
    %v1265 = vpack.c.b16 %v841, %v837
    %v1266 = vpack.c.b16 %v842, %v838
    %v1267 = vpack.c.b16 %v847, %v843
    %v1268 = vpack.c.b16 %v848, %v844
    %v1269 = vpack.c.b16 %v849, %v845
    %v1270 = vpack.c.b16 %v850, %v846
    %v1271 = vpack.c.b16 %v855, %v851
    %v1272 = vpack.c.b16 %v856, %v852
    %v1273 = vpack.c.b16 %v857, %v853
    %v1274 = vpack.c.b16 %v858, %v854
    %v1275 = vpack.c.b16 %v863, %v859
    %v1276 = vpack.c.b16 %v864, %v860
    %v1277 = vpack.c.b16 %v865, %v861
    %v1278 = vpack.c.b16 %v866, %v862
    %v1279 = vpack.c.b16 %v871, %v867
    %v1280 = vpack.c.b16 %v872, %v868
    %v1281 = vpack.c.b16 %v873, %v869
    %v1282 = vpack.c.b16 %v874, %v870
    %v1283 = vpack.c.b16 %v879, %v875
    %v1284 = vpack.c.b16 %v880, %v876
    %v1285 = vpack.c.b16 %v881, %v877
    %v1286 = vpack.c.b16 %v882, %v878
    %v1287 = vpack.c.b16 %v887, %v883
    %v1288 = vpack.c.b16 %v888, %v884
    %v1289 = vpack.c.b16 %v889, %v885
    %v1290 = vpack.c.b16 %v890, %v886
    %v1291 = vpack.c.b16 %v895, %v891
    %v1292 = vpack.c.b16 %v896, %v892
    %v1293 = vpack.c.b16 %v897, %v893
    %v1294 = vpack.c.b16 %v898, %v894
    %v1295 = vpack.c.b16 %v903, %v899
    %v1296 = vpack.c.b16 %v904, %v900
    %v1297 = vpack.c.b16 %v905, %v901
    %v1298 = vpack.c.b16 %v906, %v902
    %v1299 = vpack.c.b16 %v911, %v907
    %v1300 = vpack.c.b16 %v912, %v908
    %v1301 = vpack.c.b16 %v913, %v909
    %v1302 = vpack.c.b16 %v914, %v910
    %v1303 = vpack.c.b16 %v919, %v915
    %v1304 = vpack.c.b16 %v920, %v916
    %v1305 = vpack.c.b16 %v921, %v917
    %v1306 = vpack.c.b16 %v922, %v918
    %v1307 = vpack.c.b16 %v927, %v923
    %v1308 = vpack.c.b16 %v928, %v924
    %v1309 = vpack.c.b16 %v929, %v925
    %v1310 = vpack.c.b16 %v930, %v926
    %v1311 = vpack.c.b16 %v935, %v931
    %v1312 = vpack.c.b16 %v936, %v932
    %v1313 = vpack.c.b16 %v937, %v933
    %v1314 = vpack.c.b16 %v938, %v934
    %v1315 = vpack.c.b16 %v943, %v939
    %v1316 = vpack.c.b16 %v944, %v940
    %v1317 = vpack.c.b16 %v945, %v941
    %v1318 = vpack.c.b16 %v946, %v942
    %v1319 = vpack.c.b16 %v951, %v947
    %v1320 = vpack.c.b16 %v952, %v948
    %v1321 = vpack.c.b16 %v953, %v949
    %v1322 = vpack.c.b16 %v954, %v950
    %v1323 = vpack.c.b16 %v959, %v955
    %v1324 = vpack.c.b16 %v960, %v956
    %v1325 = vpack.c.b16 %v961, %v957
    %v1326 = vpack.c.b16 %v962, %v958
    %v1327 = vpack.c.b16 %v967, %v963
    %v1328 = vpack.c.b16 %v968, %v964
    %v1329 = vpack.c.b16 %v969, %v965
    %v1330 = vpack.c.b16 %v970, %v966
    %v1331 = vpack.c.b16 %v975, %v971
    %v1332 = vpack.c.b16 %v976, %v972
    %v1333 = vpack.c.b16 %v977, %v973
    %v1334 = vpack.c.b16 %v978, %v974
    %v1335 = vpack.c.b16 %v983, %v979
    %v1336 = vpack.c.b16 %v984, %v980
    %v1337 = vpack.c.b16 %v985, %v981
    %v1338 = vpack.c.b16 %v986, %v982
    %v1339 = vpack.c.b16 %v991, %v987
    %v1340 = vpack.c.b16 %v992, %v988
    %v1341 = vpack.c.b16 %v993, %v989
    %v1342 = vpack.c.b16 %v994, %v990
    %v1343 = vpack.c.b16 %v999, %v995
    %v1344 = vpack.c.b16 %v1000, %v996
    %v1345 = vpack.c.b16 %v1001, %v997
    %v1346 = vpack.c.b16 %v1002, %v998
    %v1347 = vpack.c.b16 %v1007, %v1003
    %v1348 = vpack.c.b16 %v1008, %v1004
    %v1349 = vpack.c.b16 %v1009, %v1005
    %v1350 = vpack.c.b16 %v1010, %v1006
    %v1351 = vpack.c.b16 %v1015, %v1011
    %v1352 = vpack.c.b16 %v1016, %v1012
    %v1353 = vpack.c.b16 %v1017, %v1013
    %v1354 = vpack.c.b16 %v1018, %v1014
    %v1355 = vpack.c.b16 %v1023, %v1019
    %v1356 = vpack.c.b16 %v1024, %v1020
    %v1357 = vpack.c.b16 %v1025, %v1021
    %v1358 = vpack.c.b16 %v1026, %v1022
    %v1359 = vpack.c.b16 %v1031, %v1027
    %v1360 = vpack.c.b16 %v1032, %v1028
    %v1361 = vpack.c.b16 %v1033, %v1029
    %v1362 = vpack.c.b16 %v1034, %v1030
    %v1363 = vpack.c.b16 %v1039, %v1035
    %v1364 = vpack.c.b16 %v1040, %v1036
    %v1365 = vpack.c.b16 %v1041, %v1037
    %v1366 = vpack.c.b16 %v1042, %v1038
    %v1367 = vpack.c.b16 %v1047, %v1043
    %v1368 = vpack.c.b16 %v1048, %v1044
    %v1369 = vpack.c.b16 %v1049, %v1045
    %v1370 = vpack.c.b16 %v1050, %v1046
    %v1371 = vpack.c.b16 %v1055, %v1051
    %v1372 = vpack.c.b16 %v1056, %v1052
    %v1373 = vpack.c.b16 %v1057, %v1053
    %v1374 = vpack.c.b16 %v1058, %v1054
    %v1375 = vpack.c.b16 %v1063, %v1059
    %v1376 = vpack.c.b16 %v1064, %v1060
    %v1377 = vpack.c.b16 %v1065, %v1061
    %v1378 = vpack.c.b16 %v1066, %v1062
    %v1379 = vpack.c.b16 %v1071, %v1067
    %v1380 = vpack.c.b16 %v1072, %v1068
    %v1381 = vpack.c.b16 %v1073, %v1069
    %v1382 = vpack.c.b16 %v1074, %v1070
    %v1383 = vpack.c.b16 %v1079, %v1075
    %v1384 = vpack.c.b16 %v1080, %v1076
    %v1385 = vpack.c.b16 %v1081, %v1077
    %v1386 = vpack.c.b16 %v1082, %v1078
    %v1387 = vpack.c.b16 %v1087, %v1083
    %v1388 = vpack.c.b16 %v1088, %v1084
    %v1389 = vpack.c.b16 %v1089, %v1085
    %v1390 = vpack.c.b16 %v1090, %v1086
    %v1391 = vpack.c.b16 %v1095, %v1091
    %v1392 = vpack.c.b16 %v1096, %v1092
    %v1393 = vpack.c.b16 %v1097, %v1093
    %v1394 = vpack.c.b16 %v1098, %v1094
    %v1395 = vpack.c.b16 %v1103, %v1099
    %v1396 = vpack.c.b16 %v1104, %v1100
    %v1397 = vpack.c.b16 %v1105, %v1101
    %v1398 = vpack.c.b16 %v1106, %v1102
    %v1399 = vpack.c.b16 %v1111, %v1107
    %v1400 = vpack.c.b16 %v1112, %v1108
    %v1401 = vpack.c.b16 %v1113, %v1109
    %v1402 = vpack.c.b16 %v1114, %v1110
    %v1403 = vpack.c.b16 %v1119, %v1115
    %v1404 = vpack.c.b16 %v1120, %v1116
    %v1405 = vpack.c.b16 %v1121, %v1117
    %v1406 = vpack.c.b16 %v1122, %v1118
    %v1407 = vpack.c.b16 %v1127, %v1123
    %v1408 = vpack.c.b16 %v1128, %v1124
    %v1409 = vpack.c.b16 %v1129, %v1125
    %v1410 = vpack.c.b16 %v1130, %v1126
    %v1411 = vpack.c.b16 %v1135, %v1131
    %v1412 = vpack.c.b16 %v1136, %v1132
    %v1413 = vpack.c.b16 %v1137, %v1133
    %v1414 = vpack.c.b16 %v1138, %v1134
    %v1415 = vpack.c.b16 %v1143, %v1139
    %v1416 = vpack.c.b16 %v1144, %v1140
    %v1417 = vpack.c.b16 %v1145, %v1141
    %v1418 = vpack.c.b16 %v1146, %v1142
    %v1419 = vpack.c.b16 %v1151, %v1147
    %v1420 = vpack.c.b16 %v1152, %v1148
    %v1421 = vpack.c.b16 %v1153, %v1149
    %v1422 = vpack.c.b16 %v1154, %v1150
    %v1423 = vpack.c.b16 %v1159, %v1155
    %v1424 = vpack.c.b16 %v1160, %v1156
    %v1425 = vpack.c.b16 %v1161, %v1157
    %v1426 = vpack.c.b16 %v1162, %v1158
    %v1427 = vpack.c.b16 %v1167, %v1163
    %v1428 = vpack.c.b16 %v1168, %v1164
    %v1429 = vpack.c.b16 %v1169, %v1165
    %v1430 = vpack.c.b16 %v1170, %v1166
    %v1431 = vpack.c.b16 %v1175, %v1171
    %v1432 = vpack.c.b16 %v1176, %v1172
    %v1433 = vpack.c.b16 %v1177, %v1173
    %v1434 = vpack.c.b16 %v1178, %v1174
    %1691 = vmatpush.bf16.msra.mxu0 %v1207
    %1692 = vmatpush.bf16.msra.mxu0 %v1203
    %1693 = vmatpush.bf16.msra.mxu0 %v1199
    %1694 = vmatpush.bf16.msra.mxu0 %v1195
    %1695 = vmatpush.bf16.msra.mxu0 %v1191
    %1696 = vmatpush.bf16.msra.mxu0 %v1187
    %1697 = vmatpush.bf16.msra.mxu0 %v1183
    %1698 = vmatpush.bf16.msra.mxu0 %v1179
    %1699 = vmatmul.bf16.gmra.mxu0 %v137
    %v1700 = vpop.f32.mrf.mxu0
    %v1701 = vadd.f32 %v403, %v1700
    %v1702 = vpop.f32.mrf.mxu0
    %1703 = vdwg.mxu0
    %1704 = vmatpush.bf16.msra.mxu0 %v1239
    %1705 = vmatpush.bf16.msra.mxu0 %v1235
    %1706 = vmatpush.bf16.msra.mxu0 %v1231
    %1707 = vmatpush.bf16.msra.mxu0 %v1227
    %1708 = vmatpush.bf16.msra.mxu0 %v1223
    %1709 = vmatpush.bf16.msra.mxu0 %v1219
    %1710 = vmatpush.bf16.msra.mxu0 %v1215
    %1711 = vmatpush.bf16.msra.mxu0 %v1211
    %1712 = vmatmul.bf16.gmra.mxu0 %v138
    %v1713 = vpop.f32.mrf.mxu0
    %v1714 = vadd.f32 %v1701, %v1713
    %v1715 = vpop.f32.mrf.mxu0
    %1716 = vdwg.mxu0
    %1717 = vmatpush.bf16.msra.mxu0 %v1271
    %1718 = vmatpush.bf16.msra.mxu0 %v1267
    %1719 = vmatpush.bf16.msra.mxu0 %v1263
    %1720 = vmatpush.bf16.msra.mxu0 %v1259
    %1721 = vmatpush.bf16.msra.mxu0 %v1255
    %1722 = vmatpush.bf16.msra.mxu0 %v1251
    %1723 = vmatpush.bf16.msra.mxu0 %v1247
    %1724 = vmatpush.bf16.msra.mxu0 %v1243
    %1725 = vmatmul.bf16.gmra.mxu0 %v139
    %v1726 = vpop.f32.mrf.mxu0
    %v1727 = vadd.f32 %v1714, %v1726
    %v1728 = vpop.f32.mrf.mxu0
    %1729 = vdwg.mxu0
    %1730 = vmatpush.bf16.msra.mxu0 %v1303
    %1731 = vmatpush.bf16.msra.mxu0 %v1299
    %1732 = vmatpush.bf16.msra.mxu0 %v1295
    %1733 = vmatpush.bf16.msra.mxu0 %v1291
    %1734 = vmatpush.bf16.msra.mxu0 %v1287
    %1735 = vmatpush.bf16.msra.mxu0 %v1283
    %1736 = vmatpush.bf16.msra.mxu0 %v1279
    %1737 = vmatpush.bf16.msra.mxu0 %v1275
    %1738 = vmatmul.bf16.gmra.mxu0 %v140
    %v1739 = vpop.f32.mrf.mxu0
    %v1740 = vadd.f32 %v1727, %v1739
    %v1741 = vpop.f32.mrf.mxu0
    %1742 = vdwg.mxu0
    %1743 = vmatpush.bf16.msra.mxu0 %v1335
    %1744 = vmatpush.bf16.msra.mxu0 %v1331
    %1745 = vmatpush.bf16.msra.mxu0 %v1327
    %1746 = vmatpush.bf16.msra.mxu0 %v1323
    %1747 = vmatpush.bf16.msra.mxu0 %v1319
    %1748 = vmatpush.bf16.msra.mxu0 %v1315
    %1749 = vmatpush.bf16.msra.mxu0 %v1311
    %1750 = vmatpush.bf16.msra.mxu0 %v1307
    %1751 = vmatmul.bf16.gmra.mxu0 %v141
    %v1752 = vpop.f32.mrf.mxu0
    %v1753 = vadd.f32 %v1740, %v1752
    %v1754 = vpop.f32.mrf.mxu0
    %1755 = vdwg.mxu0
    %1756 = vmatpush.bf16.msra.mxu0 %v1367
    %1757 = vmatpush.bf16.msra.mxu0 %v1363
    %1758 = vmatpush.bf16.msra.mxu0 %v1359
    %1759 = vmatpush.bf16.msra.mxu0 %v1355
    %1760 = vmatpush.bf16.msra.mxu0 %v1351
    %1761 = vmatpush.bf16.msra.mxu0 %v1347
    %1762 = vmatpush.bf16.msra.mxu0 %v1343
    %1763 = vmatpush.bf16.msra.mxu0 %v1339
    %1764 = vmatmul.bf16.gmra.mxu0 %v142
    %v1765 = vpop.f32.mrf.mxu0
    %v1766 = vadd.f32 %v1753, %v1765
    %v1767 = vpop.f32.mrf.mxu0
    %1768 = vdwg.mxu0
    %1769 = vmatpush.bf16.msra.mxu0 %v1399
    %1770 = vmatpush.bf16.msra.mxu0 %v1395
    %1771 = vmatpush.bf16.msra.mxu0 %v1391
    %1772 = vmatpush.bf16.msra.mxu0 %v1387
    %1773 = vmatpush.bf16.msra.mxu0 %v1383
    %1774 = vmatpush.bf16.msra.mxu0 %v1379
    %1775 = vmatpush.bf16.msra.mxu0 %v1375
    %1776 = vmatpush.bf16.msra.mxu0 %v1371
    %1777 = vmatmul.bf16.gmra.mxu0 %v143
    %v1778 = vpop.f32.mrf.mxu0
    %v1779 = vadd.f32 %v1766, %v1778
    %v1780 = vpop.f32.mrf.mxu0
    %1781 = vdwg.mxu0
    %1782 = vmatpush.bf16.msra.mxu0 %v1431
    %1783 = vmatpush.bf16.msra.mxu0 %v1427
    %1784 = vmatpush.bf16.msra.mxu0 %v1423
    %1785 = vmatpush.bf16.msra.mxu0 %v1419
    %1786 = vmatpush.bf16.msra.mxu0 %v1415
    %1787 = vmatpush.bf16.msra.mxu0 %v1411
    %1788 = vmatpush.bf16.msra.mxu0 %v1407
    %1789 = vmatpush.bf16.msra.mxu0 %v1403
    %1790 = vmatmul.bf16.gmra.mxu0 %v144
    %v1791 = vpop.f32.mrf.mxu0
    %v1792 = vadd.f32 %v1779, %v1791
    %v1793 = vpop.f32.mrf.mxu0
    %1794 = vdwg.mxu0
    %1795 = vmatpush.bf16.msra.mxu0 %v1208
    %1796 = vmatpush.bf16.msra.mxu0 %v1204
    %1797 = vmatpush.bf16.msra.mxu0 %v1200
    %1798 = vmatpush.bf16.msra.mxu0 %v1196
    %1799 = vmatpush.bf16.msra.mxu0 %v1192
    %1800 = vmatpush.bf16.msra.mxu0 %v1188
    %1801 = vmatpush.bf16.msra.mxu0 %v1184
    %1802 = vmatpush.bf16.msra.mxu0 %v1180
    %1803 = vmatmul.bf16.gmra.mxu0 %v137
    %v1804 = vpop.f32.mrf.mxu0
    %v1805 = vadd.f32 %v404, %v1804
    %v1806 = vpop.f32.mrf.mxu0
    %1807 = vdwg.mxu0
    %1808 = vmatpush.bf16.msra.mxu0 %v1240
    %1809 = vmatpush.bf16.msra.mxu0 %v1236
    %1810 = vmatpush.bf16.msra.mxu0 %v1232
    %1811 = vmatpush.bf16.msra.mxu0 %v1228
    %1812 = vmatpush.bf16.msra.mxu0 %v1224
    %1813 = vmatpush.bf16.msra.mxu0 %v1220
    %1814 = vmatpush.bf16.msra.mxu0 %v1216
    %1815 = vmatpush.bf16.msra.mxu0 %v1212
    %1816 = vmatmul.bf16.gmra.mxu0 %v138
    %v1817 = vpop.f32.mrf.mxu0
    %v1818 = vadd.f32 %v1805, %v1817
    %v1819 = vpop.f32.mrf.mxu0
    %1820 = vdwg.mxu0
    %1821 = vmatpush.bf16.msra.mxu0 %v1272
    %1822 = vmatpush.bf16.msra.mxu0 %v1268
    %1823 = vmatpush.bf16.msra.mxu0 %v1264
    %1824 = vmatpush.bf16.msra.mxu0 %v1260
    %1825 = vmatpush.bf16.msra.mxu0 %v1256
    %1826 = vmatpush.bf16.msra.mxu0 %v1252
    %1827 = vmatpush.bf16.msra.mxu0 %v1248
    %1828 = vmatpush.bf16.msra.mxu0 %v1244
    %1829 = vmatmul.bf16.gmra.mxu0 %v139
    %v1830 = vpop.f32.mrf.mxu0
    %v1831 = vadd.f32 %v1818, %v1830
    %v1832 = vpop.f32.mrf.mxu0
    %1833 = vdwg.mxu0
    %1834 = vmatpush.bf16.msra.mxu0 %v1304
    %1835 = vmatpush.bf16.msra.mxu0 %v1300
    %1836 = vmatpush.bf16.msra.mxu0 %v1296
    %1837 = vmatpush.bf16.msra.mxu0 %v1292
    %1838 = vmatpush.bf16.msra.mxu0 %v1288
    %1839 = vmatpush.bf16.msra.mxu0 %v1284
    %1840 = vmatpush.bf16.msra.mxu0 %v1280
    %1841 = vmatpush.bf16.msra.mxu0 %v1276
    %1842 = vmatmul.bf16.gmra.mxu0 %v140
    %v1843 = vpop.f32.mrf.mxu0
    %v1844 = vadd.f32 %v1831, %v1843
    %v1845 = vpop.f32.mrf.mxu0
    %1846 = vdwg.mxu0
    %1847 = vmatpush.bf16.msra.mxu0 %v1336
    %1848 = vmatpush.bf16.msra.mxu0 %v1332
    %1849 = vmatpush.bf16.msra.mxu0 %v1328
    %1850 = vmatpush.bf16.msra.mxu0 %v1324
    %1851 = vmatpush.bf16.msra.mxu0 %v1320
    %1852 = vmatpush.bf16.msra.mxu0 %v1316
    %1853 = vmatpush.bf16.msra.mxu0 %v1312
    %1854 = vmatpush.bf16.msra.mxu0 %v1308
    %1855 = vmatmul.bf16.gmra.mxu0 %v141
    %v1856 = vpop.f32.mrf.mxu0
    %v1857 = vadd.f32 %v1844, %v1856
    %v1858 = vpop.f32.mrf.mxu0
    %1859 = vdwg.mxu0
    %1860 = vmatpush.bf16.msra.mxu0 %v1368
    %1861 = vmatpush.bf16.msra.mxu0 %v1364
    %1862 = vmatpush.bf16.msra.mxu0 %v1360
    %1863 = vmatpush.bf16.msra.mxu0 %v1356
    %1864 = vmatpush.bf16.msra.mxu0 %v1352
    %1865 = vmatpush.bf16.msra.mxu0 %v1348
    %1866 = vmatpush.bf16.msra.mxu0 %v1344
    %1867 = vmatpush.bf16.msra.mxu0 %v1340
    %1868 = vmatmul.bf16.gmra.mxu0 %v142
    %v1869 = vpop.f32.mrf.mxu0
    %v1870 = vadd.f32 %v1857, %v1869
    %v1871 = vpop.f32.mrf.mxu0
    %1872 = vdwg.mxu0
    %1873 = vmatpush.bf16.msra.mxu0 %v1400
    %1874 = vmatpush.bf16.msra.mxu0 %v1396
    %1875 = vmatpush.bf16.msra.mxu0 %v1392
    %1876 = vmatpush.bf16.msra.mxu0 %v1388
    %1877 = vmatpush.bf16.msra.mxu0 %v1384
    %1878 = vmatpush.bf16.msra.mxu0 %v1380
    %1879 = vmatpush.bf16.msra.mxu0 %v1376
    %1880 = vmatpush.bf16.msra.mxu0 %v1372
    %1881 = vmatmul.bf16.gmra.mxu0 %v143
    %v1882 = vpop.f32.mrf.mxu0
    %v1883 = vadd.f32 %v1870, %v1882
    %v1884 = vpop.f32.mrf.mxu0
    %1885 = vdwg.mxu0
    %1886 = vmatpush.bf16.msra.mxu0 %v1432
    %1887 = vmatpush.bf16.msra.mxu0 %v1428
    %1888 = vmatpush.bf16.msra.mxu0 %v1424
    %1889 = vmatpush.bf16.msra.mxu0 %v1420
    %1890 = vmatpush.bf16.msra.mxu0 %v1416
    %1891 = vmatpush.bf16.msra.mxu0 %v1412
    %1892 = vmatpush.bf16.msra.mxu0 %v1408
    %1893 = vmatpush.bf16.msra.mxu0 %v1404
    %1894 = vmatmul.bf16.gmra.mxu0 %v144
    %v1895 = vpop.f32.mrf.mxu0
    %v1896 = vadd.f32 %v1883, %v1895
    %v1897 = vpop.f32.mrf.mxu0
    %1898 = vdwg.mxu0
    %1899 = vmatpush.bf16.msra.mxu0 %v1209
    %1900 = vmatpush.bf16.msra.mxu0 %v1205
    %1901 = vmatpush.bf16.msra.mxu0 %v1201
    %1902 = vmatpush.bf16.msra.mxu0 %v1197
    %1903 = vmatpush.bf16.msra.mxu0 %v1193
    %1904 = vmatpush.bf16.msra.mxu0 %v1189
    %1905 = vmatpush.bf16.msra.mxu0 %v1185
    %1906 = vmatpush.bf16.msra.mxu0 %v1181
    %1907 = vmatmul.bf16.gmra.mxu0 %v137
    %v1908 = vpop.f32.mrf.mxu0
    %v1909 = vadd.f32 %v405, %v1908
    %v1910 = vpop.f32.mrf.mxu0
    %1911 = vdwg.mxu0
    %1912 = vmatpush.bf16.msra.mxu0 %v1241
    %1913 = vmatpush.bf16.msra.mxu0 %v1237
    %1914 = vmatpush.bf16.msra.mxu0 %v1233
    %1915 = vmatpush.bf16.msra.mxu0 %v1229
    %1916 = vmatpush.bf16.msra.mxu0 %v1225
    %1917 = vmatpush.bf16.msra.mxu0 %v1221
    %1918 = vmatpush.bf16.msra.mxu0 %v1217
    %1919 = vmatpush.bf16.msra.mxu0 %v1213
    %1920 = vmatmul.bf16.gmra.mxu0 %v138
    %v1921 = vpop.f32.mrf.mxu0
    %v1922 = vadd.f32 %v1909, %v1921
    %v1923 = vpop.f32.mrf.mxu0
    %1924 = vdwg.mxu0
    %1925 = vmatpush.bf16.msra.mxu0 %v1273
    %1926 = vmatpush.bf16.msra.mxu0 %v1269
    %1927 = vmatpush.bf16.msra.mxu0 %v1265
    %1928 = vmatpush.bf16.msra.mxu0 %v1261
    %1929 = vmatpush.bf16.msra.mxu0 %v1257
    %1930 = vmatpush.bf16.msra.mxu0 %v1253
    %1931 = vmatpush.bf16.msra.mxu0 %v1249
    %1932 = vmatpush.bf16.msra.mxu0 %v1245
    %1933 = vmatmul.bf16.gmra.mxu0 %v139
    %v1934 = vpop.f32.mrf.mxu0
    %v1935 = vadd.f32 %v1922, %v1934
    %v1936 = vpop.f32.mrf.mxu0
    %1937 = vdwg.mxu0
    %1938 = vmatpush.bf16.msra.mxu0 %v1305
    %1939 = vmatpush.bf16.msra.mxu0 %v1301
    %1940 = vmatpush.bf16.msra.mxu0 %v1297
    %1941 = vmatpush.bf16.msra.mxu0 %v1293
    %1942 = vmatpush.bf16.msra.mxu0 %v1289
    %1943 = vmatpush.bf16.msra.mxu0 %v1285
    %1944 = vmatpush.bf16.msra.mxu0 %v1281
    %1945 = vmatpush.bf16.msra.mxu0 %v1277
    %1946 = vmatmul.bf16.gmra.mxu0 %v140
    %v1947 = vpop.f32.mrf.mxu0
    %v1948 = vadd.f32 %v1935, %v1947
    %v1949 = vpop.f32.mrf.mxu0
    %1950 = vdwg.mxu0
    %1951 = vmatpush.bf16.msra.mxu0 %v1337
    %1952 = vmatpush.bf16.msra.mxu0 %v1333
    %1953 = vmatpush.bf16.msra.mxu0 %v1329
    %1954 = vmatpush.bf16.msra.mxu0 %v1325
    %1955 = vmatpush.bf16.msra.mxu0 %v1321
    %1956 = vmatpush.bf16.msra.mxu0 %v1317
    %1957 = vmatpush.bf16.msra.mxu0 %v1313
    %1958 = vmatpush.bf16.msra.mxu0 %v1309
    %1959 = vmatmul.bf16.gmra.mxu0 %v141
    %v1960 = vpop.f32.mrf.mxu0
    %v1961 = vadd.f32 %v1948, %v1960
    %v1962 = vpop.f32.mrf.mxu0
    %1963 = vdwg.mxu0
    %1964 = vmatpush.bf16.msra.mxu0 %v1369
    %1965 = vmatpush.bf16.msra.mxu0 %v1365
    %1966 = vmatpush.bf16.msra.mxu0 %v1361
    %1967 = vmatpush.bf16.msra.mxu0 %v1357
    %1968 = vmatpush.bf16.msra.mxu0 %v1353
    %1969 = vmatpush.bf16.msra.mxu0 %v1349
    %1970 = vmatpush.bf16.msra.mxu0 %v1345
    %1971 = vmatpush.bf16.msra.mxu0 %v1341
    %1972 = vmatmul.bf16.gmra.mxu0 %v142
    %v1973 = vpop.f32.mrf.mxu0
    %v1974 = vadd.f32 %v1961, %v1973
    %v1975 = vpop.f32.mrf.mxu0
    %1976 = vdwg.mxu0
    %1977 = vmatpush.bf16.msra.mxu0 %v1401
    %1978 = vmatpush.bf16.msra.mxu0 %v1397
    %1979 = vmatpush.bf16.msra.mxu0 %v1393
    %1980 = vmatpush.bf16.msra.mxu0 %v1389
    %1981 = vmatpush.bf16.msra.mxu0 %v1385
    %1982 = vmatpush.bf16.msra.mxu0 %v1381
    %1983 = vmatpush.bf16.msra.mxu0 %v1377
    %1984 = vmatpush.bf16.msra.mxu0 %v1373
    %1985 = vmatmul.bf16.gmra.mxu0 %v143
    %v1986 = vpop.f32.mrf.mxu0
    %v1987 = vadd.f32 %v1974, %v1986
    %v1988 = vpop.f32.mrf.mxu0
    %1989 = vdwg.mxu0
    %1990 = vmatpush.bf16.msra.mxu0 %v1433
    %1991 = vmatpush.bf16.msra.mxu0 %v1429
    %1992 = vmatpush.bf16.msra.mxu0 %v1425
    %1993 = vmatpush.bf16.msra.mxu0 %v1421
    %1994 = vmatpush.bf16.msra.mxu0 %v1417
    %1995 = vmatpush.bf16.msra.mxu0 %v1413
    %1996 = vmatpush.bf16.msra.mxu0 %v1409
    %1997 = vmatpush.bf16.msra.mxu0 %v1405
    %1998 = vmatmul.bf16.gmra.mxu0 %v144
    %v1999 = vpop.f32.mrf.mxu0
    %v2000 = vadd.f32 %v1987, %v1999
    %v2001 = vpop.f32.mrf.mxu0
    %2002 = vdwg.mxu0
    %2003 = vmatpush.bf16.msra.mxu0 %v1210
    %2004 = vmatpush.bf16.msra.mxu0 %v1206
    %2005 = vmatpush.bf16.msra.mxu0 %v1202
    %2006 = vmatpush.bf16.msra.mxu0 %v1198
    %2007 = vmatpush.bf16.msra.mxu0 %v1194
    %2008 = vmatpush.bf16.msra.mxu0 %v1190
    %2009 = vmatpush.bf16.msra.mxu0 %v1186
    %2010 = vmatpush.bf16.msra.mxu0 %v1182
    %2011 = vmatmul.bf16.gmra.mxu0 %v137
    %v2012 = vpop.f32.mrf.mxu0
    %v2013 = vadd.f32 %v406, %v2012
    %v2014 = vpop.f32.mrf.mxu0
    %2015 = vdwg.mxu0
    %2016 = vmatpush.bf16.msra.mxu0 %v1242
    %2017 = vmatpush.bf16.msra.mxu0 %v1238
    %2018 = vmatpush.bf16.msra.mxu0 %v1234
    %2019 = vmatpush.bf16.msra.mxu0 %v1230
    %2020 = vmatpush.bf16.msra.mxu0 %v1226
    %2021 = vmatpush.bf16.msra.mxu0 %v1222
    %2022 = vmatpush.bf16.msra.mxu0 %v1218
    %2023 = vmatpush.bf16.msra.mxu0 %v1214
    %2024 = vmatmul.bf16.gmra.mxu0 %v138
    %v2025 = vpop.f32.mrf.mxu0
    %v2026 = vadd.f32 %v2013, %v2025
    %v2027 = vpop.f32.mrf.mxu0
    %2028 = vdwg.mxu0
    %2029 = vmatpush.bf16.msra.mxu0 %v1274
    %2030 = vmatpush.bf16.msra.mxu0 %v1270
    %2031 = vmatpush.bf16.msra.mxu0 %v1266
    %2032 = vmatpush.bf16.msra.mxu0 %v1262
    %2033 = vmatpush.bf16.msra.mxu0 %v1258
    %2034 = vmatpush.bf16.msra.mxu0 %v1254
    %2035 = vmatpush.bf16.msra.mxu0 %v1250
    %2036 = vmatpush.bf16.msra.mxu0 %v1246
    %2037 = vmatmul.bf16.gmra.mxu0 %v139
    %v2038 = vpop.f32.mrf.mxu0
    %v2039 = vadd.f32 %v2026, %v2038
    %v2040 = vpop.f32.mrf.mxu0
    %2041 = vdwg.mxu0
    %2042 = vmatpush.bf16.msra.mxu0 %v1306
    %2043 = vmatpush.bf16.msra.mxu0 %v1302
    %2044 = vmatpush.bf16.msra.mxu0 %v1298
    %2045 = vmatpush.bf16.msra.mxu0 %v1294
    %2046 = vmatpush.bf16.msra.mxu0 %v1290
    %2047 = vmatpush.bf16.msra.mxu0 %v1286
    %2048 = vmatpush.bf16.msra.mxu0 %v1282
    %2049 = vmatpush.bf16.msra.mxu0 %v1278
    %2050 = vmatmul.bf16.gmra.mxu0 %v140
    %v2051 = vpop.f32.mrf.mxu0
    %v2052 = vadd.f32 %v2039, %v2051
    %v2053 = vpop.f32.mrf.mxu0
    %2054 = vdwg.mxu0
    %2055 = vmatpush.bf16.msra.mxu0 %v1338
    %2056 = vmatpush.bf16.msra.mxu0 %v1334
    %2057 = vmatpush.bf16.msra.mxu0 %v1330
    %2058 = vmatpush.bf16.msra.mxu0 %v1326
    %2059 = vmatpush.bf16.msra.mxu0 %v1322
    %2060 = vmatpush.bf16.msra.mxu0 %v1318
    %2061 = vmatpush.bf16.msra.mxu0 %v1314
    %2062 = vmatpush.bf16.msra.mxu0 %v1310
    %2063 = vmatmul.bf16.gmra.mxu0 %v141
    %v2064 = vpop.f32.mrf.mxu0
    %v2065 = vadd.f32 %v2052, %v2064
    %v2066 = vpop.f32.mrf.mxu0
    %2067 = vdwg.mxu0
    %2068 = vmatpush.bf16.msra.mxu0 %v1370
    %2069 = vmatpush.bf16.msra.mxu0 %v1366
    %2070 = vmatpush.bf16.msra.mxu0 %v1362
    %2071 = vmatpush.bf16.msra.mxu0 %v1358
    %2072 = vmatpush.bf16.msra.mxu0 %v1354
    %2073 = vmatpush.bf16.msra.mxu0 %v1350
    %2074 = vmatpush.bf16.msra.mxu0 %v1346
    %2075 = vmatpush.bf16.msra.mxu0 %v1342
    %2076 = vmatmul.bf16.gmra.mxu0 %v142
    %v2077 = vpop.f32.mrf.mxu0
    %v2078 = vadd.f32 %v2065, %v2077
    %v2079 = vpop.f32.mrf.mxu0
    %2080 = vdwg.mxu0
    %2081 = vmatpush.bf16.msra.mxu0 %v1402
    %2082 = vmatpush.bf16.msra.mxu0 %v1398
    %2083 = vmatpush.bf16.msra.mxu0 %v1394
    %2084 = vmatpush.bf16.msra.mxu0 %v1390
    %2085 = vmatpush.bf16.msra.mxu0 %v1386
    %2086 = vmatpush.bf16.msra.mxu0 %v1382
    %2087 = vmatpush.bf16.msra.mxu0 %v1378
    %2088 = vmatpush.bf16.msra.mxu0 %v1374
    %2089 = vmatmul.bf16.gmra.mxu0 %v143
    %v2090 = vpop.f32.mrf.mxu0
    %v2091 = vadd.f32 %v2078, %v2090
    %v2092 = vpop.f32.mrf.mxu0
    %2093 = vdwg.mxu0
    %2094 = vmatpush.bf16.msra.mxu0 %v1434
    %2095 = vmatpush.bf16.msra.mxu0 %v1430
    %2096 = vmatpush.bf16.msra.mxu0 %v1426
    %2097 = vmatpush.bf16.msra.mxu0 %v1422
    %2098 = vmatpush.bf16.msra.mxu0 %v1418
    %2099 = vmatpush.bf16.msra.mxu0 %v1414
    %2100 = vmatpush.bf16.msra.mxu0 %v1410
    %2101 = vmatpush.bf16.msra.mxu0 %v1406
    %2102 = vmatmul.bf16.gmra.mxu0 %v144
    %v2103 = vpop.f32.mrf.mxu0
    %v2104 = vadd.f32 %v2091, %v2103
    %v2105 = vpop.f32.mrf.mxu0
    %2106 = vdwg.mxu0
    %v2107 = vmax.f32 %v1792, 0.0
    %v2108 = vmax.f32 %v1896, 0.0
    %v2109 = vmax.f32 %v2000, 0.0
    %v2110 = vmax.f32 %v2104, 0.0
    %v2111 = vpack.c.bf16 %v2107, %v2107
    %v2112 = vpack.c.bf16 %v2108, %v2108
    %v2113 = vpack.c.bf16 %v2109, %v2109
    %v2114 = vpack.c.bf16 %v2110, %v2110
    %v2115 = vld [vmem:[#allocation5] sm:$0xff]
    %v2116 = vld [vmem:[#allocation5 + $0x8] sm:$0xff]
    %v2117 = vld [vmem:[#allocation5 + $0x10] sm:$0xff]
    %v2118 = vld [vmem:[#allocation5 + $0x18] sm:$0xff]
    %v2119 = vld [vmem:[#allocation5 + $0x20] sm:$0xff]
    %v2120 = vld [vmem:[#allocation5 + $0x28] sm:$0xff]
    %v2121 = vld [vmem:[#allocation5 + $0x30] sm:$0xff]
    %v2122 = vld [vmem:[#allocation5 + $0x38] sm:$0xff]
    %v2123 = vld [vmem:[#allocation5 + $0x40] sm:$0xff]
    %v2124 = vld [vmem:[#allocation5 + $0x48] sm:$0xff]
    %v2125 = vld [vmem:[#allocation5 + $0x50] sm:$0xff]
    %v2126 = vld [vmem:[#allocation5 + $0x58] sm:$0xff]
    %v2127 = vld [vmem:[#allocation5 + $0x60] sm:$0xff]
    %v2128 = vld [vmem:[#allocation5 + $0x68] sm:$0xff]
    %v2129 = vld [vmem:[#allocation5 + $0x70] sm:$0xff]
    %v2130 = vld [vmem:[#allocation5 + $0x78] sm:$0xff]
    %v2131 = vld [vmem:[#allocation5 + $0x80] sm:$0xff]
    %v2132 = vld [vmem:[#allocation5 + $0x88] sm:$0xff]
    %v2133 = vld [vmem:[#allocation5 + $0x90] sm:$0xff]
    %v2134 = vld [vmem:[#allocation5 + $0x98] sm:$0xff]
    %v2135 = vld [vmem:[#allocation5 + $0xa0] sm:$0xff]
    %v2136 = vld [vmem:[#allocation5 + $0xa8] sm:$0xff]
    %v2137 = vld [vmem:[#allocation5 + $0xb0] sm:$0xff]
    %v2138 = vld [vmem:[#allocation5 + $0xb8] sm:$0xff]
    %v2139 = vld [vmem:[#allocation5 + $0xc0] sm:$0xff]
    %v2140 = vld [vmem:[#allocation5 + $0xc8] sm:$0xff]
    %v2141 = vld [vmem:[#allocation5 + $0xd0] sm:$0xff]
    %v2142 = vld [vmem:[#allocation5 + $0xd8] sm:$0xff]
    %v2143 = vld [vmem:[#allocation5 + $0xe0] sm:$0xff]
    %v2144 = vld [vmem:[#allocation5 + $0xe8] sm:$0xff]
    %v2145 = vld [vmem:[#allocation5 + $0xf0] sm:$0xff]
    %v2146 = vld [vmem:[#allocation5 + $0xf8] sm:$0xff]
    %v2147 = vld [vmem:[#allocation5 + $0x100] sm:$0xff]
    %v2148 = vld [vmem:[#allocation5 + $0x108] sm:$0xff]
    %v2149 = vld [vmem:[#allocation5 + $0x110] sm:$0xff]
    %v2150 = vld [vmem:[#allocation5 + $0x118] sm:$0xff]
    %v2151 = vld [vmem:[#allocation5 + $0x120] sm:$0xff]
    %v2152 = vld [vmem:[#allocation5 + $0x128] sm:$0xff]
    %v2153 = vld [vmem:[#allocation5 + $0x130] sm:$0xff]
    %v2154 = vld [vmem:[#allocation5 + $0x138] sm:$0xff]
    %v2155 = vld [vmem:[#allocation5 + $0x140] sm:$0xff]
    %v2156 = vld [vmem:[#allocation5 + $0x148] sm:$0xff]
    %v2157 = vld [vmem:[#allocation5 + $0x150] sm:$0xff]
    %v2158 = vld [vmem:[#allocation5 + $0x158] sm:$0xff]
    %v2159 = vld [vmem:[#allocation5 + $0x160] sm:$0xff]
    %v2160 = vld [vmem:[#allocation5 + $0x168] sm:$0xff]
    %v2161 = vld [vmem:[#allocation5 + $0x170] sm:$0xff]
    %v2162 = vld [vmem:[#allocation5 + $0x178] sm:$0xff]
    %v2163 = vld [vmem:[#allocation5 + $0x180] sm:$0xff]
    %v2164 = vld [vmem:[#allocation5 + $0x188] sm:$0xff]
    %v2165 = vld [vmem:[#allocation5 + $0x190] sm:$0xff]
    %v2166 = vld [vmem:[#allocation5 + $0x198] sm:$0xff]
    %v2167 = vld [vmem:[#allocation5 + $0x1a0] sm:$0xff]
    %v2168 = vld [vmem:[#allocation5 + $0x1a8] sm:$0xff]
    %v2169 = vld [vmem:[#allocation5 + $0x1b0] sm:$0xff]
    %v2170 = vld [vmem:[#allocation5 + $0x1b8] sm:$0xff]
    %v2171 = vld [vmem:[#allocation5 + $0x1c0] sm:$0xff]
    %v2172 = vld [vmem:[#allocation5 + $0x1c8] sm:$0xff]
    %v2173 = vld [vmem:[#allocation5 + $0x1d0] sm:$0xff]
    %v2174 = vld [vmem:[#allocation5 + $0x1d8] sm:$0xff]
    %v2175 = vld [vmem:[#allocation5 + $0x1e0] sm:$0xff]
    %v2176 = vld [vmem:[#allocation5 + $0x1e8] sm:$0xff]
    %v2177 = vld [vmem:[#allocation5 + $0x1f0] sm:$0xff]
    %v2178 = vld [vmem:[#allocation5 + $0x1f8] sm:$0xff]
    %v2179 = vld [vmem:[#allocation5 + $0x200] sm:$0xff]
    %v2180 = vld [vmem:[#allocation5 + $0x208] sm:$0xff]
    %v2181 = vld [vmem:[#allocation5 + $0x210] sm:$0xff]
    %v2182 = vld [vmem:[#allocation5 + $0x218] sm:$0xff]
    %v2183 = vld [vmem:[#allocation5 + $0x220] sm:$0xff]
    %v2184 = vld [vmem:[#allocation5 + $0x228] sm:$0xff]
    %v2185 = vld [vmem:[#allocation5 + $0x230] sm:$0xff]
    %v2186 = vld [vmem:[#allocation5 + $0x238] sm:$0xff]
    %v2187 = vld [vmem:[#allocation5 + $0x240] sm:$0xff]
    %v2188 = vld [vmem:[#allocation5 + $0x248] sm:$0xff]
    %v2189 = vld [vmem:[#allocation5 + $0x250] sm:$0xff]
    %v2190 = vld [vmem:[#allocation5 + $0x258] sm:$0xff]
    %v2191 = vld [vmem:[#allocation5 + $0x260] sm:$0xff]
    %v2192 = vld [vmem:[#allocation5 + $0x268] sm:$0xff]
    %v2193 = vld [vmem:[#allocation5 + $0x270] sm:$0xff]
    %v2194 = vld [vmem:[#allocation5 + $0x278] sm:$0xff]
    %v2195 = vld [vmem:[#allocation5 + $0x280] sm:$0xff]
    %v2196 = vld [vmem:[#allocation5 + $0x288] sm:$0xff]
    %v2197 = vld [vmem:[#allocation5 + $0x290] sm:$0xff]
    %v2198 = vld [vmem:[#allocation5 + $0x298] sm:$0xff]
    %v2199 = vld [vmem:[#allocation5 + $0x2a0] sm:$0xff]
    %v2200 = vld [vmem:[#allocation5 + $0x2a8] sm:$0xff]
    %v2201 = vld [vmem:[#allocation5 + $0x2b0] sm:$0xff]
    %v2202 = vld [vmem:[#allocation5 + $0x2b8] sm:$0xff]
    %v2203 = vld [vmem:[#allocation5 + $0x2c0] sm:$0xff]
    %v2204 = vld [vmem:[#allocation5 + $0x2c8] sm:$0xff]
    %v2205 = vld [vmem:[#allocation5 + $0x2d0] sm:$0xff]
    %v2206 = vld [vmem:[#allocation5 + $0x2d8] sm:$0xff]
    %v2207 = vld [vmem:[#allocation5 + $0x2e0] sm:$0xff]
    %v2208 = vld [vmem:[#allocation5 + $0x2e8] sm:$0xff]
    %v2209 = vld [vmem:[#allocation5 + $0x2f0] sm:$0xff]
    %v2210 = vld [vmem:[#allocation5 + $0x2f8] sm:$0xff]
    %v2211 = vld [vmem:[#allocation5 + $0x300] sm:$0xff]
    %v2212 = vld [vmem:[#allocation5 + $0x308] sm:$0xff]
    %v2213 = vld [vmem:[#allocation5 + $0x310] sm:$0xff]
    %v2214 = vld [vmem:[#allocation5 + $0x318] sm:$0xff]
    %v2215 = vld [vmem:[#allocation5 + $0x320] sm:$0xff]
    %v2216 = vld [vmem:[#allocation5 + $0x328] sm:$0xff]
    %v2217 = vld [vmem:[#allocation5 + $0x330] sm:$0xff]
    %v2218 = vld [vmem:[#allocation5 + $0x338] sm:$0xff]
    %v2219 = vld [vmem:[#allocation5 + $0x340] sm:$0xff]
    %v2220 = vld [vmem:[#allocation5 + $0x348] sm:$0xff]
    %v2221 = vld [vmem:[#allocation5 + $0x350] sm:$0xff]
    %v2222 = vld [vmem:[#allocation5 + $0x358] sm:$0xff]
    %v2223 = vld [vmem:[#allocation5 + $0x360] sm:$0xff]
    %v2224 = vld [vmem:[#allocation5 + $0x368] sm:$0xff]
    %v2225 = vld [vmem:[#allocation5 + $0x370] sm:$0xff]
    %v2226 = vld [vmem:[#allocation5 + $0x378] sm:$0xff]
    %v2227 = vld [vmem:[#allocation5 + $0x380] sm:$0xff]
    %v2228 = vld [vmem:[#allocation5 + $0x388] sm:$0xff]
    %v2229 = vld [vmem:[#allocation5 + $0x390] sm:$0xff]
    %v2230 = vld [vmem:[#allocation5 + $0x398] sm:$0xff]
    %v2231 = vld [vmem:[#allocation5 + $0x3a0] sm:$0xff]
    %v2232 = vld [vmem:[#allocation5 + $0x3a8] sm:$0xff]
    %v2233 = vld [vmem:[#allocation5 + $0x3b0] sm:$0xff]
    %v2234 = vld [vmem:[#allocation5 + $0x3b8] sm:$0xff]
    %v2235 = vld [vmem:[#allocation5 + $0x3c0] sm:$0xff]
    %v2236 = vld [vmem:[#allocation5 + $0x3c8] sm:$0xff]
    %v2237 = vld [vmem:[#allocation5 + $0x3d0] sm:$0xff]
    %v2238 = vld [vmem:[#allocation5 + $0x3d8] sm:$0xff]
    %v2239 = vld [vmem:[#allocation5 + $0x3e0] sm:$0xff]
    %v2240 = vld [vmem:[#allocation5 + $0x3e8] sm:$0xff]
    %v2241 = vld [vmem:[#allocation5 + $0x3f0] sm:$0xff]
    %v2242 = vld [vmem:[#allocation5 + $0x3f8] sm:$0xff]
    %v2243 = vld [vmem:[%s9] sm:$0xf]
    %v2245 = vperm.slane %v2243, 0
    %v2246 = vperm.slane %v2243, 1
    %v2247 = vperm.slane %v2243, 2
    %v2248 = vperm.slane %v2243, 3
    %v2381 = vunpack.c.l.b16 %v2115
    %v2382 = vunpack.c.h.b16 %v2115
    %v2383 = vunpack.c.l.b16 %v2116
    %v2384 = vunpack.c.h.b16 %v2116
    %v2385 = vunpack.c.l.b16 %v2117
    %v2386 = vunpack.c.h.b16 %v2117
    %v2387 = vunpack.c.l.b16 %v2118
    %v2388 = vunpack.c.h.b16 %v2118
    %v2389 = vunpack.c.l.b16 %v2119
    %v2390 = vunpack.c.h.b16 %v2119
    %v2391 = vunpack.c.l.b16 %v2120
    %v2392 = vunpack.c.h.b16 %v2120
    %v2393 = vunpack.c.l.b16 %v2121
    %v2394 = vunpack.c.h.b16 %v2121
    %v2395 = vunpack.c.l.b16 %v2122
    %v2396 = vunpack.c.h.b16 %v2122
    %v2397 = vunpack.c.l.b16 %v2123
    %v2398 = vunpack.c.h.b16 %v2123
    %v2399 = vunpack.c.l.b16 %v2124
    %v2400 = vunpack.c.h.b16 %v2124
    %v2401 = vunpack.c.l.b16 %v2125
    %v2402 = vunpack.c.h.b16 %v2125
    %v2403 = vunpack.c.l.b16 %v2126
    %v2404 = vunpack.c.h.b16 %v2126
    %v2405 = vunpack.c.l.b16 %v2127
    %v2406 = vunpack.c.h.b16 %v2127
    %v2407 = vunpack.c.l.b16 %v2128
    %v2408 = vunpack.c.h.b16 %v2128
    %v2409 = vunpack.c.l.b16 %v2129
    %v2410 = vunpack.c.h.b16 %v2129
    %v2411 = vunpack.c.l.b16 %v2130
    %v2412 = vunpack.c.h.b16 %v2130
    %v2413 = vunpack.c.l.b16 %v2131
    %v2414 = vunpack.c.h.b16 %v2131
    %v2415 = vunpack.c.l.b16 %v2132
    %v2416 = vunpack.c.h.b16 %v2132
    %v2417 = vunpack.c.l.b16 %v2133
    %v2418 = vunpack.c.h.b16 %v2133
    %v2419 = vunpack.c.l.b16 %v2134
    %v2420 = vunpack.c.h.b16 %v2134
    %v2421 = vunpack.c.l.b16 %v2135
    %v2422 = vunpack.c.h.b16 %v2135
    %v2423 = vunpack.c.l.b16 %v2136
    %v2424 = vunpack.c.h.b16 %v2136
    %v2425 = vunpack.c.l.b16 %v2137
    %v2426 = vunpack.c.h.b16 %v2137
    %v2427 = vunpack.c.l.b16 %v2138
    %v2428 = vunpack.c.h.b16 %v2138
    %v2429 = vunpack.c.l.b16 %v2139
    %v2430 = vunpack.c.h.b16 %v2139
    %v2431 = vunpack.c.l.b16 %v2140
    %v2432 = vunpack.c.h.b16 %v2140
    %v2433 = vunpack.c.l.b16 %v2141
    %v2434 = vunpack.c.h.b16 %v2141
    %v2435 = vunpack.c.l.b16 %v2142
    %v2436 = vunpack.c.h.b16 %v2142
    %v2437 = vunpack.c.l.b16 %v2143
    %v2438 = vunpack.c.h.b16 %v2143
    %v2439 = vunpack.c.l.b16 %v2144
    %v2440 = vunpack.c.h.b16 %v2144
    %v2441 = vunpack.c.l.b16 %v2145
    %v2442 = vunpack.c.h.b16 %v2145
    %v2443 = vunpack.c.l.b16 %v2146
    %v2444 = vunpack.c.h.b16 %v2146
    %v2445 = vunpack.c.l.b16 %v2147
    %v2446 = vunpack.c.h.b16 %v2147
    %v2447 = vunpack.c.l.b16 %v2148
    %v2448 = vunpack.c.h.b16 %v2148
    %v2449 = vunpack.c.l.b16 %v2149
    %v2450 = vunpack.c.h.b16 %v2149
    %v2451 = vunpack.c.l.b16 %v2150
    %v2452 = vunpack.c.h.b16 %v2150
    %v2453 = vunpack.c.l.b16 %v2151
    %v2454 = vunpack.c.h.b16 %v2151
    %v2455 = vunpack.c.l.b16 %v2152
    %v2456 = vunpack.c.h.b16 %v2152
    %v2457 = vunpack.c.l.b16 %v2153
    %v2458 = vunpack.c.h.b16 %v2153
    %v2459 = vunpack.c.l.b16 %v2154
    %v2460 = vunpack.c.h.b16 %v2154
    %v2461 = vunpack.c.l.b16 %v2155
    %v2462 = vunpack.c.h.b16 %v2155
    %v2463 = vunpack.c.l.b16 %v2156
    %v2464 = vunpack.c.h.b16 %v2156
    %v2465 = vunpack.c.l.b16 %v2157
    %v2466 = vunpack.c.h.b16 %v2157
    %v2467 = vunpack.c.l.b16 %v2158
    %v2468 = vunpack.c.h.b16 %v2158
    %v2469 = vunpack.c.l.b16 %v2159
    %v2470 = vunpack.c.h.b16 %v2159
    %v2471 = vunpack.c.l.b16 %v2160
    %v2472 = vunpack.c.h.b16 %v2160
    %v2473 = vunpack.c.l.b16 %v2161
    %v2474 = vunpack.c.h.b16 %v2161
    %v2475 = vunpack.c.l.b16 %v2162
    %v2476 = vunpack.c.h.b16 %v2162
    %v2477 = vunpack.c.l.b16 %v2163
    %v2478 = vunpack.c.h.b16 %v2163
    %v2479 = vunpack.c.l.b16 %v2164
    %v2480 = vunpack.c.h.b16 %v2164
    %v2481 = vunpack.c.l.b16 %v2165
    %v2482 = vunpack.c.h.b16 %v2165
    %v2483 = vunpack.c.l.b16 %v2166
    %v2484 = vunpack.c.h.b16 %v2166
    %v2485 = vunpack.c.l.b16 %v2167
    %v2486 = vunpack.c.h.b16 %v2167
    %v2487 = vunpack.c.l.b16 %v2168
    %v2488 = vunpack.c.h.b16 %v2168
    %v2489 = vunpack.c.l.b16 %v2169
    %v2490 = vunpack.c.h.b16 %v2169
    %v2491 = vunpack.c.l.b16 %v2170
    %v2492 = vunpack.c.h.b16 %v2170
    %v2493 = vunpack.c.l.b16 %v2171
    %v2494 = vunpack.c.h.b16 %v2171
    %v2495 = vunpack.c.l.b16 %v2172
    %v2496 = vunpack.c.h.b16 %v2172
    %v2497 = vunpack.c.l.b16 %v2173
    %v2498 = vunpack.c.h.b16 %v2173
    %v2499 = vunpack.c.l.b16 %v2174
    %v2500 = vunpack.c.h.b16 %v2174
    %v2501 = vunpack.c.l.b16 %v2175
    %v2502 = vunpack.c.h.b16 %v2175
    %v2503 = vunpack.c.l.b16 %v2176
    %v2504 = vunpack.c.h.b16 %v2176
    %v2505 = vunpack.c.l.b16 %v2177
    %v2506 = vunpack.c.h.b16 %v2177
    %v2507 = vunpack.c.l.b16 %v2178
    %v2508 = vunpack.c.h.b16 %v2178
    %v2509 = vunpack.c.l.b16 %v2179
    %v2510 = vunpack.c.h.b16 %v2179
    %v2511 = vunpack.c.l.b16 %v2180
    %v2512 = vunpack.c.h.b16 %v2180
    %v2513 = vunpack.c.l.b16 %v2181
    %v2514 = vunpack.c.h.b16 %v2181
    %v2515 = vunpack.c.l.b16 %v2182
    %v2516 = vunpack.c.h.b16 %v2182
    %v2517 = vunpack.c.l.b16 %v2183
    %v2518 = vunpack.c.h.b16 %v2183
    %v2519 = vunpack.c.l.b16 %v2184
    %v2520 = vunpack.c.h.b16 %v2184
    %v2521 = vunpack.c.l.b16 %v2185
    %v2522 = vunpack.c.h.b16 %v2185
    %v2523 = vunpack.c.l.b16 %v2186
    %v2524 = vunpack.c.h.b16 %v2186
    %v2525 = vunpack.c.l.b16 %v2187
    %v2526 = vunpack.c.h.b16 %v2187
    %v2527 = vunpack.c.l.b16 %v2188
    %v2528 = vunpack.c.h.b16 %v2188
    %v2529 = vunpack.c.l.b16 %v2189
    %v2530 = vunpack.c.h.b16 %v2189
    %v2531 = vunpack.c.l.b16 %v2190
    %v2532 = vunpack.c.h.b16 %v2190
    %v2533 = vunpack.c.l.b16 %v2191
    %v2534 = vunpack.c.h.b16 %v2191
    %v2535 = vunpack.c.l.b16 %v2192
    %v2536 = vunpack.c.h.b16 %v2192
    %v2537 = vunpack.c.l.b16 %v2193
    %v2538 = vunpack.c.h.b16 %v2193
    %v2539 = vunpack.c.l.b16 %v2194
    %v2540 = vunpack.c.h.b16 %v2194
    %v2541 = vunpack.c.l.b16 %v2195
    %v2542 = vunpack.c.h.b16 %v2195
    %v2543 = vunpack.c.l.b16 %v2196
    %v2544 = vunpack.c.h.b16 %v2196
    %v2545 = vunpack.c.l.b16 %v2197
    %v2546 = vunpack.c.h.b16 %v2197
    %v2547 = vunpack.c.l.b16 %v2198
    %v2548 = vunpack.c.h.b16 %v2198
    %v2549 = vunpack.c.l.b16 %v2199
    %v2550 = vunpack.c.h.b16 %v2199
    %v2551 = vunpack.c.l.b16 %v2200
    %v2552 = vunpack.c.h.b16 %v2200
    %v2553 = vunpack.c.l.b16 %v2201
    %v2554 = vunpack.c.h.b16 %v2201
    %v2555 = vunpack.c.l.b16 %v2202
    %v2556 = vunpack.c.h.b16 %v2202
    %v2557 = vunpack.c.l.b16 %v2203
    %v2558 = vunpack.c.h.b16 %v2203
    %v2559 = vunpack.c.l.b16 %v2204
    %v2560 = vunpack.c.h.b16 %v2204
    %v2561 = vunpack.c.l.b16 %v2205
    %v2562 = vunpack.c.h.b16 %v2205
    %v2563 = vunpack.c.l.b16 %v2206
    %v2564 = vunpack.c.h.b16 %v2206
    %v2565 = vunpack.c.l.b16 %v2207
    %v2566 = vunpack.c.h.b16 %v2207
    %v2567 = vunpack.c.l.b16 %v2208
    %v2568 = vunpack.c.h.b16 %v2208
    %v2569 = vunpack.c.l.b16 %v2209
    %v2570 = vunpack.c.h.b16 %v2209
    %v2571 = vunpack.c.l.b16 %v2210
    %v2572 = vunpack.c.h.b16 %v2210
    %v2573 = vunpack.c.l.b16 %v2211
    %v2574 = vunpack.c.h.b16 %v2211
    %v2575 = vunpack.c.l.b16 %v2212
    %v2576 = vunpack.c.h.b16 %v2212
    %v2577 = vunpack.c.l.b16 %v2213
    %v2578 = vunpack.c.h.b16 %v2213
    %v2579 = vunpack.c.l.b16 %v2214
    %v2580 = vunpack.c.h.b16 %v2214
    %v2581 = vunpack.c.l.b16 %v2215
    %v2582 = vunpack.c.h.b16 %v2215
    %v2583 = vunpack.c.l.b16 %v2216
    %v2584 = vunpack.c.h.b16 %v2216
    %v2585 = vunpack.c.l.b16 %v2217
    %v2586 = vunpack.c.h.b16 %v2217
    %v2587 = vunpack.c.l.b16 %v2218
    %v2588 = vunpack.c.h.b16 %v2218
    %v2589 = vunpack.c.l.b16 %v2219
    %v2590 = vunpack.c.h.b16 %v2219
    %v2591 = vunpack.c.l.b16 %v2220
    %v2592 = vunpack.c.h.b16 %v2220
    %v2593 = vunpack.c.l.b16 %v2221
    %v2594 = vunpack.c.h.b16 %v2221
    %v2595 = vunpack.c.l.b16 %v2222
    %v2596 = vunpack.c.h.b16 %v2222
    %v2597 = vunpack.c.l.b16 %v2223
    %v2598 = vunpack.c.h.b16 %v2223
    %v2599 = vunpack.c.l.b16 %v2224
    %v2600 = vunpack.c.h.b16 %v2224
    %v2601 = vunpack.c.l.b16 %v2225
    %v2602 = vunpack.c.h.b16 %v2225
    %v2603 = vunpack.c.l.b16 %v2226
    %v2604 = vunpack.c.h.b16 %v2226
    %v2605 = vunpack.c.l.b16 %v2227
    %v2606 = vunpack.c.h.b16 %v2227
    %v2607 = vunpack.c.l.b16 %v2228
    %v2608 = vunpack.c.h.b16 %v2228
    %v2609 = vunpack.c.l.b16 %v2229
    %v2610 = vunpack.c.h.b16 %v2229
    %v2611 = vunpack.c.l.b16 %v2230
    %v2612 = vunpack.c.h.b16 %v2230
    %v2613 = vunpack.c.l.b16 %v2231
    %v2614 = vunpack.c.h.b16 %v2231
    %v2615 = vunpack.c.l.b16 %v2232
    %v2616 = vunpack.c.h.b16 %v2232
    %v2617 = vunpack.c.l.b16 %v2233
    %v2618 = vunpack.c.h.b16 %v2233
    %v2619 = vunpack.c.l.b16 %v2234
    %v2620 = vunpack.c.h.b16 %v2234
    %v2621 = vunpack.c.l.b16 %v2235
    %v2622 = vunpack.c.h.b16 %v2235
    %v2623 = vunpack.c.l.b16 %v2236
    %v2624 = vunpack.c.h.b16 %v2236
    %v2625 = vunpack.c.l.b16 %v2237
    %v2626 = vunpack.c.h.b16 %v2237
    %v2627 = vunpack.c.l.b16 %v2238
    %v2628 = vunpack.c.h.b16 %v2238
    %v2629 = vunpack.c.l.b16 %v2239
    %v2630 = vunpack.c.h.b16 %v2239
    %v2631 = vunpack.c.l.b16 %v2240
    %v2632 = vunpack.c.h.b16 %v2240
    %v2633 = vunpack.c.l.b16 %v2241
    %v2634 = vunpack.c.h.b16 %v2241
    %v2635 = vunpack.c.l.b16 %v2242
    %v2636 = vunpack.c.h.b16 %v2242
    %v2637 = vpack.c.b16 %v2385, %v2381
    %v2638 = vpack.c.b16 %v2386, %v2382
    %v2639 = vpack.c.b16 %v2387, %v2383
    %v2640 = vpack.c.b16 %v2388, %v2384
    %v2641 = vpack.c.b16 %v2393, %v2389
    %v2642 = vpack.c.b16 %v2394, %v2390
    %v2643 = vpack.c.b16 %v2395, %v2391
    %v2644 = vpack.c.b16 %v2396, %v2392
    %v2645 = vpack.c.b16 %v2401, %v2397
    %v2646 = vpack.c.b16 %v2402, %v2398
    %v2647 = vpack.c.b16 %v2403, %v2399
    %v2648 = vpack.c.b16 %v2404, %v2400
    %v2649 = vpack.c.b16 %v2409, %v2405
    %v2650 = vpack.c.b16 %v2410, %v2406
    %v2651 = vpack.c.b16 %v2411, %v2407
    %v2652 = vpack.c.b16 %v2412, %v2408
    %v2653 = vpack.c.b16 %v2417, %v2413
    %v2654 = vpack.c.b16 %v2418, %v2414
    %v2655 = vpack.c.b16 %v2419, %v2415
    %v2656 = vpack.c.b16 %v2420, %v2416
    %v2657 = vpack.c.b16 %v2425, %v2421
    %v2658 = vpack.c.b16 %v2426, %v2422
    %v2659 = vpack.c.b16 %v2427, %v2423
    %v2660 = vpack.c.b16 %v2428, %v2424
    %v2661 = vpack.c.b16 %v2433, %v2429
    %v2662 = vpack.c.b16 %v2434, %v2430
    %v2663 = vpack.c.b16 %v2435, %v2431
    %v2664 = vpack.c.b16 %v2436, %v2432
    %v2665 = vpack.c.b16 %v2441, %v2437
    %v2666 = vpack.c.b16 %v2442, %v2438
    %v2667 = vpack.c.b16 %v2443, %v2439
    %v2668 = vpack.c.b16 %v2444, %v2440
    %v2669 = vpack.c.b16 %v2449, %v2445
    %v2670 = vpack.c.b16 %v2450, %v2446
    %v2671 = vpack.c.b16 %v2451, %v2447
    %v2672 = vpack.c.b16 %v2452, %v2448
    %v2673 = vpack.c.b16 %v2457, %v2453
    %v2674 = vpack.c.b16 %v2458, %v2454
    %v2675 = vpack.c.b16 %v2459, %v2455
    %v2676 = vpack.c.b16 %v2460, %v2456
    %v2677 = vpack.c.b16 %v2465, %v2461
    %v2678 = vpack.c.b16 %v2466, %v2462
    %v2679 = vpack.c.b16 %v2467, %v2463
    %v2680 = vpack.c.b16 %v2468, %v2464
    %v2681 = vpack.c.b16 %v2473, %v2469
    %v2682 = vpack.c.b16 %v2474, %v2470
    %v2683 = vpack.c.b16 %v2475, %v2471
    %v2684 = vpack.c.b16 %v2476, %v2472
    %v2685 = vpack.c.b16 %v2481, %v2477
    %v2686 = vpack.c.b16 %v2482, %v2478
    %v2687 = vpack.c.b16 %v2483, %v2479
    %v2688 = vpack.c.b16 %v2484, %v2480
    %v2689 = vpack.c.b16 %v2489, %v2485
    %v2690 = vpack.c.b16 %v2490, %v2486
    %v2691 = vpack.c.b16 %v2491, %v2487
    %v2692 = vpack.c.b16 %v2492, %v2488
    %v2693 = vpack.c.b16 %v2497, %v2493
    %v2694 = vpack.c.b16 %v2498, %v2494
    %v2695 = vpack.c.b16 %v2499, %v2495
    %v2696 = vpack.c.b16 %v2500, %v2496
    %v2697 = vpack.c.b16 %v2505, %v2501
    %v2698 = vpack.c.b16 %v2506, %v2502
    %v2699 = vpack.c.b16 %v2507, %v2503
    %v2700 = vpack.c.b16 %v2508, %v2504
    %v2701 = vpack.c.b16 %v2513, %v2509
    %v2702 = vpack.c.b16 %v2514, %v2510
    %v2703 = vpack.c.b16 %v2515, %v2511
    %v2704 = vpack.c.b16 %v2516, %v2512
    %v2705 = vpack.c.b16 %v2521, %v2517
    %v2706 = vpack.c.b16 %v2522, %v2518
    %v2707 = vpack.c.b16 %v2523, %v2519
    %v2708 = vpack.c.b16 %v2524, %v2520
    %v2709 = vpack.c.b16 %v2529, %v2525
    %v2710 = vpack.c.b16 %v2530, %v2526
    %v2711 = vpack.c.b16 %v2531, %v2527
    %v2712 = vpack.c.b16 %v2532, %v2528
    %v2713 = vpack.c.b16 %v2537, %v2533
    %v2714 = vpack.c.b16 %v2538, %v2534
    %v2715 = vpack.c.b16 %v2539, %v2535
    %v2716 = vpack.c.b16 %v2540, %v2536
    %v2717 = vpack.c.b16 %v2545, %v2541
    %v2718 = vpack.c.b16 %v2546, %v2542
    %v2719 = vpack.c.b16 %v2547, %v2543
    %v2720 = vpack.c.b16 %v2548, %v2544
    %v2721 = vpack.c.b16 %v2553, %v2549
    %v2722 = vpack.c.b16 %v2554, %v2550
    %v2723 = vpack.c.b16 %v2555, %v2551
    %v2724 = vpack.c.b16 %v2556, %v2552
    %v2725 = vpack.c.b16 %v2561, %v2557
    %v2726 = vpack.c.b16 %v2562, %v2558
    %v2727 = vpack.c.b16 %v2563, %v2559
    %v2728 = vpack.c.b16 %v2564, %v2560
    %v2729 = vpack.c.b16 %v2569, %v2565
    %v2730 = vpack.c.b16 %v2570, %v2566
    %v2731 = vpack.c.b16 %v2571, %v2567
    %v2732 = vpack.c.b16 %v2572, %v2568
    %v2733 = vpack.c.b16 %v2577, %v2573
    %v2734 = vpack.c.b16 %v2578, %v2574
    %v2735 = vpack.c.b16 %v2579, %v2575
    %v2736 = vpack.c.b16 %v2580, %v2576
    %v2737 = vpack.c.b16 %v2585, %v2581
    %v2738 = vpack.c.b16 %v2586, %v2582
    %v2739 = vpack.c.b16 %v2587, %v2583
    %v2740 = vpack.c.b16 %v2588, %v2584
    %v2741 = vpack.c.b16 %v2593, %v2589
    %v2742 = vpack.c.b16 %v2594, %v2590
    %v2743 = vpack.c.b16 %v2595, %v2591
    %v2744 = vpack.c.b16 %v2596, %v2592
    %v2745 = vpack.c.b16 %v2601, %v2597
    %v2746 = vpack.c.b16 %v2602, %v2598
    %v2747 = vpack.c.b16 %v2603, %v2599
    %v2748 = vpack.c.b16 %v2604, %v2600
    %v2749 = vpack.c.b16 %v2609, %v2605
    %v2750 = vpack.c.b16 %v2610, %v2606
    %v2751 = vpack.c.b16 %v2611, %v2607
    %v2752 = vpack.c.b16 %v2612, %v2608
    %v2753 = vpack.c.b16 %v2617, %v2613
    %v2754 = vpack.c.b16 %v2618, %v2614
    %v2755 = vpack.c.b16 %v2619, %v2615
    %v2756 = vpack.c.b16 %v2620, %v2616
    %v2757 = vpack.c.b16 %v2625, %v2621
    %v2758 = vpack.c.b16 %v2626, %v2622
    %v2759 = vpack.c.b16 %v2627, %v2623
    %v2760 = vpack.c.b16 %v2628, %v2624
    %v2761 = vpack.c.b16 %v2633, %v2629
    %v2762 = vpack.c.b16 %v2634, %v2630
    %v2763 = vpack.c.b16 %v2635, %v2631
    %v2764 = vpack.c.b16 %v2636, %v2632
    %2893 = vmatpush.bf16.msra.mxu0 %v2665
    %2894 = vmatpush.bf16.msra.mxu0 %v2661
    %2895 = vmatpush.bf16.msra.mxu0 %v2657
    %2896 = vmatpush.bf16.msra.mxu0 %v2653
    %2897 = vmatpush.bf16.msra.mxu0 %v2649
    %2898 = vmatpush.bf16.msra.mxu0 %v2645
    %2899 = vmatpush.bf16.msra.mxu0 %v2641
    %2900 = vmatpush.bf16.msra.mxu0 %v2637
    %2901 = vmatmul.bf16.gmra.mxu0 %v2111
    %v2902 = vpop.f32.mrf.mxu0
    %v2903 = vadd.f32 %v2245, %v2902
    %v2904 = vpop.f32.mrf.mxu0
    %2905 = vdwg.mxu0
    %2906 = vmatpush.bf16.msra.mxu0 %v2697
    %2907 = vmatpush.bf16.msra.mxu0 %v2693
    %2908 = vmatpush.bf16.msra.mxu0 %v2689
    %2909 = vmatpush.bf16.msra.mxu0 %v2685
    %2910 = vmatpush.bf16.msra.mxu0 %v2681
    %2911 = vmatpush.bf16.msra.mxu0 %v2677
    %2912 = vmatpush.bf16.msra.mxu0 %v2673
    %2913 = vmatpush.bf16.msra.mxu0 %v2669
    %2914 = vmatmul.bf16.gmra.mxu0 %v2112
    %v2915 = vpop.f32.mrf.mxu0
    %v2916 = vadd.f32 %v2903, %v2915
    %v2917 = vpop.f32.mrf.mxu0
    %2918 = vdwg.mxu0
    %2919 = vmatpush.bf16.msra.mxu0 %v2729
    %2920 = vmatpush.bf16.msra.mxu0 %v2725
    %2921 = vmatpush.bf16.msra.mxu0 %v2721
    %2922 = vmatpush.bf16.msra.mxu0 %v2717
    %2923 = vmatpush.bf16.msra.mxu0 %v2713
    %2924 = vmatpush.bf16.msra.mxu0 %v2709
    %2925 = vmatpush.bf16.msra.mxu0 %v2705
    %2926 = vmatpush.bf16.msra.mxu0 %v2701
    %2927 = vmatmul.bf16.gmra.mxu0 %v2113
    %v2928 = vpop.f32.mrf.mxu0
    %v2929 = vadd.f32 %v2916, %v2928
    %v2930 = vpop.f32.mrf.mxu0
    %2931 = vdwg.mxu0
    %2932 = vmatpush.bf16.msra.mxu0 %v2761
    %2933 = vmatpush.bf16.msra.mxu0 %v2757
    %2934 = vmatpush.bf16.msra.mxu0 %v2753
    %2935 = vmatpush.bf16.msra.mxu0 %v2749
    %2936 = vmatpush.bf16.msra.mxu0 %v2745
    %2937 = vmatpush.bf16.msra.mxu0 %v2741
    %2938 = vmatpush.bf16.msra.mxu0 %v2737
    %2939 = vmatpush.bf16.msra.mxu0 %v2733
    %2940 = vmatmul.bf16.gmra.mxu0 %v2114
    %v2941 = vpop.f32.mrf.mxu0
    %v2942 = vadd.f32 %v2929, %v2941
    %v2943 = vpop.f32.mrf.mxu0
    %2944 = vdwg.mxu0
    %2945 = vmatpush.bf16.msra.mxu0 %v2666
    %2946 = vmatpush.bf16.msra.mxu0 %v2662
    %2947 = vmatpush.bf16.msra.mxu0 %v2658
    %2948 = vmatpush.bf16.msra.mxu0 %v2654
    %2949 = vmatpush.bf16.msra.mxu0 %v2650
    %2950 = vmatpush.bf16.msra.mxu0 %v2646
    %2951 = vmatpush.bf16.msra.mxu0 %v2642
    %2952 = vmatpush.bf16.msra.mxu0 %v2638
    %2953 = vmatmul.bf16.gmra.mxu0 %v2111
    %v2954 = vpop.f32.mrf.mxu0
    %v2955 = vadd.f32 %v2246, %v2954
    %v2956 = vpop.f32.mrf.mxu0
    %2957 = vdwg.mxu0
    %2958 = vmatpush.bf16.msra.mxu0 %v2698
    %2959 = vmatpush.bf16.msra.mxu0 %v2694
    %2960 = vmatpush.bf16.msra.mxu0 %v2690
    %2961 = vmatpush.bf16.msra.mxu0 %v2686
    %2962 = vmatpush.bf16.msra.mxu0 %v2682
    %2963 = vmatpush.bf16.msra.mxu0 %v2678
    %2964 = vmatpush.bf16.msra.mxu0 %v2674
    %2965 = vmatpush.bf16.msra.mxu0 %v2670
    %2966 = vmatmul.bf16.gmra.mxu0 %v2112
    %v2967 = vpop.f32.mrf.mxu0
    %v2968 = vadd.f32 %v2955, %v2967
    %v2969 = vpop.f32.mrf.mxu0
    %2970 = vdwg.mxu0
    %2971 = vmatpush.bf16.msra.mxu0 %v2730
    %2972 = vmatpush.bf16.msra.mxu0 %v2726
    %2973 = vmatpush.bf16.msra.mxu0 %v2722
    %2974 = vmatpush.bf16.msra.mxu0 %v2718
    %2975 = vmatpush.bf16.msra.mxu0 %v2714
    %2976 = vmatpush.bf16.msra.mxu0 %v2710
    %2977 = vmatpush.bf16.msra.mxu0 %v2706
    %2978 = vmatpush.bf16.msra.mxu0 %v2702
    %2979 = vmatmul.bf16.gmra.mxu0 %v2113
    %v2980 = vpop.f32.mrf.mxu0
    %v2981 = vadd.f32 %v2968, %v2980
    %v2982 = vpop.f32.mrf.mxu0
    %2983 = vdwg.mxu0
    %2984 = vmatpush.bf16.msra.mxu0 %v2762
    %2985 = vmatpush.bf16.msra.mxu0 %v2758
    %2986 = vmatpush.bf16.msra.mxu0 %v2754
    %2987 = vmatpush.bf16.msra.mxu0 %v2750
    %2988 = vmatpush.bf16.msra.mxu0 %v2746
    %2989 = vmatpush.bf16.msra.mxu0 %v2742
    %2990 = vmatpush.bf16.msra.mxu0 %v2738
    %2991 = vmatpush.bf16.msra.mxu0 %v2734
    %2992 = vmatmul.bf16.gmra.mxu0 %v2114
    %v2993 = vpop.f32.mrf.mxu0
    %v2994 = vadd.f32 %v2981, %v2993
    %v2995 = vpop.f32.mrf.mxu0
    %2996 = vdwg.mxu0
    %2997 = vmatpush.bf16.msra.mxu0 %v2667
    %2998 = vmatpush.bf16.msra.mxu0 %v2663
    %2999 = vmatpush.bf16.msra.mxu0 %v2659
    %3000 = vmatpush.bf16.msra.mxu0 %v2655
    %3001 = vmatpush.bf16.msra.mxu0 %v2651
    %3002 = vmatpush.bf16.msra.mxu0 %v2647
    %3003 = vmatpush.bf16.msra.mxu0 %v2643
    %3004 = vmatpush.bf16.msra.mxu0 %v2639
    %3005 = vmatmul.bf16.gmra.mxu0 %v2111
    %v3006 = vpop.f32.mrf.mxu0
    %v3007 = vadd.f32 %v2247, %v3006
    %v3008 = vpop.f32.mrf.mxu0
    %3009 = vdwg.mxu0
    %3010 = vmatpush.bf16.msra.mxu0 %v2699
    %3011 = vmatpush.bf16.msra.mxu0 %v2695
    %3012 = vmatpush.bf16.msra.mxu0 %v2691
    %3013 = vmatpush.bf16.msra.mxu0 %v2687
    %3014 = vmatpush.bf16.msra.mxu0 %v2683
    %3015 = vmatpush.bf16.msra.mxu0 %v2679
    %3016 = vmatpush.bf16.msra.mxu0 %v2675
    %3017 = vmatpush.bf16.msra.mxu0 %v2671
    %3018 = vmatmul.bf16.gmra.mxu0 %v2112
    %v3019 = vpop.f32.mrf.mxu0
    %v3020 = vadd.f32 %v3007, %v3019
    %v3021 = vpop.f32.mrf.mxu0
    %3022 = vdwg.mxu0
    %3023 = vmatpush.bf16.msra.mxu0 %v2731
    %3024 = vmatpush.bf16.msra.mxu0 %v2727
    %3025 = vmatpush.bf16.msra.mxu0 %v2723
    %3026 = vmatpush.bf16.msra.mxu0 %v2719
    %3027 = vmatpush.bf16.msra.mxu0 %v2715
    %3028 = vmatpush.bf16.msra.mxu0 %v2711
    %3029 = vmatpush.bf16.msra.mxu0 %v2707
    %3030 = vmatpush.bf16.msra.mxu0 %v2703
    %3031 = vmatmul.bf16.gmra.mxu0 %v2113
    %v3032 = vpop.f32.mrf.mxu0
    %v3033 = vadd.f32 %v3020, %v3032
    %v3034 = vpop.f32.mrf.mxu0
    %3035 = vdwg.mxu0
    %3036 = vmatpush.bf16.msra.mxu0 %v2763
    %3037 = vmatpush.bf16.msra.mxu0 %v2759
    %3038 = vmatpush.bf16.msra.mxu0 %v2755
    %3039 = vmatpush.bf16.msra.mxu0 %v2751
    %3040 = vmatpush.bf16.msra.mxu0 %v2747
    %3041 = vmatpush.bf16.msra.mxu0 %v2743
    %3042 = vmatpush.bf16.msra.mxu0 %v2739
    %3043 = vmatpush.bf16.msra.mxu0 %v2735
    %3044 = vmatmul.bf16.gmra.mxu0 %v2114
    %v3045 = vpop.f32.mrf.mxu0
    %v3046 = vadd.f32 %v3033, %v3045
    %v3047 = vpop.f32.mrf.mxu0
    %3048 = vdwg.mxu0
    %3049 = vmatpush.bf16.msra.mxu0 %v2668
    %3050 = vmatpush.bf16.msra.mxu0 %v2664
    %3051 = vmatpush.bf16.msra.mxu0 %v2660
    %3052 = vmatpush.bf16.msra.mxu0 %v2656
    %3053 = vmatpush.bf16.msra.mxu0 %v2652
    %3054 = vmatpush.bf16.msra.mxu0 %v2648
    %3055 = vmatpush.bf16.msra.mxu0 %v2644
    %3056 = vmatpush.bf16.msra.mxu0 %v2640
    %3057 = vmatmul.bf16.gmra.mxu0 %v2111
    %v3058 = vpop.f32.mrf.mxu0
    %v3059 = vadd.f32 %v2248, %v3058
    %v3060 = vpop.f32.mrf.mxu0
    %3061 = vdwg.mxu0
    %3062 = vmatpush.bf16.msra.mxu0 %v2700
    %3063 = vmatpush.bf16.msra.mxu0 %v2696
    %3064 = vmatpush.bf16.msra.mxu0 %v2692
    %3065 = vmatpush.bf16.msra.mxu0 %v2688
    %3066 = vmatpush.bf16.msra.mxu0 %v2684
    %3067 = vmatpush.bf16.msra.mxu0 %v2680
    %3068 = vmatpush.bf16.msra.mxu0 %v2676
    %3069 = vmatpush.bf16.msra.mxu0 %v2672
    %3070 = vmatmul.bf16.gmra.mxu0 %v2112
    %v3071 = vpop.f32.mrf.mxu0
    %v3072 = vadd.f32 %v3059, %v3071
    %v3073 = vpop.f32.mrf.mxu0
    %3074 = vdwg.mxu0
    %3075 = vmatpush.bf16.msra.mxu0 %v2732
    %3076 = vmatpush.bf16.msra.mxu0 %v2728
    %3077 = vmatpush.bf16.msra.mxu0 %v2724
    %3078 = vmatpush.bf16.msra.mxu0 %v2720
    %3079 = vmatpush.bf16.msra.mxu0 %v2716
    %3080 = vmatpush.bf16.msra.mxu0 %v2712
    %3081 = vmatpush.bf16.msra.mxu0 %v2708
    %3082 = vmatpush.bf16.msra.mxu0 %v2704
    %3083 = vmatmul.bf16.gmra.mxu0 %v2113
    %v3084 = vpop.f32.mrf.mxu0
    %v3085 = vadd.f32 %v3072, %v3084
    %v3086 = vpop.f32.mrf.mxu0
    %3087 = vdwg.mxu0
    %3088 = vmatpush.bf16.msra.mxu0 %v2764
    %3089 = vmatpush.bf16.msra.mxu0 %v2760
    %3090 = vmatpush.bf16.msra.mxu0 %v2756
    %3091 = vmatpush.bf16.msra.mxu0 %v2752
    %3092 = vmatpush.bf16.msra.mxu0 %v2748
    %3093 = vmatpush.bf16.msra.mxu0 %v2744
    %3094 = vmatpush.bf16.msra.mxu0 %v2740
    %3095 = vmatpush.bf16.msra.mxu0 %v2736
    %3096 = vmatmul.bf16.gmra.mxu0 %v2114
    %v3097 = vpop.f32.mrf.mxu0
    %v3098 = vadd.f32 %v3085, %v3097
    %v3099 = vpop.f32.mrf.mxu0
    %3100 = vdwg.mxu0
    %v3101 = vmax.f32 %v2942, 0.0
    %v3102 = vmax.f32 %v2994, 0.0
    %v3103 = vmax.f32 %v3046, 0.0
    %v3104 = vmax.f32 %v3098, 0.0
    %v3105 = vpack.c.bf16 %v3101, %v3101
    %v3106 = vpack.c.bf16 %v3102, %v3102
    %v3107 = vpack.c.bf16 %v3103, %v3103
    %v3108 = vpack.c.bf16 %v3104, %v3104
    %v3109 = vld [vmem:[#allocation7] sm:$0xff]
    %v3110 = vld [vmem:[#allocation7 + $0x8] sm:$0xff]
    %v3111 = vld [vmem:[#allocation7 + $0x10] sm:$0xff]
    %v3112 = vld [vmem:[#allocation7 + $0x18] sm:$0xff]
    %v3113 = vld [vmem:[#allocation7 + $0x20] sm:$0xff]
    %v3114 = vld [vmem:[#allocation7 + $0x28] sm:$0xff]
    %v3115 = vld [vmem:[#allocation7 + $0x30] sm:$0xff]
    %v3116 = vld [vmem:[#allocation7 + $0x38] sm:$0xff]
    %v3117 = vld [vmem:[#allocation7 + $0x40] sm:$0xff]
    %v3118 = vld [vmem:[#allocation7 + $0x48] sm:$0xff]
    %v3119 = vld [vmem:[#allocation7 + $0x50] sm:$0xff]
    %v3120 = vld [vmem:[#allocation7 + $0x58] sm:$0xff]
    %v3121 = vld [vmem:[#allocation7 + $0x60] sm:$0xff]
    %v3122 = vld [vmem:[#allocation7 + $0x68] sm:$0xff]
    %v3123 = vld [vmem:[#allocation7 + $0x70] sm:$0xff]
    %v3124 = vld [vmem:[#allocation7 + $0x78] sm:$0xff]
    %v3125 = vld [vmem:[#allocation7 + $0x80] sm:$0xff]
    %v3126 = vld [vmem:[#allocation7 + $0x88] sm:$0xff]
    %v3127 = vld [vmem:[#allocation7 + $0x90] sm:$0xff]
    %v3128 = vld [vmem:[#allocation7 + $0x98] sm:$0xff]
    %v3129 = vld [vmem:[#allocation7 + $0xa0] sm:$0xff]
    %v3130 = vld [vmem:[#allocation7 + $0xa8] sm:$0xff]
    %v3131 = vld [vmem:[#allocation7 + $0xb0] sm:$0xff]
    %v3132 = vld [vmem:[#allocation7 + $0xb8] sm:$0xff]
    %v3133 = vld [vmem:[#allocation7 + $0xc0] sm:$0xff]
    %v3134 = vld [vmem:[#allocation7 + $0xc8] sm:$0xff]
    %v3135 = vld [vmem:[#allocation7 + $0xd0] sm:$0xff]
    %v3136 = vld [vmem:[#allocation7 + $0xd8] sm:$0xff]
    %v3137 = vld [vmem:[#allocation7 + $0xe0] sm:$0xff]
    %v3138 = vld [vmem:[#allocation7 + $0xe8] sm:$0xff]
    %v3139 = vld [vmem:[#allocation7 + $0xf0] sm:$0xff]
    %v3140 = vld [vmem:[#allocation7 + $0xf8] sm:$0xff]
    %v3141 = vld [vmem:[#allocation7 + $0x100] sm:$0xff]
    %v3142 = vld [vmem:[#allocation7 + $0x108] sm:$0xff]
    %v3143 = vld [vmem:[#allocation7 + $0x110] sm:$0xff]
    %v3144 = vld [vmem:[#allocation7 + $0x118] sm:$0xff]
    %v3145 = vld [vmem:[#allocation7 + $0x120] sm:$0xff]
    %v3146 = vld [vmem:[#allocation7 + $0x128] sm:$0xff]
    %v3147 = vld [vmem:[#allocation7 + $0x130] sm:$0xff]
    %v3148 = vld [vmem:[#allocation7 + $0x138] sm:$0xff]
    %v3149 = vld [vmem:[#allocation7 + $0x140] sm:$0xff]
    %v3150 = vld [vmem:[#allocation7 + $0x148] sm:$0xff]
    %v3151 = vld [vmem:[#allocation7 + $0x150] sm:$0xff]
    %v3152 = vld [vmem:[#allocation7 + $0x158] sm:$0xff]
    %v3153 = vld [vmem:[#allocation7 + $0x160] sm:$0xff]
    %v3154 = vld [vmem:[#allocation7 + $0x168] sm:$0xff]
    %v3155 = vld [vmem:[#allocation7 + $0x170] sm:$0xff]
    %v3156 = vld [vmem:[#allocation7 + $0x178] sm:$0xff]
    %v3157 = vld [vmem:[#allocation7 + $0x180] sm:$0xff]
    %v3158 = vld [vmem:[#allocation7 + $0x188] sm:$0xff]
    %v3159 = vld [vmem:[#allocation7 + $0x190] sm:$0xff]
    %v3160 = vld [vmem:[#allocation7 + $0x198] sm:$0xff]
    %v3161 = vld [vmem:[#allocation7 + $0x1a0] sm:$0xff]
    %v3162 = vld [vmem:[#allocation7 + $0x1a8] sm:$0xff]
    %v3163 = vld [vmem:[#allocation7 + $0x1b0] sm:$0xff]
    %v3164 = vld [vmem:[#allocation7 + $0x1b8] sm:$0xff]
    %v3165 = vld [vmem:[#allocation7 + $0x1c0] sm:$0xff]
    %v3166 = vld [vmem:[#allocation7 + $0x1c8] sm:$0xff]
    %v3167 = vld [vmem:[#allocation7 + $0x1d0] sm:$0xff]
    %v3168 = vld [vmem:[#allocation7 + $0x1d8] sm:$0xff]
    %v3169 = vld [vmem:[#allocation7 + $0x1e0] sm:$0xff]
    %v3170 = vld [vmem:[#allocation7 + $0x1e8] sm:$0xff]
    %v3171 = vld [vmem:[#allocation7 + $0x1f0] sm:$0xff]
    %v3172 = vld [vmem:[#allocation7 + $0x1f8] sm:$0xff]
    %v3173 = vld [vmem:[%s10] sm:$0x3]
    %v3175 = vperm.slane %v3173, 0
    %v3176 = vperm.slane %v3173, 1
    %v3243 = vunpack.c.l.b16 %v3109
    %v3244 = vunpack.c.h.b16 %v3109
    %v3245 = vunpack.c.l.b16 %v3110
    %v3246 = vunpack.c.h.b16 %v3110
    %v3247 = vunpack.c.l.b16 %v3111
    %v3248 = vunpack.c.h.b16 %v3111
    %v3249 = vunpack.c.l.b16 %v3112
    %v3250 = vunpack.c.h.b16 %v3112
    %v3251 = vunpack.c.l.b16 %v3113
    %v3252 = vunpack.c.h.b16 %v3113
    %v3253 = vunpack.c.l.b16 %v3114
    %v3254 = vunpack.c.h.b16 %v3114
    %v3255 = vunpack.c.l.b16 %v3115
    %v3256 = vunpack.c.h.b16 %v3115
    %v3257 = vunpack.c.l.b16 %v3116
    %v3258 = vunpack.c.h.b16 %v3116
    %v3259 = vunpack.c.l.b16 %v3117
    %v3260 = vunpack.c.h.b16 %v3117
    %v3261 = vunpack.c.l.b16 %v3118
    %v3262 = vunpack.c.h.b16 %v3118
    %v3263 = vunpack.c.l.b16 %v3119
    %v3264 = vunpack.c.h.b16 %v3119
    %v3265 = vunpack.c.l.b16 %v3120
    %v3266 = vunpack.c.h.b16 %v3120
    %v3267 = vunpack.c.l.b16 %v3121
    %v3268 = vunpack.c.h.b16 %v3121
    %v3269 = vunpack.c.l.b16 %v3122
    %v3270 = vunpack.c.h.b16 %v3122
    %v3271 = vunpack.c.l.b16 %v3123
    %v3272 = vunpack.c.h.b16 %v3123
    %v3273 = vunpack.c.l.b16 %v3124
    %v3274 = vunpack.c.h.b16 %v3124
    %v3275 = vunpack.c.l.b16 %v3125
    %v3276 = vunpack.c.h.b16 %v3125
    %v3277 = vunpack.c.l.b16 %v3126
    %v3278 = vunpack.c.h.b16 %v3126
    %v3279 = vunpack.c.l.b16 %v3127
    %v3280 = vunpack.c.h.b16 %v3127
    %v3281 = vunpack.c.l.b16 %v3128
    %v3282 = vunpack.c.h.b16 %v3128
    %v3283 = vunpack.c.l.b16 %v3129
    %v3284 = vunpack.c.h.b16 %v3129
    %v3285 = vunpack.c.l.b16 %v3130
    %v3286 = vunpack.c.h.b16 %v3130
    %v3287 = vunpack.c.l.b16 %v3131
    %v3288 = vunpack.c.h.b16 %v3131
    %v3289 = vunpack.c.l.b16 %v3132
    %v3290 = vunpack.c.h.b16 %v3132
    %v3291 = vunpack.c.l.b16 %v3133
    %v3292 = vunpack.c.h.b16 %v3133
    %v3293 = vunpack.c.l.b16 %v3134
    %v3294 = vunpack.c.h.b16 %v3134
    %v3295 = vunpack.c.l.b16 %v3135
    %v3296 = vunpack.c.h.b16 %v3135
    %v3297 = vunpack.c.l.b16 %v3136
    %v3298 = vunpack.c.h.b16 %v3136
    %v3299 = vunpack.c.l.b16 %v3137
    %v3300 = vunpack.c.h.b16 %v3137
    %v3301 = vunpack.c.l.b16 %v3138
    %v3302 = vunpack.c.h.b16 %v3138
    %v3303 = vunpack.c.l.b16 %v3139
    %v3304 = vunpack.c.h.b16 %v3139
    %v3305 = vunpack.c.l.b16 %v3140
    %v3306 = vunpack.c.h.b16 %v3140
    %v3307 = vunpack.c.l.b16 %v3141
    %v3308 = vunpack.c.h.b16 %v3141
    %v3309 = vunpack.c.l.b16 %v3142
    %v3310 = vunpack.c.h.b16 %v3142
    %v3311 = vunpack.c.l.b16 %v3143
    %v3312 = vunpack.c.h.b16 %v3143
    %v3313 = vunpack.c.l.b16 %v3144
    %v3314 = vunpack.c.h.b16 %v3144
    %v3315 = vunpack.c.l.b16 %v3145
    %v3316 = vunpack.c.h.b16 %v3145
    %v3317 = vunpack.c.l.b16 %v3146
    %v3318 = vunpack.c.h.b16 %v3146
    %v3319 = vunpack.c.l.b16 %v3147
    %v3320 = vunpack.c.h.b16 %v3147
    %v3321 = vunpack.c.l.b16 %v3148
    %v3322 = vunpack.c.h.b16 %v3148
    %v3323 = vunpack.c.l.b16 %v3149
    %v3324 = vunpack.c.h.b16 %v3149
    %v3325 = vunpack.c.l.b16 %v3150
    %v3326 = vunpack.c.h.b16 %v3150
    %v3327 = vunpack.c.l.b16 %v3151
    %v3328 = vunpack.c.h.b16 %v3151
    %v3329 = vunpack.c.l.b16 %v3152
    %v3330 = vunpack.c.h.b16 %v3152
    %v3331 = vunpack.c.l.b16 %v3153
    %v3332 = vunpack.c.h.b16 %v3153
    %v3333 = vunpack.c.l.b16 %v3154
    %v3334 = vunpack.c.h.b16 %v3154
    %v3335 = vunpack.c.l.b16 %v3155
    %v3336 = vunpack.c.h.b16 %v3155
    %v3337 = vunpack.c.l.b16 %v3156
    %v3338 = vunpack.c.h.b16 %v3156
    %v3339 = vunpack.c.l.b16 %v3157
    %v3340 = vunpack.c.h.b16 %v3157
    %v3341 = vunpack.c.l.b16 %v3158
    %v3342 = vunpack.c.h.b16 %v3158
    %v3343 = vunpack.c.l.b16 %v3159
    %v3344 = vunpack.c.h.b16 %v3159
    %v3345 = vunpack.c.l.b16 %v3160
    %v3346 = vunpack.c.h.b16 %v3160
    %v3347 = vunpack.c.l.b16 %v3161
    %v3348 = vunpack.c.h.b16 %v3161
    %v3349 = vunpack.c.l.b16 %v3162
    %v3350 = vunpack.c.h.b16 %v3162
    %v3351 = vunpack.c.l.b16 %v3163
    %v3352 = vunpack.c.h.b16 %v3163
    %v3353 = vunpack.c.l.b16 %v3164
    %v3354 = vunpack.c.h.b16 %v3164
    %v3355 = vunpack.c.l.b16 %v3165
    %v3356 = vunpack.c.h.b16 %v3165
    %v3357 = vunpack.c.l.b16 %v3166
    %v3358 = vunpack.c.h.b16 %v3166
    %v3359 = vunpack.c.l.b16 %v3167
    %v3360 = vunpack.c.h.b16 %v3167
    %v3361 = vunpack.c.l.b16 %v3168
    %v3362 = vunpack.c.h.b16 %v3168
    %v3363 = vunpack.c.l.b16 %v3169
    %v3364 = vunpack.c.h.b16 %v3169
    %v3365 = vunpack.c.l.b16 %v3170
    %v3366 = vunpack.c.h.b16 %v3170
    %v3367 = vunpack.c.l.b16 %v3171
    %v3368 = vunpack.c.h.b16 %v3171
    %v3369 = vunpack.c.l.b16 %v3172
    %v3370 = vunpack.c.h.b16 %v3172
    %v3371 = vpack.c.b16 %v3245, %v3243
    %v3372 = vpack.c.b16 %v3246, %v3244
    %v3373 = vpack.c.b16 %v3249, %v3247
    %v3374 = vpack.c.b16 %v3250, %v3248
    %v3375 = vpack.c.b16 %v3253, %v3251
    %v3376 = vpack.c.b16 %v3254, %v3252
    %v3377 = vpack.c.b16 %v3257, %v3255
    %v3378 = vpack.c.b16 %v3258, %v3256
    %v3379 = vpack.c.b16 %v3261, %v3259
    %v3380 = vpack.c.b16 %v3262, %v3260
    %v3381 = vpack.c.b16 %v3265, %v3263
    %v3382 = vpack.c.b16 %v3266, %v3264
    %v3383 = vpack.c.b16 %v3269, %v3267
    %v3384 = vpack.c.b16 %v3270, %v3268
    %v3385 = vpack.c.b16 %v3273, %v3271
    %v3386 = vpack.c.b16 %v3274, %v3272
    %v3387 = vpack.c.b16 %v3277, %v3275
    %v3388 = vpack.c.b16 %v3278, %v3276
    %v3389 = vpack.c.b16 %v3281, %v3279
    %v3390 = vpack.c.b16 %v3282, %v3280
    %v3391 = vpack.c.b16 %v3285, %v3283
    %v3392 = vpack.c.b16 %v3286, %v3284
    %v3393 = vpack.c.b16 %v3289, %v3287
    %v3394 = vpack.c.b16 %v3290, %v3288
    %v3395 = vpack.c.b16 %v3293, %v3291
    %v3396 = vpack.c.b16 %v3294, %v3292
    %v3397 = vpack.c.b16 %v3297, %v3295
    %v3398 = vpack.c.b16 %v3298, %v3296
    %v3399 = vpack.c.b16 %v3301, %v3299
    %v3400 = vpack.c.b16 %v3302, %v3300
    %v3401 = vpack.c.b16 %v3305, %v3303
    %v3402 = vpack.c.b16 %v3306, %v3304
    %v3403 = vpack.c.b16 %v3309, %v3307
    %v3404 = vpack.c.b16 %v3310, %v3308
    %v3405 = vpack.c.b16 %v3313, %v3311
    %v3406 = vpack.c.b16 %v3314, %v3312
    %v3407 = vpack.c.b16 %v3317, %v3315
    %v3408 = vpack.c.b16 %v3318, %v3316
    %v3409 = vpack.c.b16 %v3321, %v3319
    %v3410 = vpack.c.b16 %v3322, %v3320
    %v3411 = vpack.c.b16 %v3325, %v3323
    %v3412 = vpack.c.b16 %v3326, %v3324
    %v3413 = vpack.c.b16 %v3329, %v3327
    %v3414 = vpack.c.b16 %v3330, %v3328
    %v3415 = vpack.c.b16 %v3333, %v3331
    %v3416 = vpack.c.b16 %v3334, %v3332
    %v3417 = vpack.c.b16 %v3337, %v3335
    %v3418 = vpack.c.b16 %v3338, %v3336
    %v3419 = vpack.c.b16 %v3341, %v3339
    %v3420 = vpack.c.b16 %v3342, %v3340
    %v3421 = vpack.c.b16 %v3345, %v3343
    %v3422 = vpack.c.b16 %v3346, %v3344
    %v3423 = vpack.c.b16 %v3349, %v3347
    %v3424 = vpack.c.b16 %v3350, %v3348
    %v3425 = vpack.c.b16 %v3353, %v3351
    %v3426 = vpack.c.b16 %v3354, %v3352
    %v3427 = vpack.c.b16 %v3357, %v3355
    %v3428 = vpack.c.b16 %v3358, %v3356
    %v3429 = vpack.c.b16 %v3361, %v3359
    %v3430 = vpack.c.b16 %v3362, %v3360
    %v3431 = vpack.c.b16 %v3365, %v3363
    %v3432 = vpack.c.b16 %v3366, %v3364
    %v3433 = vpack.c.b16 %v3369, %v3367
    %v3434 = vpack.c.b16 %v3370, %v3368
    %3499 = vmatpush.bf16.msra.mxu0 %v3385
    %3500 = vmatpush.bf16.msra.mxu0 %v3383
    %3501 = vmatpush.bf16.msra.mxu0 %v3381
    %3502 = vmatpush.bf16.msra.mxu0 %v3379
    %3503 = vmatpush.bf16.msra.mxu0 %v3377
    %3504 = vmatpush.bf16.msra.mxu0 %v3375
    %3505 = vmatpush.bf16.msra.mxu0 %v3373
    %3506 = vmatpush.bf16.msra.mxu0 %v3371
    %3507 = vmatmul.bf16.gmra.mxu0 %v3105
    %v3508 = vpop.f32.mrf.mxu0
    %v3509 = vadd.f32 %v3175, %v3508
    %v3510 = vpop.f32.mrf.mxu0
    %3511 = vdwg.mxu0
    %3512 = vmatpush.bf16.msra.mxu0 %v3401
    %3513 = vmatpush.bf16.msra.mxu0 %v3399
    %3514 = vmatpush.bf16.msra.mxu0 %v3397
    %3515 = vmatpush.bf16.msra.mxu0 %v3395
    %3516 = vmatpush.bf16.msra.mxu0 %v3393
    %3517 = vmatpush.bf16.msra.mxu0 %v3391
    %3518 = vmatpush.bf16.msra.mxu0 %v3389
    %3519 = vmatpush.bf16.msra.mxu0 %v3387
    %3520 = vmatmul.bf16.gmra.mxu0 %v3106
    %v3521 = vpop.f32.mrf.mxu0
    %v3522 = vadd.f32 %v3509, %v3521
    %v3523 = vpop.f32.mrf.mxu0
    %3524 = vdwg.mxu0
    %3525 = vmatpush.bf16.msra.mxu0 %v3417
    %3526 = vmatpush.bf16.msra.mxu0 %v3415
    %3527 = vmatpush.bf16.msra.mxu0 %v3413
    %3528 = vmatpush.bf16.msra.mxu0 %v3411
    %3529 = vmatpush.bf16.msra.mxu0 %v3409
    %3530 = vmatpush.bf16.msra.mxu0 %v3407
    %3531 = vmatpush.bf16.msra.mxu0 %v3405
    %3532 = vmatpush.bf16.msra.mxu0 %v3403
    %3533 = vmatmul.bf16.gmra.mxu0 %v3107
    %v3534 = vpop.f32.mrf.mxu0
    %v3535 = vadd.f32 %v3522, %v3534
    %v3536 = vpop.f32.mrf.mxu0
    %3537 = vdwg.mxu0
    %3538 = vmatpush.bf16.msra.mxu0 %v3433
    %3539 = vmatpush.bf16.msra.mxu0 %v3431
    %3540 = vmatpush.bf16.msra.mxu0 %v3429
    %3541 = vmatpush.bf16.msra.mxu0 %v3427
    %3542 = vmatpush.bf16.msra.mxu0 %v3425
    %3543 = vmatpush.bf16.msra.mxu0 %v3423
    %3544 = vmatpush.bf16.msra.mxu0 %v3421
    %3545 = vmatpush.bf16.msra.mxu0 %v3419
    %3546 = vmatmul.bf16.gmra.mxu0 %v3108
    %v3547 = vpop.f32.mrf.mxu0
    %v3548 = vadd.f32 %v3535, %v3547
    %v3549 = vpop.f32.mrf.mxu0
    %3550 = vdwg.mxu0
    %3551 = vmatpush.bf16.msra.mxu0 %v3386
    %3552 = vmatpush.bf16.msra.mxu0 %v3384
    %3553 = vmatpush.bf16.msra.mxu0 %v3382
    %3554 = vmatpush.bf16.msra.mxu0 %v3380
    %3555 = vmatpush.bf16.msra.mxu0 %v3378
    %3556 = vmatpush.bf16.msra.mxu0 %v3376
    %3557 = vmatpush.bf16.msra.mxu0 %v3374
    %3558 = vmatpush.bf16.msra.mxu0 %v3372
    %3559 = vmatmul.bf16.gmra.mxu0 %v3105
    %v3560 = vpop.f32.mrf.mxu0
    %v3561 = vadd.f32 %v3176, %v3560
    %v3562 = vpop.f32.mrf.mxu0
    %3563 = vdwg.mxu0
    %3564 = vmatpush.bf16.msra.mxu0 %v3402
    %3565 = vmatpush.bf16.msra.mxu0 %v3400
    %3566 = vmatpush.bf16.msra.mxu0 %v3398
    %3567 = vmatpush.bf16.msra.mxu0 %v3396
    %3568 = vmatpush.bf16.msra.mxu0 %v3394
    %3569 = vmatpush.bf16.msra.mxu0 %v3392
    %3570 = vmatpush.bf16.msra.mxu0 %v3390
    %3571 = vmatpush.bf16.msra.mxu0 %v3388
    %3572 = vmatmul.bf16.gmra.mxu0 %v3106
    %v3573 = vpop.f32.mrf.mxu0
    %v3574 = vadd.f32 %v3561, %v3573
    %v3575 = vpop.f32.mrf.mxu0
    %3576 = vdwg.mxu0
    %3577 = vmatpush.bf16.msra.mxu0 %v3418
    %3578 = vmatpush.bf16.msra.mxu0 %v3416
    %3579 = vmatpush.bf16.msra.mxu0 %v3414
    %3580 = vmatpush.bf16.msra.mxu0 %v3412
    %3581 = vmatpush.bf16.msra.mxu0 %v3410
    %3582 = vmatpush.bf16.msra.mxu0 %v3408
    %3583 = vmatpush.bf16.msra.mxu0 %v3406
    %3584 = vmatpush.bf16.msra.mxu0 %v3404
    %3585 = vmatmul.bf16.gmra.mxu0 %v3107
    %v3586 = vpop.f32.mrf.mxu0
    %v3587 = vadd.f32 %v3574, %v3586
    %v3588 = vpop.f32.mrf.mxu0
    %3589 = vdwg.mxu0
    %3590 = vmatpush.bf16.msra.mxu0 %v3434
    %3591 = vmatpush.bf16.msra.mxu0 %v3432
    %3592 = vmatpush.bf16.msra.mxu0 %v3430
    %3593 = vmatpush.bf16.msra.mxu0 %v3428
    %3594 = vmatpush.bf16.msra.mxu0 %v3426
    %3595 = vmatpush.bf16.msra.mxu0 %v3424
    %3596 = vmatpush.bf16.msra.mxu0 %v3422
    %3597 = vmatpush.bf16.msra.mxu0 %v3420
    %3598 = vmatmul.bf16.gmra.mxu0 %v3108
    %v3599 = vpop.f32.mrf.mxu0
    %v3600 = vadd.f32 %v3587, %v3599
    %v3601 = vpop.f32.mrf.mxu0
    %3602 = vdwg.mxu0
    %v3603 = vmax.f32 %v3548, 0.0
    %v3604 = vmax.f32 %v3600, 0.0
    %v3605 = vpack.c.bf16 %v3603, %v3603
    %v3606 = vpack.c.bf16 %v3604, %v3604
    %v3607 = vld [vmem:[#allocation8] sm:$0xff]
    %v3608 = vld [vmem:[#allocation8 + $0x8] sm:$0xff]
    %v3609 = vld [vmem:[#allocation8 + $0x10] sm:$0xff]
    %v3610 = vld [vmem:[#allocation8 + $0x18] sm:$0xff]
    %v3611 = vld [vmem:[#allocation8 + $0x20] sm:$0xff]
    %v3612 = vld [vmem:[#allocation8 + $0x28] sm:$0xff]
    %v3613 = vld [vmem:[#allocation8 + $0x30] sm:$0xff]
    %v3614 = vld [vmem:[#allocation8 + $0x38] sm:$0xff]
    %v3615 = vld [vmem:[#allocation8 + $0x40] sm:$0xff]
    %v3616 = vld [vmem:[#allocation8 + $0x48] sm:$0xff]
    %v3617 = vld [vmem:[#allocation8 + $0x50] sm:$0xff]
    %v3618 = vld [vmem:[#allocation8 + $0x58] sm:$0xff]
    %v3619 = vld [vmem:[#allocation8 + $0x60] sm:$0xff]
    %v3620 = vld [vmem:[#allocation8 + $0x68] sm:$0xff]
    %v3621 = vld [vmem:[#allocation8 + $0x70] sm:$0xff]
    %v3622 = vld [vmem:[#allocation8 + $0x78] sm:$0xff]
    %v3623 = vld [vmem:[#allocation8 + $0x80] sm:$0xff]
    %v3624 = vld [vmem:[#allocation8 + $0x88] sm:$0xff]
    %v3625 = vld [vmem:[#allocation8 + $0x90] sm:$0xff]
    %v3626 = vld [vmem:[#allocation8 + $0x98] sm:$0xff]
    %v3627 = vld [vmem:[#allocation8 + $0xa0] sm:$0xff]
    %v3628 = vld [vmem:[#allocation8 + $0xa8] sm:$0xff]
    %v3629 = vld [vmem:[#allocation8 + $0xb0] sm:$0xff]
    %v3630 = vld [vmem:[#allocation8 + $0xb8] sm:$0xff]
    %v3631 = vld [vmem:[#allocation8 + $0xc0] sm:$0xff]
    %v3632 = vld [vmem:[#allocation8 + $0xc8] sm:$0xff]
    %v3633 = vld [vmem:[#allocation8 + $0xd0] sm:$0xff]
    %v3634 = vld [vmem:[#allocation8 + $0xd8] sm:$0xff]
    %v3635 = vld [vmem:[#allocation8 + $0xe0] sm:$0xff]
    %v3636 = vld [vmem:[#allocation8 + $0xe8] sm:$0xff]
    %v3637 = vld [vmem:[#allocation8 + $0xf0] sm:$0xff]
    %v3638 = vld [vmem:[#allocation8 + $0xf8] sm:$0xff]
    %v3639 = vld [vmem:[%s11] sm:$0x3]
    %v3641 = vperm.slane %v3639, 0
    %v3642 = vperm.slane %v3639, 1
    %v3677 = vunpack.c.l.b16 %v3607
    %v3678 = vunpack.c.h.b16 %v3607
    %v3679 = vunpack.c.l.b16 %v3608
    %v3680 = vunpack.c.h.b16 %v3608
    %v3681 = vunpack.c.l.b16 %v3609
    %v3682 = vunpack.c.h.b16 %v3609
    %v3683 = vunpack.c.l.b16 %v3610
    %v3684 = vunpack.c.h.b16 %v3610
    %v3685 = vunpack.c.l.b16 %v3611
    %v3686 = vunpack.c.h.b16 %v3611
    %v3687 = vunpack.c.l.b16 %v3612
    %v3688 = vunpack.c.h.b16 %v3612
    %v3689 = vunpack.c.l.b16 %v3613
    %v3690 = vunpack.c.h.b16 %v3613
    %v3691 = vunpack.c.l.b16 %v3614
    %v3692 = vunpack.c.h.b16 %v3614
    %v3693 = vunpack.c.l.b16 %v3615
    %v3694 = vunpack.c.h.b16 %v3615
    %v3695 = vunpack.c.l.b16 %v3616
    %v3696 = vunpack.c.h.b16 %v3616
    %v3697 = vunpack.c.l.b16 %v3617
    %v3698 = vunpack.c.h.b16 %v3617
    %v3699 = vunpack.c.l.b16 %v3618
    %v3700 = vunpack.c.h.b16 %v3618
    %v3701 = vunpack.c.l.b16 %v3619
    %v3702 = vunpack.c.h.b16 %v3619
    %v3703 = vunpack.c.l.b16 %v3620
    %v3704 = vunpack.c.h.b16 %v3620
    %v3705 = vunpack.c.l.b16 %v3621
    %v3706 = vunpack.c.h.b16 %v3621
    %v3707 = vunpack.c.l.b16 %v3622
    %v3708 = vunpack.c.h.b16 %v3622
    %v3709 = vunpack.c.l.b16 %v3623
    %v3710 = vunpack.c.h.b16 %v3623
    %v3711 = vunpack.c.l.b16 %v3624
    %v3712 = vunpack.c.h.b16 %v3624
    %v3713 = vunpack.c.l.b16 %v3625
    %v3714 = vunpack.c.h.b16 %v3625
    %v3715 = vunpack.c.l.b16 %v3626
    %v3716 = vunpack.c.h.b16 %v3626
    %v3717 = vunpack.c.l.b16 %v3627
    %v3718 = vunpack.c.h.b16 %v3627
    %v3719 = vunpack.c.l.b16 %v3628
    %v3720 = vunpack.c.h.b16 %v3628
    %v3721 = vunpack.c.l.b16 %v3629
    %v3722 = vunpack.c.h.b16 %v3629
    %v3723 = vunpack.c.l.b16 %v3630
    %v3724 = vunpack.c.h.b16 %v3630
    %v3725 = vunpack.c.l.b16 %v3631
    %v3726 = vunpack.c.h.b16 %v3631
    %v3727 = vunpack.c.l.b16 %v3632
    %v3728 = vunpack.c.h.b16 %v3632
    %v3729 = vunpack.c.l.b16 %v3633
    %v3730 = vunpack.c.h.b16 %v3633
    %v3731 = vunpack.c.l.b16 %v3634
    %v3732 = vunpack.c.h.b16 %v3634
    %v3733 = vunpack.c.l.b16 %v3635
    %v3734 = vunpack.c.h.b16 %v3635
    %v3735 = vunpack.c.l.b16 %v3636
    %v3736 = vunpack.c.h.b16 %v3636
    %v3737 = vunpack.c.l.b16 %v3637
    %v3738 = vunpack.c.h.b16 %v3637
    %v3739 = vunpack.c.l.b16 %v3638
    %v3740 = vunpack.c.h.b16 %v3638
    %v3741 = vpack.c.b16 %v3679, %v3677
    %v3742 = vpack.c.b16 %v3680, %v3678
    %v3743 = vpack.c.b16 %v3683, %v3681
    %v3744 = vpack.c.b16 %v3684, %v3682
    %v3745 = vpack.c.b16 %v3687, %v3685
    %v3746 = vpack.c.b16 %v3688, %v3686
    %v3747 = vpack.c.b16 %v3691, %v3689
    %v3748 = vpack.c.b16 %v3692, %v3690
    %v3749 = vpack.c.b16 %v3695, %v3693
    %v3750 = vpack.c.b16 %v3696, %v3694
    %v3751 = vpack.c.b16 %v3699, %v3697
    %v3752 = vpack.c.b16 %v3700, %v3698
    %v3753 = vpack.c.b16 %v3703, %v3701
    %v3754 = vpack.c.b16 %v3704, %v3702
    %v3755 = vpack.c.b16 %v3707, %v3705
    %v3756 = vpack.c.b16 %v3708, %v3706
    %v3757 = vpack.c.b16 %v3711, %v3709
    %v3758 = vpack.c.b16 %v3712, %v3710
    %v3759 = vpack.c.b16 %v3715, %v3713
    %v3760 = vpack.c.b16 %v3716, %v3714
    %v3761 = vpack.c.b16 %v3719, %v3717
    %v3762 = vpack.c.b16 %v3720, %v3718
    %v3763 = vpack.c.b16 %v3723, %v3721
    %v3764 = vpack.c.b16 %v3724, %v3722
    %v3765 = vpack.c.b16 %v3727, %v3725
    %v3766 = vpack.c.b16 %v3728, %v3726
    %v3767 = vpack.c.b16 %v3731, %v3729
    %v3768 = vpack.c.b16 %v3732, %v3730
    %v3769 = vpack.c.b16 %v3735, %v3733
    %v3770 = vpack.c.b16 %v3736, %v3734
    %v3771 = vpack.c.b16 %v3739, %v3737
    %v3772 = vpack.c.b16 %v3740, %v3738
    %3805 = vmatpush.bf16.msra.mxu0 %v3755
    %3806 = vmatpush.bf16.msra.mxu0 %v3753
    %3807 = vmatpush.bf16.msra.mxu0 %v3751
    %3808 = vmatpush.bf16.msra.mxu0 %v3749
    %3809 = vmatpush.bf16.msra.mxu0 %v3747
    %3810 = vmatpush.bf16.msra.mxu0 %v3745
    %3811 = vmatpush.bf16.msra.mxu0 %v3743
    %3812 = vmatpush.bf16.msra.mxu0 %v3741
    %3813 = vmatmul.bf16.gmra.mxu0 %v3605
    %v3814 = vpop.f32.mrf.mxu0
    %v3815 = vadd.f32 %v3641, %v3814
    %v3816 = vpop.f32.mrf.mxu0
    %3817 = vdwg.mxu0
    %3818 = vmatpush.bf16.msra.mxu0 %v3771
    %3819 = vmatpush.bf16.msra.mxu0 %v3769
    %3820 = vmatpush.bf16.msra.mxu0 %v3767
    %3821 = vmatpush.bf16.msra.mxu0 %v3765
    %3822 = vmatpush.bf16.msra.mxu0 %v3763
    %3823 = vmatpush.bf16.msra.mxu0 %v3761
    %3824 = vmatpush.bf16.msra.mxu0 %v3759
    %3825 = vmatpush.bf16.msra.mxu0 %v3757
    %3826 = vmatmul.bf16.gmra.mxu0 %v3606
    %v3827 = vpop.f32.mrf.mxu0
    %v3828 = vadd.f32 %v3815, %v3827
    %v3829 = vpop.f32.mrf.mxu0
    %3830 = vdwg.mxu0
    %3831 = vmatpush.bf16.msra.mxu0 %v3756
    %3832 = vmatpush.bf16.msra.mxu0 %v3754
    %3833 = vmatpush.bf16.msra.mxu0 %v3752
    %3834 = vmatpush.bf16.msra.mxu0 %v3750
    %3835 = vmatpush.bf16.msra.mxu0 %v3748
    %3836 = vmatpush.bf16.msra.mxu0 %v3746
    %3837 = vmatpush.bf16.msra.mxu0 %v3744
    %3838 = vmatpush.bf16.msra.mxu0 %v3742
    %3839 = vmatmul.bf16.gmra.mxu0 %v3605
    %v3840 = vpop.f32.mrf.mxu0
    %v3841 = vadd.f32 %v3642, %v3840
    %v3842 = vpop.f32.mrf.mxu0
    %3843 = vdwg.mxu0
    %3844 = vmatpush.bf16.msra.mxu0 %v3772
    %3845 = vmatpush.bf16.msra.mxu0 %v3770
    %3846 = vmatpush.bf16.msra.mxu0 %v3768
    %3847 = vmatpush.bf16.msra.mxu0 %v3766
    %3848 = vmatpush.bf16.msra.mxu0 %v3764
    %3849 = vmatpush.bf16.msra.mxu0 %v3762
    %3850 = vmatpush.bf16.msra.mxu0 %v3760
    %3851 = vmatpush.bf16.msra.mxu0 %v3758
    %3852 = vmatmul.bf16.gmra.mxu0 %v3606
    %v3853 = vpop.f32.mrf.mxu0
    %v3854 = vadd.f32 %v3841, %v3853
    %v3855 = vpop.f32.mrf.mxu0
    %3856 = vdwg.mxu0
    %v3857 = vmax.f32 %v3828, 0.0
    %v3858 = vmax.f32 %v3854, 0.0
    %v3859 = vpack.c.bf16 %v3857, %v3857
    %v3860 = vpack.c.bf16 %v3858, %v3858
    %v3861 = vld [vmem:[%s5] sm:$0xf]
    %v3862 = vld [vmem:[%s5 + $0x4] sm:$0xf]
    %v3863 = vld [vmem:[%s5 + $0x8] sm:$0xf]
    %v3864 = vld [vmem:[%s5 + $0xc] sm:$0xf]
    %v3865 = vld [vmem:[%s5 + $0x10] sm:$0xf]
    %v3866 = vld [vmem:[%s5 + $0x14] sm:$0xf]
    %v3867 = vld [vmem:[%s5 + $0x18] sm:$0xf]
    %v3868 = vld [vmem:[%s5 + $0x1c] sm:$0xf]
    %v3869 = vld [vmem:[%s5 + $0x20] sm:$0xf]
    %v3870 = vld [vmem:[%s5 + $0x24] sm:$0xf]
    %v3871 = vld [vmem:[%s5 + $0x28] sm:$0xf]
    %v3872 = vld [vmem:[%s5 + $0x2c] sm:$0xf]
    %v3873 = vld [vmem:[%s5 + $0x30] sm:$0xf]
    %v3874 = vld [vmem:[%s5 + $0x34] sm:$0xf]
    %v3875 = vld [vmem:[%s5 + $0x38] sm:$0xf]
    %v3876 = vld [vmem:[%s5 + $0x3c] sm:$0xf]
    %v3877 = vld [vmem:[%s5 + $0x40] sm:$0xf]
    %v3878 = vld [vmem:[%s5 + $0x44] sm:$0xf]
    %v3879 = vld [vmem:[%s5 + $0x48] sm:$0xf]
    %v3880 = vld [vmem:[%s5 + $0x4c] sm:$0xf]
    %v3881 = vld [vmem:[%s5 + $0x50] sm:$0xf]
    %v3882 = vld [vmem:[%s5 + $0x54] sm:$0xf]
    %v3883 = vld [vmem:[%s5 + $0x58] sm:$0xf]
    %v3884 = vld [vmem:[%s5 + $0x5c] sm:$0xf]
    %v3885 = vld [vmem:[%s5 + $0x60] sm:$0xf]
    %v3886 = vld [vmem:[%s5 + $0x64] sm:$0xf]
    %v3887 = vld [vmem:[%s5 + $0x68] sm:$0xf]
    %v3888 = vld [vmem:[%s5 + $0x6c] sm:$0xf]
    %v3889 = vld [vmem:[%s5 + $0x70] sm:$0xf]
    %v3890 = vld [vmem:[%s5 + $0x74] sm:$0xf]
    %v3891 = vld [vmem:[%s5 + $0x78] sm:$0xf]
    %v3892 = vld [vmem:[%s5 + $0x7c] sm:$0xf]
    %v3893 = vld [vmem:[%s12] sm:$0x1]
    %v3895 = vperm.slane %v3893, 0
    %v3929 = vunpack.c.l.b16 %v3861
    %v3930 = vunpack.c.l.b16 %v3862
    %v3931 = vunpack.c.l.b16 %v3863
    %v3932 = vunpack.c.l.b16 %v3864
    %v3933 = vunpack.c.l.b16 %v3865
    %v3934 = vunpack.c.l.b16 %v3866
    %v3935 = vunpack.c.l.b16 %v3867
    %v3936 = vunpack.c.l.b16 %v3868
    %v3937 = vunpack.c.l.b16 %v3869
    %v3938 = vunpack.c.l.b16 %v3870
    %v3939 = vunpack.c.l.b16 %v3871
    %v3940 = vunpack.c.l.b16 %v3872
    %v3941 = vunpack.c.l.b16 %v3873
    %v3942 = vunpack.c.l.b16 %v3874
    %v3943 = vunpack.c.l.b16 %v3875
    %v3944 = vunpack.c.l.b16 %v3876
    %v3945 = vunpack.c.l.b16 %v3877
    %v3946 = vunpack.c.l.b16 %v3878
    %v3947 = vunpack.c.l.b16 %v3879
    %v3948 = vunpack.c.l.b16 %v3880
    %v3949 = vunpack.c.l.b16 %v3881
    %v3950 = vunpack.c.l.b16 %v3882
    %v3951 = vunpack.c.l.b16 %v3883
    %v3952 = vunpack.c.l.b16 %v3884
    %v3953 = vunpack.c.l.b16 %v3885
    %v3954 = vunpack.c.l.b16 %v3886
    %v3955 = vunpack.c.l.b16 %v3887
    %v3956 = vunpack.c.l.b16 %v3888
    %v3957 = vunpack.c.l.b16 %v3889
    %v3958 = vunpack.c.l.b16 %v3890
    %v3959 = vunpack.c.l.b16 %v3891
    %v3960 = vunpack.c.l.b16 %v3892
    %v3961 = vpack.c.b16 %v3930, %v3929
    %v3962 = vpack.c.b16 %v3932, %v3931
    %v3963 = vpack.c.b16 %v3934, %v3933
    %v3964 = vpack.c.b16 %v3936, %v3935
    %v3965 = vpack.c.b16 %v3938, %v3937
    %v3966 = vpack.c.b16 %v3940, %v3939
    %v3967 = vpack.c.b16 %v3942, %v3941
    %v3968 = vpack.c.b16 %v3944, %v3943
    %v3969 = vpack.c.b16 %v3946, %v3945
    %v3970 = vpack.c.b16 %v3948, %v3947
    %v3971 = vpack.c.b16 %v3950, %v3949
    %v3972 = vpack.c.b16 %v3952, %v3951
    %v3973 = vpack.c.b16 %v3954, %v3953
    %v3974 = vpack.c.b16 %v3956, %v3955
    %v3975 = vpack.c.b16 %v3958, %v3957
    %v3976 = vpack.c.b16 %v3960, %v3959
    %3993 = vmatpush.bf16.msra.mxu0 %v3968
    %3994 = vmatpush.bf16.msra.mxu0 %v3967
    %3995 = vmatpush.bf16.msra.mxu0 %v3966
    %3996 = vmatpush.bf16.msra.mxu0 %v3965
    %3997 = vmatpush.bf16.msra.mxu0 %v3964
    %3998 = vmatpush.bf16.msra.mxu0 %v3963
    %3999 = vmatpush.bf16.msra.mxu0 %v3962
    %4000 = vmatpush.bf16.msra.mxu0 %v3961
    %4001 = vmatmul.bf16.gmra.mxu0 %v3859
    %v4002 = vpop.f32.mrf.mxu0
    %v4003 = vadd.f32 %v3895, %v4002
    %v4004 = vpop.f32.mrf.mxu0
    %4005 = vdwg.mxu0
    %4006 = vmatpush.bf16.msra.mxu0 %v3976
    %4007 = vmatpush.bf16.msra.mxu0 %v3975
    %4008 = vmatpush.bf16.msra.mxu0 %v3974
    %4009 = vmatpush.bf16.msra.mxu0 %v3973
    %4010 = vmatpush.bf16.msra.mxu0 %v3972
    %4011 = vmatpush.bf16.msra.mxu0 %v3971
    %4012 = vmatpush.bf16.msra.mxu0 %v3970
    %4013 = vmatpush.bf16.msra.mxu0 %v3969
    %4014 = vmatmul.bf16.gmra.mxu0 %v3860
    %v4015 = vpop.f32.mrf.mxu0
    %v4016 = vadd.f32 %v4003, %v4015
    %v4017 = vpop.f32.mrf.mxu0
    %4018 = vdwg.mxu0
    %v4019 = vmax.f32 %v4016, 0.0
    %v4020 = vpack.c.bf16 %v4019, %v4019
    %v4021 = vld [vmem:[%s6] sm:$0xf]
    %v4022 = vld [vmem:[%s6 + $0x4] sm:$0xf]
    %v4023 = vld [vmem:[%s6 + $0x8] sm:$0xf]
    %v4024 = vld [vmem:[%s6 + $0xc] sm:$0xf]
    %v4025 = vld [vmem:[%s6 + $0x10] sm:$0xf]
    %v4026 = vld [vmem:[%s6 + $0x14] sm:$0xf]
    %v4027 = vld [vmem:[%s6 + $0x18] sm:$0xf]
    %v4028 = vld [vmem:[%s6 + $0x1c] sm:$0xf]
    %v4029 = vld [vmem:[%s6 + $0x20] sm:$0xf]
    %v4030 = vld [vmem:[%s6 + $0x24] sm:$0xf]
    %v4031 = vld [vmem:[%s6 + $0x28] sm:$0xf]
    %v4032 = vld [vmem:[%s6 + $0x2c] sm:$0xf]
    %v4033 = vld [vmem:[%s6 + $0x30] sm:$0xf]
    %v4034 = vld [vmem:[%s6 + $0x34] sm:$0xf]
    %v4035 = vld [vmem:[%s6 + $0x38] sm:$0xf]
    %v4036 = vld [vmem:[%s6 + $0x3c] sm:$0xf]
    %v4037 = vld [vmem:[%s13] sm:$0x1]
    %v4039 = vperm.slane %v4037, 0
    %v4057 = vunpack.c.l.b16 %v4021
    %v4058 = vunpack.c.l.b16 %v4022
    %v4059 = vunpack.c.l.b16 %v4023
    %v4060 = vunpack.c.l.b16 %v4024
    %v4061 = vunpack.c.l.b16 %v4025
    %v4062 = vunpack.c.l.b16 %v4026
    %v4063 = vunpack.c.l.b16 %v4027
    %v4064 = vunpack.c.l.b16 %v4028
    %v4065 = vunpack.c.l.b16 %v4029
    %v4066 = vunpack.c.l.b16 %v4030
    %v4067 = vunpack.c.l.b16 %v4031
    %v4068 = vunpack.c.l.b16 %v4032
    %v4069 = vunpack.c.l.b16 %v4033
    %v4070 = vunpack.c.l.b16 %v4034
    %v4071 = vunpack.c.l.b16 %v4035
    %v4072 = vunpack.c.l.b16 %v4036
    %v4073 = vpack.c.b16 %v4058, %v4057
    %v4074 = vpack.c.b16 %v4060, %v4059
    %v4075 = vpack.c.b16 %v4062, %v4061
    %v4076 = vpack.c.b16 %v4064, %v4063
    %v4077 = vpack.c.b16 %v4066, %v4065
    %v4078 = vpack.c.b16 %v4068, %v4067
    %v4079 = vpack.c.b16 %v4070, %v4069
    %v4080 = vpack.c.b16 %v4072, %v4071
    %4089 = vmatpush.bf16.msra.mxu0 %v4080
    %4090 = vmatpush.bf16.msra.mxu0 %v4079
    %4091 = vmatpush.bf16.msra.mxu0 %v4078
    %4092 = vmatpush.bf16.msra.mxu0 %v4077
    %4093 = vmatpush.bf16.msra.mxu0 %v4076
    %4094 = vmatpush.bf16.msra.mxu0 %v4075
    %4095 = vmatpush.bf16.msra.mxu0 %v4074
    %4096 = vmatpush.bf16.msra.mxu0 %v4073
    %4097 = vmatmul.bf16.gmra.mxu0 %v4020
    %v4098 = vpop.f32.mrf.mxu0
    %v4099 = vadd.f32 %v4039, %v4098
    %v4100 = vpop.f32.mrf.mxu0
    %4101 = vdwg.mxu0
    %v4102 = vmax.f32 %v4099, 0.0
    %v4103 = vpack.c.bf16 %v4102, %v4102
    %v4104 = vld [vmem:[%s7] sm:$0xf]
    %v4105 = vld [vmem:[%s7 + $0x4] sm:$0xf]
    %v4106 = vld [vmem:[%s7 + $0x8] sm:$0xf]
    %v4107 = vld [vmem:[%s7 + $0xc] sm:$0xf]
    %v4108 = vld [vmem:[%s7 + $0x10] sm:$0xf]
    %v4109 = vld [vmem:[%s7 + $0x14] sm:$0xf]
    %v4110 = vld [vmem:[%s7 + $0x18] sm:$0xf]
    %v4111 = vld [vmem:[%s7 + $0x1c] sm:$0xf]
    %v4112 = vld [vmem:[%s7 + $0x20] sm:$0xf]
    %v4113 = vld [vmem:[%s7 + $0x24] sm:$0xf]
    %v4114 = vld [vmem:[%s7 + $0x28] sm:$0xf]
    %v4115 = vld [vmem:[%s7 + $0x2c] sm:$0xf]
    %v4116 = vld [vmem:[%s7 + $0x30] sm:$0xf]
    %v4117 = vld [vmem:[%s7 + $0x34] sm:$0xf]
    %v4118 = vld [vmem:[%s7 + $0x38] sm:$0xf]
    %v4119 = vld [vmem:[%s7 + $0x3c] sm:$0xf]
    %v4120 = vld [vmem:[%s14] sm:$0x1]
    %v4122 = vperm.slane %v4120, 0
    %v4140 = vunpack.c.l.b16 %v4104
    %v4141 = vunpack.c.l.b16 %v4105
    %v4142 = vunpack.c.l.b16 %v4106
    %v4143 = vunpack.c.l.b16 %v4107
    %v4144 = vunpack.c.l.b16 %v4108
    %v4145 = vunpack.c.l.b16 %v4109
    %v4146 = vunpack.c.l.b16 %v4110
    %v4147 = vunpack.c.l.b16 %v4111
    %v4148 = vunpack.c.l.b16 %v4112
    %v4149 = vunpack.c.l.b16 %v4113
    %v4150 = vunpack.c.l.b16 %v4114
    %v4151 = vunpack.c.l.b16 %v4115
    %v4152 = vunpack.c.l.b16 %v4116
    %v4153 = vunpack.c.l.b16 %v4117
    %v4154 = vunpack.c.l.b16 %v4118
    %v4155 = vunpack.c.l.b16 %v4119
    %v4156 = vpack.c.b16 %v4141, %v4140
    %v4157 = vpack.c.b16 %v4143, %v4142
    %v4158 = vpack.c.b16 %v4145, %v4144
    %v4159 = vpack.c.b16 %v4147, %v4146
    %v4160 = vpack.c.b16 %v4149, %v4148
    %v4161 = vpack.c.b16 %v4151, %v4150
    %v4162 = vpack.c.b16 %v4153, %v4152
    %v4163 = vpack.c.b16 %v4155, %v4154
    %4172 = vmatpush.bf16.msra.mxu0 %v4163
    %4173 = vmatpush.bf16.msra.mxu0 %v4162
    %4174 = vmatpush.bf16.msra.mxu0 %v4161
    %4175 = vmatpush.bf16.msra.mxu0 %v4160
    %4176 = vmatpush.bf16.msra.mxu0 %v4159
    %4177 = vmatpush.bf16.msra.mxu0 %v4158
    %4178 = vmatpush.bf16.msra.mxu0 %v4157
    %4179 = vmatpush.bf16.msra.mxu0 %v4156
    %4180 = vmatmul.bf16.gmra.mxu0 %v4103
    %v4181 = vpop.f32.mrf.mxu0
    %v4182 = vadd.f32 %v4122, %v4181
    %v4183 = vpop.f32.mrf.mxu0
    %4184 = vdwg.mxu0
    %v4185 = vmax.f32 %v4182, 0.0
    %vm4186 = vcmask 517120
    %4187 = vst.msk [vmem:[#allocation10] sm:$0x3] %vm4186, %v4185
    // Predicated region
    $region78: #{spatial_model4_forward.1} parent=1 // pred_check
      _
    $region79: #{spatial_model4_forward.1} parent=1 // pred_check_branch
      %4189 = sbr.rel (0) target = $region81
    $region80: #{spatial_model4_forward.1} parent=1 // pred_region
      %4191 = vsyncadd [#allocation4], 0
      %s4193 = sshll.u32 [#allocation10], 4
      %s4194 = int_to_ptr.vmem [resolvable:$true] %s4193
      %s4195 = sshll.u32 %s15, 4
      %s4196 = int_to_ptr.hbm [resolvable:$true] %s4195
      %4198 = dma.vmem_to_hbm [thread:$0]  %s4194, 32, %s4196, [#allocation4]
    $region81: #{spatial_model4_forward.1} parent=1 // pred_fallthru
      _
    // Predicated region
    $region82: #{spatial_model4_forward.1} parent=1 // pred_check
      _
    $region83: #{spatial_model4_forward.1} parent=1 // pred_check_branch
      %4200 = sbr.rel (0) target = $region85
    $region84: #{spatial_model4_forward.1} parent=1 // pred_region
      %4202 = dma.done [#allocation4], 32
    $region85: #{spatial_model4_forward.1} parent=1 // pred_fallthru
      _
    %4203 = vsyncpa [#allocation3], 1
    %4204 = vsyncpa [#allocation6], 1
    %4205 = vsyncpa [#allocation9], 1
    %4206 = vsyncpa [#allocation4], 1

</llo_original>
